<compile_context>
chip_gen: v5e
topology: v5e:2x2
jax: 0.10.0
libtpu: 0.0.40
codegen_flags: <defaults>
</compile_context>

<pallas_src>
import functools

import jax
import jax.numpy as jnp
from jax.experimental import pallas as pl
from jax.experimental.pallas import tpu as pltpu

LN_EPS = 1e-5                      # torch.nn.LayerNorm default eps
_SQRT_2_OVER_PI = 0.7978845608028654
_SUB = 8                           # tokens folded onto the sublane axis: (rows, 8, T//8)


# ----------------------------------------------------------------------------- in-kernel helpers
# All per-token math runs on fully dense (8, lane_tile) f32 arrays, one per channel.
# Channel denses are unrolled VPU FMAs with f32 scalar weights from a packed SMEM vector.

def _row_gelu(rows):
  # tanh GELU: jnp.tanh lowers to the EUP (its own VLIW slot); ~1e-3 max abs vs exact erf.
  out = []
  for r in rows:
    out.append(0.5 * r * (1.0 + jnp.tanh(_SQRT_2_OVER_PI * (r + 0.044715 * r * r * r))))
  return out


def _row_ln(rows, p_ref, g_off, b_off):
  # LayerNorm across channel rows: single-pass VPU sums + EUP rsqrt, no cross-lane reduces.
  c = len(rows)
  s = rows[0]
  for r in rows[1:]:
    s = s + r
  mean = s * (1.0 / c)
  cent = [r - mean for r in rows]
  ss = cent[0] * cent[0]
  for r in cent[1:]:
    ss = ss + r * r
  inv = jax.lax.rsqrt(ss * (1.0 / c) + LN_EPS)
  return [cent[i] * inv * p_ref[g_off + i] + p_ref[b_off + i] for i in range(c)]


def _row_dense(rows, p_ref, w_off, b_off, c_out):
  # y[o] = sum_i w[i, o] * rows[i] + b[o]; w stored row-major (c_in, c_out) in SMEM.
  c_in = len(rows)
  out = []
  for o in range(c_out):
    acc = rows[0] * p_ref[w_off + o]
    for i in range(1, c_in):
      acc = acc + rows[i] * p_ref[w_off + i * c_out + o]
    out.append(acc + p_ref[b_off + o])
  return out


# ----------------------------------------------------------------------------- kernels
def _pre_kernel(p_ref, x_ref, carry_ref, vg_ref, vb_ref, *, c_in, half, off):
  """Fused per-token 'pre' path for the whole layer (top + both gMLP branches).

  Emits (bf16):
    carry = [u ; v ; u_grid ; u_block]   (only needed again by the 'post' kernel)
    vg    = gate-LayerNormed gating half of the grid branch  (-> grid token mix)
    vb    = gate-LayerNormed gating half of the block branch (-> block token mix)
  """
  x = x_ref[...].astype(jnp.float32)                    # (c_in, 8, lane_tile)
  xr = [x[i] for i in range(c_in)]

  h = _row_ln(xr, p_ref, off["ln_g"], off["ln_b"])
  u = _row_gelu(_row_dense(h, p_ref, off["in_wu"], off["in_bu"], half))
  v = _row_gelu(_row_dense(h, p_ref, off["in_wv"], off["in_bv"], half))

  # grid-gMLP branch, per-token part (input = u)
  hg = _row_ln(u, p_ref, off["g_ln_g"], off["g_ln_b"])
  ug = _row_gelu(_row_dense(hg, p_ref, off["g_wu"], off["g_bu"], half))
  vg = _row_ln(_row_gelu(_row_dense(hg, p_ref, off["g_wv"], off["g_bv"], half)),
               p_ref, off["g_gln_g"], off["g_gln_b"])

  # block-gMLP branch, per-token part (input = v)
  hb = _row_ln(v, p_ref, off["b_ln_g"], off["b_ln_b"])
  ub = _row_gelu(_row_dense(hb, p_ref, off["b_wu"], off["b_bu"], half))
  vb = _row_ln(_row_gelu(_row_dense(hb, p_ref, off["b_wv"], off["b_bv"], half)),
               p_ref, off["b_gln_g"], off["b_gln_b"])

  rows = u + v + ug + ub
  for i in range(4 * half):
    carry_ref[i] = rows[i].astype(jnp.bfloat16)
  for i in range(half):
    vg_ref[i] = vg[i].astype(jnp.bfloat16)
    vb_ref[i] = vb[i].astype(jnp.bfloat16)


def _mix_kernel(v_ref, w_ref, b_ref, o_ref):
  # Token-mixing dense: (n_mix, n_mix) @ (n_mix, lane_tile), bf16 operands, f32 accum.
  acc = jnp.dot(w_ref[...], v_ref[...], preferred_element_type=jnp.float32)
  o_ref[...] = (acc + b_ref[...]).astype(o_ref.dtype)


def _post_kernel(p_ref, carry_ref, vmg_ref, vmb_ref, x_ref, o_ref, *, c_out, half, off):
  """Fused per-token 'post' path: both branches' gate u*(v_mixed+1) -> out_project ->
  branch residual, then the top out_project(concat) and the outer residual."""
  carry = carry_ref[...].astype(jnp.float32)            # (4*half, 8, lane_tile)
  u = [carry[i] for i in range(half)]
  v = [carry[half + i] for i in range(half)]
  ug = [carry[2 * half + i] for i in range(half)]
  ub = [carry[3 * half + i] for i in range(half)]
  vmg = vmg_ref[...].astype(jnp.float32)
  vmb = vmb_ref[...].astype(jnp.float32)

  gated_g = [ug[i] * (vmg[i] + 1.0) for i in range(half)]
  gated_b = [ub[i] * (vmb[i] + 1.0) for i in range(half)]
  yg = _row_dense(gated_g, p_ref, off["g_wo"], off["g_bo"], half)
  yg = [yg[i] + u[i] for i in range(half)]               # grid gMLP shortcut
  yb = _row_dense(gated_b, p_ref, off["b_wo"], off["b_bo"], half)
  yb = [yb[i] + v[i] for i in range(half)]               # block gMLP shortcut

  x = x_ref[...].astype(jnp.float32)
  for o in range(c_out):
    acc = yg[0] * p_ref[off["out_wu"] + o]
    for i in range(1, half):
      acc = acc + yg[i] * p_ref[off["out_wu"] + i * c_out + o]
    for i in range(half):
      acc = acc + yb[i] * p_ref[off["out_wv"] + i * c_out + o]
    o_ref[o] = acc + p_ref[off["out_b"] + o] + x[o]


# ----------------------------------------------------------------------------- param packing
def _pack_scalars(entries):
  """Flatten small (in, out)/(1, c) f32 params into ONE 1-D SMEM vector + static offsets."""
  offsets, flats, off = {}, [], 0
  for name, a in entries:
    a = jnp.asarray(a, jnp.float32).reshape(-1)
    offsets[name] = off
    off += int(a.shape[0])
    flats.append(a)
  return jnp.concatenate(flats), offsets


def _pack_pre_params(p):
  g, b = p["grid"], p["block"]
  return _pack_scalars([
      ("ln_g", p["ln_g"]), ("ln_b", p["ln_b"]),
      ("in_wu", p["in_wu"]), ("in_bu", p["in_bu"]),
      ("in_wv", p["in_wv"]), ("in_bv", p["in_bv"]),
      ("g_ln_g", g["ln_g"]), ("g_ln_b", g["ln_b"]),
      ("g_wu", g["w_in_u"]), ("g_bu", g["b_in_u"]),
      ("g_wv", g["w_in_v"]), ("g_bv", g["b_in_v"]),
      ("g_gln_g", g["gate_ln_g"]), ("g_gln_b", g["gate_ln_b"]),
      ("b_ln_g", b["ln_g"]), ("b_ln_b", b["ln_b"]),
      ("b_wu", b["w_in_u"]), ("b_bu", b["b_in_u"]),
      ("b_wv", b["w_in_v"]), ("b_bv", b["b_in_v"]),
      ("b_gln_g", b["gate_ln_g"]), ("b_gln_b", b["gate_ln_b"]),
  ])


def _pack_post_params(p):
  g, b = p["grid"], p["block"]
  return _pack_scalars([
      ("g_wo", g["w_out"]), ("g_bo", g["b_out"]),
      ("b_wo", b["w_out"]), ("b_bo", b["b_out"]),
      ("out_wu", p["out_wu"]), ("out_wv", p["out_wv"]), ("out_b", p["out_b"]),
  ])


# ----------------------------------------------------------------------------- pallas wrappers
def _lane_tile(n, cap):
  """Largest multiple-of-128 divisor of n up to cap (else the whole dim as one block)."""
  if n <= cap:
    return n
  best = 0
  t = 128
  while t <= cap:
    if n % t == 0:
      best = t
    t += 128
  return best if best else n


def _token_mix(v_p, w_mix, b_mix):
  """vm = w_mix @ v_p + b_mix with v_p laid out (n_mix, F) lane-dense; bf16 in/out."""
  n_mix, F = v_p.shape
  ft = _lane_tile(F, cap=4096)
  return pl.pallas_call(
      _mix_kernel,
      out_shape=jax.ShapeDtypeStruct((n_mix, F), jnp.bfloat16),
      grid=(F // ft,),
      in_specs=[pl.BlockSpec((n_mix, ft), lambda f: (0, f)),
                pl.BlockSpec((n_mix, n_mix), lambda f: (0, 0)),
                pl.BlockSpec((n_mix, 1), lambda f: (0, 0))],
      out_specs=pl.BlockSpec((n_mix, ft), lambda f: (0, f)),
      compiler_params=pltpu.CompilerParams(dimension_semantics=("parallel",)),
  )(v_p, w_mix.astype(jnp.bfloat16), b_mix.reshape(n_mix, 1).astype(jnp.float32))


def multi_axis_gmlp_forward(x_in, params, block_size, grid_size):
  N, H, W, D, C = x_in.shape
  gh, gw, gd = grid_size
  bh, bw, bd = block_size
  # spatial dims chosen divisible -> the module's padding path is a no-op here
  assert H % gh == 0 and W % gw == 0 and D % gd == 0
  assert H % bh == 0 and W % bw == 0 and D % bd == 0
  half = params["in_wu"].shape[1]
  T = N * H * W * D
  assert T % _SUB == 0, "token count must be a multiple of 8"
  L = T // _SUB
  lt = _lane_tile(L, cap=2048)
  n_steps = L // lt

  # Channels-first token-folded layout (rows, 8, T//8): one XLA transpose in, one out;
  # every Pallas block below is fully sublane/lane dense.
  x_cf = x_in.reshape(T, C).T.reshape(C, _SUB, L)

  def row_spec(rows):
    return pl.BlockSpec((rows, _SUB, lt), lambda i: (0, 0, i))

  # ---- fused per-token "pre" pass (top + both branches) -----------------------------
  pre_vec, pre_off = _pack_pre_params(params)
  carry, v_g, v_b = pl.pallas_call(
      functools.partial(_pre_kernel, c_in=C, half=half, off=pre_off),
      out_shape=(jax.ShapeDtypeStruct((4 * half, _SUB, L), jnp.bfloat16),
                 jax.ShapeDtypeStruct((half, _SUB, L), jnp.bfloat16),
                 jax.ShapeDtypeStruct((half, _SUB, L), jnp.bfloat16)),
      grid=(n_steps,),
      in_specs=[pl.BlockSpec(memory_space=pltpu.MemorySpace.SMEM),
                row_spec(C)],
      out_specs=(row_spec(4 * half), row_spec(half), row_spec(half)),
      compiler_params=pltpu.CompilerParams(dimension_semantics=("parallel",)),
  )(pre_vec, x_cf)

  # ---- token mixes: only the gating tensors get permuted (XLA) around a lane-dense dot
  fh, fw, fd = H // gh, W // gw, D // gd          # grid-gMLP patch sizes
  n_g = gh * gw * gd
  vgp = (v_g.reshape(half, N, gh, fh, gw, fw, gd, fd)
         .transpose(2, 4, 6, 0, 1, 3, 5, 7)
         .reshape(n_g, half * N * fh * fw * fd))
  vmg = _token_mix(vgp, params["grid"]["w_mix"], params["grid"]["b_mix"])
  vm_g = (vmg.reshape(gh, gw, gd, half, N, fh, fw, fd)
          .transpose(3, 4, 0, 5, 1, 6, 2, 7)
          .reshape(half, _SUB, L))

  GH, GW, GD = H // bh, W // bw, D // bd          # block-gMLP cell counts
  n_b = bh * bw * bd
  vbp = (v_b.reshape(half, N, GH, bh, GW, bw, GD, bd)
         .transpose(3, 5, 7, 0, 1, 2, 4, 6)
         .reshape(n_b, half * N * GH * GW * GD))
  vmb = _token_mix(vbp, params["block"]["w_mix"], params["block"]["b_mix"])
  vm_b = (vmb.reshape(bh, bw, bd, half, N, GH, GW, GD)
          .transpose(3, 4, 5, 0, 6, 1, 7, 2)
          .reshape(half, _SUB, L))

  # ---- fused per-token "post" pass (both branches + top out_project + residual) -----
  post_vec, post_off = _pack_post_params(params)
  out_cf = pl.pallas_call(
      functools.partial(_post_kernel, c_out=C, half=half, off=post_off),
      out_shape=jax.ShapeDtypeStruct((C, _SUB, L), jnp.float32),
      grid=(n_steps,),
      in_specs=[pl.BlockSpec(memory_space=pltpu.MemorySpace.SMEM),
                row_spec(4 * half), row_spec(half), row_spec(half), row_spec(C)],
      out_specs=row_spec(C),
      compiler_params=pltpu.CompilerParams(dimension_semantics=("parallel",)),
  )(post_vec, carry, vm_g, vm_b, x_cf)

  # TODO(synk): dropout (rate=0.0) and torch checkpointing are identity in this forward.
  return out_cf.reshape(C, T).T.reshape(N, H, W, D, C)


# ----------------------------------------------------------------------------- parameter init
def _dense_init(key, fan_in, fan_out, scale=0.1):
  kw, kb = jax.random.split(key)
  w = scale * jax.random.normal(kw, (fan_in, fan_out), jnp.float32)
  b = scale * jax.random.normal(kb, (fan_out,), jnp.float32)
  return w, b


def _gmlp_params(key, c, n_mix, factor=2):
  assert factor == 2  # module default; half channels == c
  k0, k1, k2 = jax.random.split(key, 3)
  w_in, b_in = _dense_init(k0, c, c * factor)
  w_mix, b_mix = _dense_init(k1, n_mix, n_mix)
  w_out, b_out = _dense_init(k2, c * factor // 2, c)
  half = c * factor // 2
  return dict(
      ln_g=jnp.ones((1, c), jnp.float32), ln_b=jnp.zeros((1, c), jnp.float32),
      w_in_u=w_in[:, :half], b_in_u=b_in[:half].reshape(1, half),
      w_in_v=w_in[:, half:], b_in_v=b_in[half:].reshape(1, half),
      gate_ln_g=jnp.ones((1, half), jnp.float32),
      gate_ln_b=jnp.zeros((1, half), jnp.float32),
      w_mix=w_mix, b_mix=b_mix.reshape(n_mix, 1),
      w_out=w_out, b_out=b_out.reshape(1, c),
  )


def init_params(key, C, grid_size, block_size, input_proj_factor=2):
  k0, k1, k2, k3 = jax.random.split(key, 4)
  Cp = C * input_proj_factor
  half = Cp // 2
  in_w, in_b = _dense_init(k0, C, Cp)
  out_w, out_b = _dense_init(k1, Cp, C)
  n_grid = grid_size[0] * grid_size[1] * grid_size[2]
  n_block = block_size[0] * block_size[1] * block_size[2]
  return dict(
      ln_g=jnp.ones((1, C), jnp.float32), ln_b=jnp.zeros((1, C), jnp.float32),
      in_wu=in_w[:, :half], in_bu=in_b[:half].reshape(1, half),
      in_wv=in_w[:, half:], in_bv=in_b[half:].reshape(1, half),
      out_wu=out_w[:half], out_wv=out_w[half:], out_b=out_b.reshape(1, C),
      grid=_gmlp_params(k2, half, n_grid),
      block=_gmlp_params(k3, half, n_block),
  )


# ----------------------------------------------------------------------------- pure-JAX reference
def block_tokens(x, patch, mix_first):
  """(N,H,W,D,C) -> (N, n_cells, n_patch, C), mirroring block_images_einops."""
  n, h, w, d, c = x.shape
  fh, fw, fd = patch
  gh, gw, gd = h // fh, w // fw, d // fd
  x = x.reshape(n, gh, fh, gw, fw, gd, fd, c)
  if mix_first == "grid":
    x = x.transpose(0, 1, 3, 5, 2, 4, 6, 7)
    return x.reshape(n, gh * gw * gd, fh * fw * fd, c)
  else:
    x = x.transpose(0, 2, 4, 6, 1, 3, 5, 7)
    return x.reshape(n, fh * fw * fd, gh * gw * gd, c)


def unblock_tokens(x, patch, grid, mix_first):
  n, _, _, c = x.shape
  fh, fw, fd = patch
  gh, gw, gd = grid
  if mix_first == "grid":
    x = x.reshape(n, gh, gw, gd, fh, fw, fd, c)
    x = x.transpose(0, 1, 4, 2, 5, 3, 6, 7)
  else:
    x = x.reshape(n, fh, fw, fd, gh, gw, gd, c)
    x = x.transpose(0, 4, 1, 5, 2, 6, 3, 7)
  return x.reshape(n, gh * fh, gw * fw, gd * fd, c)


def _ref_ln(x, g, b):
  m = x.mean(-1, keepdims=True)
  v = ((x - m) ** 2).mean(-1, keepdims=True)
  return (x - m) / jnp.sqrt(v + LN_EPS) * g + b


def _ref_gelu(x):
  return jax.nn.gelu(x, approximate=False)   # exact erf GELU (torch.nn.GELU() default)


def _ref_gmlp(xb, p, mix_axis):
  hp = jax.lax.Precision.HIGHEST
  shortcut = xb
  h = _ref_ln(xb, p["ln_g"][0], p["ln_b"][0])
  u = _ref_gelu(jnp.einsum('ngpc,cd->ngpd', h, p["w_in_u"], precision=hp) + p["b_in_u"][0])
  v = _ref_gelu(jnp.einsum('ngpc,cd->ngpd', h, p["w_in_v"], precision=hp) + p["b_in_v"][0])
  v = _ref_ln(v, p["gate_ln_g"][0], p["gate_ln_b"][0])
  if mix_axis == "grid":
    v = jnp.einsum('xg,ngpc->nxpc', p["w_mix"], v, precision=hp) + p["b_mix"].reshape(1, -1, 1, 1)
  else:
    v = jnp.einsum('xp,ngpc->ngxc', p["w_mix"], v, precision=hp) + p["b_mix"].reshape(1, 1, -1, 1)
  gated = u * (v + 1.0)
  out = jnp.einsum('ngpc,cd->ngpd', gated, p["w_out"], precision=hp) + p["b_out"][0]
  return out + shortcut


def reference_forward(x_in, params, block_size, grid_size):
  N, H, W, D, C = x_in.shape
  hp = jax.lax.Precision.HIGHEST
  h = _ref_ln(x_in, params["ln_g"][0], params["ln_b"][0])
  u = _ref_gelu(jnp.einsum('nhwdc,ce->nhwde', h, params["in_wu"], precision=hp)
                + params["in_bu"][0])
  v = _ref_gelu(jnp.einsum('nhwdc,ce->nhwde', h, params["in_wv"], precision=hp)
                + params["in_bv"][0])
  gh, gw, gd = grid_size
  grid_patch = (H // gh, W // gw, D // gd)
  ub = _ref_gmlp(block_tokens(u, grid_patch, "grid"), params["grid"], "grid")
  u = unblock_tokens(ub, grid_patch, grid_size, "grid")
  bh, bw, bd = block_size
  bgrid = (H // bh, W // bw, D // bd)
  vb = _ref_gmlp(block_tokens(v, block_size, "grid"), params["block"], "patch")
  v = unblock_tokens(vb, block_size, bgrid, "grid")
  out = (jnp.einsum('nhwdc,ce->nhwde', u, params["out_wu"], precision=hp)
         + jnp.einsum('nhwdc,ce->nhwde', v, params["out_wv"], precision=hp)
         + params["out_b"][0])
  return out + x_in


# ----------------------------------------------------------------------------- main
if __name__ == "__main__":
  key = jax.random.PRNGKey(0)
  N, H, W, D, C = 2, 8, 8, 8, 4
  block_size = (2, 2, 2)
  grid_size = (2, 2, 2)

  kx, kp = jax.random.split(key)
  x_in = jax.random.normal(kx, (N, H, W, D, C), jnp.float32)
  params = init_params(kp, C, grid_size, block_size)

  fwd = jax.jit(functools.partial(multi_axis_gmlp_forward,
                                  block_size=block_size, grid_size=grid_size))
  out = jax.block_until_ready(fwd(x_in, params))

  ref = reference_forward(x_in, params, block_size, grid_size)
  err = float(jnp.max(jnp.abs(out - ref)))
  assert out.shape == x_in.shape
  # bf16-stored intermediates + tanh-GELU vs exact-erf f32 reference: allow ~2e-2 absolute.
  assert err < 2e-2, f"max abs error {err}"
  print("KERNEL_OK")
</pallas_src>

<mosaic_0001>
module attributes {stable_mosaic.version = 11 : i64} {
  func.func @_pre_kernel(%arg0: i32, %arg1: memref<160xf32, #tpu.memory_space<smem>>, %arg2: memref<4x8x128xf32, #tpu.memory_space<vmem>>, %arg3: memref<16x8x128xbf16, #tpu.memory_space<vmem>>, %arg4: memref<4x8x128xbf16, #tpu.memory_space<vmem>>, %arg5: memref<4x8x128xbf16, #tpu.memory_space<vmem>>) attributes {dimension_semantics = [#tpu.dimension_semantics<parallel>], iteration_bounds = array<i64: 1>, scalar_prefetch = 0 : i64, scratch_operands = 0 : i64, tpu.core_type = #tpu.core_type<tc>, window_params = [{transform_indices = @transform_0, window_bounds = array<i64: 160>}, {transform_indices = @transform_1, window_bounds = array<i64: 4, 8, 128>}, {transform_indices = @transform_2, window_bounds = array<i64: 16, 8, 128>}, {transform_indices = @transform_3, window_bounds = array<i64: 4, 8, 128>}, {transform_indices = @transform_4, window_bounds = array<i64: 4, 8, 128>}]} {
    %c0 = arith.constant 0 : index
    %c0_0 = arith.constant 0 : index
    %c0_1 = arith.constant 0 : index
    %0 = vector.load %arg2[%c0, %c0_0, %c0_1] : memref<4x8x128xf32, #tpu.memory_space<vmem>>, vector<4x8x128xf32>
    %1 = vector.extract_strided_slice %0 {offsets = [0, 0, 0], sizes = [1, 8, 128], strides = [1, 1, 1]} : vector<4x8x128xf32> to vector<1x8x128xf32>
    %2 = vector.shape_cast %1 : vector<1x8x128xf32> to vector<8x128xf32>
    %3 = vector.extract_strided_slice %0 {offsets = [1, 0, 0], sizes = [1, 8, 128], strides = [1, 1, 1]} : vector<4x8x128xf32> to vector<1x8x128xf32>
    %4 = vector.shape_cast %3 : vector<1x8x128xf32> to vector<8x128xf32>
    %5 = vector.extract_strided_slice %0 {offsets = [2, 0, 0], sizes = [1, 8, 128], strides = [1, 1, 1]} : vector<4x8x128xf32> to vector<1x8x128xf32>
    %6 = vector.shape_cast %5 : vector<1x8x128xf32> to vector<8x128xf32>
    %7 = vector.extract_strided_slice %0 {offsets = [3, 0, 0], sizes = [1, 8, 128], strides = [1, 1, 1]} : vector<4x8x128xf32> to vector<1x8x128xf32>
    %8 = vector.shape_cast %7 : vector<1x8x128xf32> to vector<8x128xf32>
    %9 = arith.addf %2, %4 : vector<8x128xf32>
    %10 = arith.addf %9, %6 : vector<8x128xf32>
    %11 = arith.addf %10, %8 : vector<8x128xf32>
    %cst = arith.constant 2.500000e-01 : f32
    %12 = vector.broadcast %cst : f32 to vector<8x128xf32>
    %13 = arith.mulf %11, %12 : vector<8x128xf32>
    %14 = arith.subf %2, %13 : vector<8x128xf32>
    %15 = arith.subf %4, %13 : vector<8x128xf32>
    %16 = arith.subf %6, %13 : vector<8x128xf32>
    %17 = arith.subf %8, %13 : vector<8x128xf32>
    %18 = arith.mulf %14, %14 : vector<8x128xf32>
    %19 = arith.mulf %15, %15 : vector<8x128xf32>
    %20 = arith.addf %18, %19 : vector<8x128xf32>
    %21 = arith.mulf %16, %16 : vector<8x128xf32>
    %22 = arith.addf %20, %21 : vector<8x128xf32>
    %23 = arith.mulf %17, %17 : vector<8x128xf32>
    %24 = arith.addf %22, %23 : vector<8x128xf32>
    %cst_2 = arith.constant 2.500000e-01 : f32
    %25 = vector.broadcast %cst_2 : f32 to vector<8x128xf32>
    %26 = arith.mulf %24, %25 : vector<8x128xf32>
    %cst_3 = arith.constant 9.99999974E-6 : f32
    %27 = vector.broadcast %cst_3 : f32 to vector<8x128xf32>
    %28 = arith.addf %26, %27 : vector<8x128xf32>
    %29 = math.rsqrt %28 : vector<8x128xf32>
    %30 = arith.mulf %14, %29 : vector<8x128xf32>
    %c0_4 = arith.constant 0 : index
    %31 = memref.load %arg1[%c0_4] : memref<160xf32, #tpu.memory_space<smem>>
    %32 = vector.broadcast %31 : f32 to vector<8x128xf32>
    %33 = arith.mulf %30, %32 : vector<8x128xf32>
    %c4 = arith.constant 4 : index
    %34 = memref.load %arg1[%c4] : memref<160xf32, #tpu.memory_space<smem>>
    %35 = vector.broadcast %34 : f32 to vector<8x128xf32>
    %36 = arith.addf %33, %35 : vector<8x128xf32>
    %37 = arith.mulf %15, %29 : vector<8x128xf32>
    %c1 = arith.constant 1 : index
    %38 = memref.load %arg1[%c1] : memref<160xf32, #tpu.memory_space<smem>>
    %39 = vector.broadcast %38 : f32 to vector<8x128xf32>
    %40 = arith.mulf %37, %39 : vector<8x128xf32>
    %c5 = arith.constant 5 : index
    %41 = memref.load %arg1[%c5] : memref<160xf32, #tpu.memory_space<smem>>
    %42 = vector.broadcast %41 : f32 to vector<8x128xf32>
    %43 = arith.addf %40, %42 : vector<8x128xf32>
    %44 = arith.mulf %16, %29 : vector<8x128xf32>
    %c2 = arith.constant 2 : index
    %45 = memref.load %arg1[%c2] : memref<160xf32, #tpu.memory_space<smem>>
    %46 = vector.broadcast %45 : f32 to vector<8x128xf32>
    %47 = arith.mulf %44, %46 : vector<8x128xf32>
    %c6 = arith.constant 6 : index
    %48 = memref.load %arg1[%c6] : memref<160xf32, #tpu.memory_space<smem>>
    %49 = vector.broadcast %48 : f32 to vector<8x128xf32>
    %50 = arith.addf %47, %49 : vector<8x128xf32>
    %51 = arith.mulf %17, %29 : vector<8x128xf32>
    %c3 = arith.constant 3 : index
    %52 = memref.load %arg1[%c3] : memref<160xf32, #tpu.memory_space<smem>>
    %53 = vector.broadcast %52 : f32 to vector<8x128xf32>
    %54 = arith.mulf %51, %53 : vector<8x128xf32>
    %c7 = arith.constant 7 : index
    %55 = memref.load %arg1[%c7] : memref<160xf32, #tpu.memory_space<smem>>
    %56 = vector.broadcast %55 : f32 to vector<8x128xf32>
    %57 = arith.addf %54, %56 : vector<8x128xf32>
    %c8 = arith.constant 8 : index
    %58 = memref.load %arg1[%c8] : memref<160xf32, #tpu.memory_space<smem>>
    %59 = vector.broadcast %58 : f32 to vector<8x128xf32>
    %60 = arith.mulf %36, %59 : vector<8x128xf32>
    %c12 = arith.constant 12 : index
    %61 = memref.load %arg1[%c12] : memref<160xf32, #tpu.memory_space<smem>>
    %62 = vector.broadcast %61 : f32 to vector<8x128xf32>
    %63 = arith.mulf %43, %62 : vector<8x128xf32>
    %64 = arith.addf %60, %63 : vector<8x128xf32>
    %c16 = arith.constant 16 : index
    %65 = memref.load %arg1[%c16] : memref<160xf32, #tpu.memory_space<smem>>
    %66 = vector.broadcast %65 : f32 to vector<8x128xf32>
    %67 = arith.mulf %50, %66 : vector<8x128xf32>
    %68 = arith.addf %64, %67 : vector<8x128xf32>
    %c20 = arith.constant 20 : index
    %69 = memref.load %arg1[%c20] : memref<160xf32, #tpu.memory_space<smem>>
    %70 = vector.broadcast %69 : f32 to vector<8x128xf32>
    %71 = arith.mulf %57, %70 : vector<8x128xf32>
    %72 = arith.addf %68, %71 : vector<8x128xf32>
    %c24 = arith.constant 24 : index
    %73 = memref.load %arg1[%c24] : memref<160xf32, #tpu.memory_space<smem>>
    %74 = vector.broadcast %73 : f32 to vector<8x128xf32>
    %75 = arith.addf %72, %74 : vector<8x128xf32>
    %c9 = arith.constant 9 : index
    %76 = memref.load %arg1[%c9] : memref<160xf32, #tpu.memory_space<smem>>
    %77 = vector.broadcast %76 : f32 to vector<8x128xf32>
    %78 = arith.mulf %36, %77 : vector<8x128xf32>
    %c13 = arith.constant 13 : index
    %79 = memref.load %arg1[%c13] : memref<160xf32, #tpu.memory_space<smem>>
    %80 = vector.broadcast %79 : f32 to vector<8x128xf32>
    %81 = arith.mulf %43, %80 : vector<8x128xf32>
    %82 = arith.addf %78, %81 : vector<8x128xf32>
    %c17 = arith.constant 17 : index
    %83 = memref.load %arg1[%c17] : memref<160xf32, #tpu.memory_space<smem>>
    %84 = vector.broadcast %83 : f32 to vector<8x128xf32>
    %85 = arith.mulf %50, %84 : vector<8x128xf32>
    %86 = arith.addf %82, %85 : vector<8x128xf32>
    %c21 = arith.constant 21 : index
    %87 = memref.load %arg1[%c21] : memref<160xf32, #tpu.memory_space<smem>>
    %88 = vector.broadcast %87 : f32 to vector<8x128xf32>
    %89 = arith.mulf %57, %88 : vector<8x128xf32>
    %90 = arith.addf %86, %89 : vector<8x128xf32>
    %c25 = arith.constant 25 : index
    %91 = memref.load %arg1[%c25] : memref<160xf32, #tpu.memory_space<smem>>
    %92 = vector.broadcast %91 : f32 to vector<8x128xf32>
    %93 = arith.addf %90, %92 : vector<8x128xf32>
    %c10 = arith.constant 10 : index
    %94 = memref.load %arg1[%c10] : memref<160xf32, #tpu.memory_space<smem>>
    %95 = vector.broadcast %94 : f32 to vector<8x128xf32>
    %96 = arith.mulf %36, %95 : vector<8x128xf32>
    %c14 = arith.constant 14 : index
    %97 = memref.load %arg1[%c14] : memref<160xf32, #tpu.memory_space<smem>>
    %98 = vector.broadcast %97 : f32 to vector<8x128xf32>
    %99 = arith.mulf %43, %98 : vector<8x128xf32>
    %100 = arith.addf %96, %99 : vector<8x128xf32>
    %c18 = arith.constant 18 : index
    %101 = memref.load %arg1[%c18] : memref<160xf32, #tpu.memory_space<smem>>
    %102 = vector.broadcast %101 : f32 to vector<8x128xf32>
    %103 = arith.mulf %50, %102 : vector<8x128xf32>
    %104 = arith.addf %100, %103 : vector<8x128xf32>
    %c22 = arith.constant 22 : index
    %105 = memref.load %arg1[%c22] : memref<160xf32, #tpu.memory_space<smem>>
    %106 = vector.broadcast %105 : f32 to vector<8x128xf32>
    %107 = arith.mulf %57, %106 : vector<8x128xf32>
    %108 = arith.addf %104, %107 : vector<8x128xf32>
    %c26 = arith.constant 26 : index
    %109 = memref.load %arg1[%c26] : memref<160xf32, #tpu.memory_space<smem>>
    %110 = vector.broadcast %109 : f32 to vector<8x128xf32>
    %111 = arith.addf %108, %110 : vector<8x128xf32>
    %c11 = arith.constant 11 : index
    %112 = memref.load %arg1[%c11] : memref<160xf32, #tpu.memory_space<smem>>
    %113 = vector.broadcast %112 : f32 to vector<8x128xf32>
    %114 = arith.mulf %36, %113 : vector<8x128xf32>
    %c15 = arith.constant 15 : index
    %115 = memref.load %arg1[%c15] : memref<160xf32, #tpu.memory_space<smem>>
    %116 = vector.broadcast %115 : f32 to vector<8x128xf32>
    %117 = arith.mulf %43, %116 : vector<8x128xf32>
    %118 = arith.addf %114, %117 : vector<8x128xf32>
    %c19 = arith.constant 19 : index
    %119 = memref.load %arg1[%c19] : memref<160xf32, #tpu.memory_space<smem>>
    %120 = vector.broadcast %119 : f32 to vector<8x128xf32>
    %121 = arith.mulf %50, %120 : vector<8x128xf32>
    %122 = arith.addf %118, %121 : vector<8x128xf32>
    %c23 = arith.constant 23 : index
    %123 = memref.load %arg1[%c23] : memref<160xf32, #tpu.memory_space<smem>>
    %124 = vector.broadcast %123 : f32 to vector<8x128xf32>
    %125 = arith.mulf %57, %124 : vector<8x128xf32>
    %126 = arith.addf %122, %125 : vector<8x128xf32>
    %c27 = arith.constant 27 : index
    %127 = memref.load %arg1[%c27] : memref<160xf32, #tpu.memory_space<smem>>
    %128 = vector.broadcast %127 : f32 to vector<8x128xf32>
    %129 = arith.addf %126, %128 : vector<8x128xf32>
    %cst_5 = arith.constant 5.000000e-01 : f32
    %130 = vector.broadcast %cst_5 : f32 to vector<8x128xf32>
    %131 = arith.mulf %130, %75 : vector<8x128xf32>
    %cst_6 = arith.constant 4.471500e-02 : f32
    %132 = vector.broadcast %cst_6 : f32 to vector<8x128xf32>
    %133 = arith.mulf %132, %75 : vector<8x128xf32>
    %134 = arith.mulf %133, %75 : vector<8x128xf32>
    %135 = arith.mulf %134, %75 : vector<8x128xf32>
    %136 = arith.addf %75, %135 : vector<8x128xf32>
    %cst_7 = arith.constant 0.797884583 : f32
    %137 = vector.broadcast %cst_7 : f32 to vector<8x128xf32>
    %138 = arith.mulf %137, %136 : vector<8x128xf32>
    %139 = math.tanh %138 : vector<8x128xf32>
    %cst_8 = arith.constant 1.000000e+00 : f32
    %140 = vector.broadcast %cst_8 : f32 to vector<8x128xf32>
    %141 = arith.addf %140, %139 : vector<8x128xf32>
    %142 = arith.mulf %131, %141 : vector<8x128xf32>
    %cst_9 = arith.constant 5.000000e-01 : f32
    %143 = vector.broadcast %cst_9 : f32 to vector<8x128xf32>
    %144 = arith.mulf %143, %93 : vector<8x128xf32>
    %cst_10 = arith.constant 4.471500e-02 : f32
    %145 = vector.broadcast %cst_10 : f32 to vector<8x128xf32>
    %146 = arith.mulf %145, %93 : vector<8x128xf32>
    %147 = arith.mulf %146, %93 : vector<8x128xf32>
    %148 = arith.mulf %147, %93 : vector<8x128xf32>
    %149 = arith.addf %93, %148 : vector<8x128xf32>
    %cst_11 = arith.constant 0.797884583 : f32
    %150 = vector.broadcast %cst_11 : f32 to vector<8x128xf32>
    %151 = arith.mulf %150, %149 : vector<8x128xf32>
    %152 = math.tanh %151 : vector<8x128xf32>
    %cst_12 = arith.constant 1.000000e+00 : f32
    %153 = vector.broadcast %cst_12 : f32 to vector<8x128xf32>
    %154 = arith.addf %153, %152 : vector<8x128xf32>
    %155 = arith.mulf %144, %154 : vector<8x128xf32>
    %cst_13 = arith.constant 5.000000e-01 : f32
    %156 = vector.broadcast %cst_13 : f32 to vector<8x128xf32>
    %157 = arith.mulf %156, %111 : vector<8x128xf32>
    %cst_14 = arith.constant 4.471500e-02 : f32
    %158 = vector.broadcast %cst_14 : f32 to vector<8x128xf32>
    %159 = arith.mulf %158, %111 : vector<8x128xf32>
    %160 = arith.mulf %159, %111 : vector<8x128xf32>
    %161 = arith.mulf %160, %111 : vector<8x128xf32>
    %162 = arith.addf %111, %161 : vector<8x128xf32>
    %cst_15 = arith.constant 0.797884583 : f32
    %163 = vector.broadcast %cst_15 : f32 to vector<8x128xf32>
    %164 = arith.mulf %163, %162 : vector<8x128xf32>
    %165 = math.tanh %164 : vector<8x128xf32>
    %cst_16 = arith.constant 1.000000e+00 : f32
    %166 = vector.broadcast %cst_16 : f32 to vector<8x128xf32>
    %167 = arith.addf %166, %165 : vector<8x128xf32>
    %168 = arith.mulf %157, %167 : vector<8x128xf32>
    %cst_17 = arith.constant 5.000000e-01 : f32
    %169 = vector.broadcast %cst_17 : f32 to vector<8x128xf32>
    %170 = arith.mulf %169, %129 : vector<8x128xf32>
    %cst_18 = arith.constant 4.471500e-02 : f32
    %171 = vector.broadcast %cst_18 : f32 to vector<8x128xf32>
    %172 = arith.mulf %171, %129 : vector<8x128xf32>
    %173 = arith.mulf %172, %129 : vector<8x128xf32>
    %174 = arith.mulf %173, %129 : vector<8x128xf32>
    %175 = arith.addf %129, %174 : vector<8x128xf32>
    %cst_19 = arith.constant 0.797884583 : f32
    %176 = vector.broadcast %cst_19 : f32 to vector<8x128xf32>
    %177 = arith.mulf %176, %175 : vector<8x128xf32>
    %178 = math.tanh %177 : vector<8x128xf32>
    %cst_20 = arith.constant 1.000000e+00 : f32
    %179 = vector.broadcast %cst_20 : f32 to vector<8x128xf32>
    %180 = arith.addf %179, %178 : vector<8x128xf32>
    %181 = arith.mulf %170, %180 : vector<8x128xf32>
    %c28 = arith.constant 28 : index
    %182 = memref.load %arg1[%c28] : memref<160xf32, #tpu.memory_space<smem>>
    %183 = vector.broadcast %182 : f32 to vector<8x128xf32>
    %184 = arith.mulf %36, %183 : vector<8x128xf32>
    %c32 = arith.constant 32 : index
    %185 = memref.load %arg1[%c32] : memref<160xf32, #tpu.memory_space<smem>>
    %186 = vector.broadcast %185 : f32 to vector<8x128xf32>
    %187 = arith.mulf %43, %186 : vector<8x128xf32>
    %188 = arith.addf %184, %187 : vector<8x128xf32>
    %c36 = arith.constant 36 : index
    %189 = memref.load %arg1[%c36] : memref<160xf32, #tpu.memory_space<smem>>
    %190 = vector.broadcast %189 : f32 to vector<8x128xf32>
    %191 = arith.mulf %50, %190 : vector<8x128xf32>
    %192 = arith.addf %188, %191 : vector<8x128xf32>
    %c40 = arith.constant 40 : index
    %193 = memref.load %arg1[%c40] : memref<160xf32, #tpu.memory_space<smem>>
    %194 = vector.broadcast %193 : f32 to vector<8x128xf32>
    %195 = arith.mulf %57, %194 : vector<8x128xf32>
    %196 = arith.addf %192, %195 : vector<8x128xf32>
    %c44 = arith.constant 44 : index
    %197 = memref.load %arg1[%c44] : memref<160xf32, #tpu.memory_space<smem>>
    %198 = vector.broadcast %197 : f32 to vector<8x128xf32>
    %199 = arith.addf %196, %198 : vector<8x128xf32>
    %c29 = arith.constant 29 : index
    %200 = memref.load %arg1[%c29] : memref<160xf32, #tpu.memory_space<smem>>
    %201 = vector.broadcast %200 : f32 to vector<8x128xf32>
    %202 = arith.mulf %36, %201 : vector<8x128xf32>
    %c33 = arith.constant 33 : index
    %203 = memref.load %arg1[%c33] : memref<160xf32, #tpu.memory_space<smem>>
    %204 = vector.broadcast %203 : f32 to vector<8x128xf32>
    %205 = arith.mulf %43, %204 : vector<8x128xf32>
    %206 = arith.addf %202, %205 : vector<8x128xf32>
    %c37 = arith.constant 37 : index
    %207 = memref.load %arg1[%c37] : memref<160xf32, #tpu.memory_space<smem>>
    %208 = vector.broadcast %207 : f32 to vector<8x128xf32>
    %209 = arith.mulf %50, %208 : vector<8x128xf32>
    %210 = arith.addf %206, %209 : vector<8x128xf32>
    %c41 = arith.constant 41 : index
    %211 = memref.load %arg1[%c41] : memref<160xf32, #tpu.memory_space<smem>>
    %212 = vector.broadcast %211 : f32 to vector<8x128xf32>
    %213 = arith.mulf %57, %212 : vector<8x128xf32>
    %214 = arith.addf %210, %213 : vector<8x128xf32>
    %c45 = arith.constant 45 : index
    %215 = memref.load %arg1[%c45] : memref<160xf32, #tpu.memory_space<smem>>
    %216 = vector.broadcast %215 : f32 to vector<8x128xf32>
    %217 = arith.addf %214, %216 : vector<8x128xf32>
    %c30 = arith.constant 30 : index
    %218 = memref.load %arg1[%c30] : memref<160xf32, #tpu.memory_space<smem>>
    %219 = vector.broadcast %218 : f32 to vector<8x128xf32>
    %220 = arith.mulf %36, %219 : vector<8x128xf32>
    %c34 = arith.constant 34 : index
    %221 = memref.load %arg1[%c34] : memref<160xf32, #tpu.memory_space<smem>>
    %222 = vector.broadcast %221 : f32 to vector<8x128xf32>
    %223 = arith.mulf %43, %222 : vector<8x128xf32>
    %224 = arith.addf %220, %223 : vector<8x128xf32>
    %c38 = arith.constant 38 : index
    %225 = memref.load %arg1[%c38] : memref<160xf32, #tpu.memory_space<smem>>
    %226 = vector.broadcast %225 : f32 to vector<8x128xf32>
    %227 = arith.mulf %50, %226 : vector<8x128xf32>
    %228 = arith.addf %224, %227 : vector<8x128xf32>
    %c42 = arith.constant 42 : index
    %229 = memref.load %arg1[%c42] : memref<160xf32, #tpu.memory_space<smem>>
    %230 = vector.broadcast %229 : f32 to vector<8x128xf32>
    %231 = arith.mulf %57, %230 : vector<8x128xf32>
    %232 = arith.addf %228, %231 : vector<8x128xf32>
    %c46 = arith.constant 46 : index
    %233 = memref.load %arg1[%c46] : memref<160xf32, #tpu.memory_space<smem>>
    %234 = vector.broadcast %233 : f32 to vector<8x128xf32>
    %235 = arith.addf %232, %234 : vector<8x128xf32>
    %c31 = arith.constant 31 : index
    %236 = memref.load %arg1[%c31] : memref<160xf32, #tpu.memory_space<smem>>
    %237 = vector.broadcast %236 : f32 to vector<8x128xf32>
    %238 = arith.mulf %36, %237 : vector<8x128xf32>
    %c35 = arith.constant 35 : index
    %239 = memref.load %arg1[%c35] : memref<160xf32, #tpu.memory_space<smem>>
    %240 = vector.broadcast %239 : f32 to vector<8x128xf32>
    %241 = arith.mulf %43, %240 : vector<8x128xf32>
    %242 = arith.addf %238, %241 : vector<8x128xf32>
    %c39 = arith.constant 39 : index
    %243 = memref.load %arg1[%c39] : memref<160xf32, #tpu.memory_space<smem>>
    %244 = vector.broadcast %243 : f32 to vector<8x128xf32>
    %245 = arith.mulf %50, %244 : vector<8x128xf32>
    %246 = arith.addf %242, %245 : vector<8x128xf32>
    %c43 = arith.constant 43 : index
    %247 = memref.load %arg1[%c43] : memref<160xf32, #tpu.memory_space<smem>>
    %248 = vector.broadcast %247 : f32 to vector<8x128xf32>
    %249 = arith.mulf %57, %248 : vector<8x128xf32>
    %250 = arith.addf %246, %249 : vector<8x128xf32>
    %c47 = arith.constant 47 : index
    %251 = memref.load %arg1[%c47] : memref<160xf32, #tpu.memory_space<smem>>
    %252 = vector.broadcast %251 : f32 to vector<8x128xf32>
    %253 = arith.addf %250, %252 : vector<8x128xf32>
    %cst_21 = arith.constant 5.000000e-01 : f32
    %254 = vector.broadcast %cst_21 : f32 to vector<8x128xf32>
    %255 = arith.mulf %254, %199 : vector<8x128xf32>
    %cst_22 = arith.constant 4.471500e-02 : f32
    %256 = vector.broadcast %cst_22 : f32 to vector<8x128xf32>
    %257 = arith.mulf %256, %199 : vector<8x128xf32>
    %258 = arith.mulf %257, %199 : vector<8x128xf32>
    %259 = arith.mulf %258, %199 : vector<8x128xf32>
    %260 = arith.addf %199, %259 : vector<8x128xf32>
    %cst_23 = arith.constant 0.797884583 : f32
    %261 = vector.broadcast %cst_23 : f32 to vector<8x128xf32>
    %262 = arith.mulf %261, %260 : vector<8x128xf32>
    %263 = math.tanh %262 : vector<8x128xf32>
    %cst_24 = arith.constant 1.000000e+00 : f32
    %264 = vector.broadcast %cst_24 : f32 to vector<8x128xf32>
    %265 = arith.addf %264, %263 : vector<8x128xf32>
    %266 = arith.mulf %255, %265 : vector<8x128xf32>
    %cst_25 = arith.constant 5.000000e-01 : f32
    %267 = vector.broadcast %cst_25 : f32 to vector<8x128xf32>
    %268 = arith.mulf %267, %217 : vector<8x128xf32>
    %cst_26 = arith.constant 4.471500e-02 : f32
    %269 = vector.broadcast %cst_26 : f32 to vector<8x128xf32>
    %270 = arith.mulf %269, %217 : vector<8x128xf32>
    %271 = arith.mulf %270, %217 : vector<8x128xf32>
    %272 = arith.mulf %271, %217 : vector<8x128xf32>
    %273 = arith.addf %217, %272 : vector<8x128xf32>
    %cst_27 = arith.constant 0.797884583 : f32
    %274 = vector.broadcast %cst_27 : f32 to vector<8x128xf32>
    %275 = arith.mulf %274, %273 : vector<8x128xf32>
    %276 = math.tanh %275 : vector<8x128xf32>
    %cst_28 = arith.constant 1.000000e+00 : f32
    %277 = vector.broadcast %cst_28 : f32 to vector<8x128xf32>
    %278 = arith.addf %277, %276 : vector<8x128xf32>
    %279 = arith.mulf %268, %278 : vector<8x128xf32>
    %cst_29 = arith.constant 5.000000e-01 : f32
    %280 = vector.broadcast %cst_29 : f32 to vector<8x128xf32>
    %281 = arith.mulf %280, %235 : vector<8x128xf32>
    %cst_30 = arith.constant 4.471500e-02 : f32
    %282 = vector.broadcast %cst_30 : f32 to vector<8x128xf32>
    %283 = arith.mulf %282, %235 : vector<8x128xf32>
    %284 = arith.mulf %283, %235 : vector<8x128xf32>
    %285 = arith.mulf %284, %235 : vector<8x128xf32>
    %286 = arith.addf %235, %285 : vector<8x128xf32>
    %cst_31 = arith.constant 0.797884583 : f32
    %287 = vector.broadcast %cst_31 : f32 to vector<8x128xf32>
    %288 = arith.mulf %287, %286 : vector<8x128xf32>
    %289 = math.tanh %288 : vector<8x128xf32>
    %cst_32 = arith.constant 1.000000e+00 : f32
    %290 = vector.broadcast %cst_32 : f32 to vector<8x128xf32>
    %291 = arith.addf %290, %289 : vector<8x128xf32>
    %292 = arith.mulf %281, %291 : vector<8x128xf32>
    %cst_33 = arith.constant 5.000000e-01 : f32
    %293 = vector.broadcast %cst_33 : f32 to vector<8x128xf32>
    %294 = arith.mulf %293, %253 : vector<8x128xf32>
    %cst_34 = arith.constant 4.471500e-02 : f32
    %295 = vector.broadcast %cst_34 : f32 to vector<8x128xf32>
    %296 = arith.mulf %295, %253 : vector<8x128xf32>
    %297 = arith.mulf %296, %253 : vector<8x128xf32>
    %298 = arith.mulf %297, %253 : vector<8x128xf32>
    %299 = arith.addf %253, %298 : vector<8x128xf32>
    %cst_35 = arith.constant 0.797884583 : f32
    %300 = vector.broadcast %cst_35 : f32 to vector<8x128xf32>
    %301 = arith.mulf %300, %299 : vector<8x128xf32>
    %302 = math.tanh %301 : vector<8x128xf32>
    %cst_36 = arith.constant 1.000000e+00 : f32
    %303 = vector.broadcast %cst_36 : f32 to vector<8x128xf32>
    %304 = arith.addf %303, %302 : vector<8x128xf32>
    %305 = arith.mulf %294, %304 : vector<8x128xf32>
    %306 = arith.addf %142, %155 : vector<8x128xf32>
    %307 = arith.addf %306, %168 : vector<8x128xf32>
    %308 = arith.addf %307, %181 : vector<8x128xf32>
    %cst_37 = arith.constant 2.500000e-01 : f32
    %309 = vector.broadcast %cst_37 : f32 to vector<8x128xf32>
    %310 = arith.mulf %308, %309 : vector<8x128xf32>
    %311 = arith.subf %142, %310 : vector<8x128xf32>
    %312 = arith.subf %155, %310 : vector<8x128xf32>
    %313 = arith.subf %168, %310 : vector<8x128xf32>
    %314 = arith.subf %181, %310 : vector<8x128xf32>
    %315 = arith.mulf %311, %311 : vector<8x128xf32>
    %316 = arith.mulf %312, %312 : vector<8x128xf32>
    %317 = arith.addf %315, %316 : vector<8x128xf32>
    %318 = arith.mulf %313, %313 : vector<8x128xf32>
    %319 = arith.addf %317, %318 : vector<8x128xf32>
    %320 = arith.mulf %314, %314 : vector<8x128xf32>
    %321 = arith.addf %319, %320 : vector<8x128xf32>
    %cst_38 = arith.constant 2.500000e-01 : f32
    %322 = vector.broadcast %cst_38 : f32 to vector<8x128xf32>
    %323 = arith.mulf %321, %322 : vector<8x128xf32>
    %cst_39 = arith.constant 9.99999974E-6 : f32
    %324 = vector.broadcast %cst_39 : f32 to vector<8x128xf32>
    %325 = arith.addf %323, %324 : vector<8x128xf32>
    %326 = math.rsqrt %325 : vector<8x128xf32>
    %327 = arith.mulf %311, %326 : vector<8x128xf32>
    %c48 = arith.constant 48 : index
    %328 = memref.load %arg1[%c48] : memref<160xf32, #tpu.memory_space<smem>>
    %329 = vector.broadcast %328 : f32 to vector<8x128xf32>
    %330 = arith.mulf %327, %329 : vector<8x128xf32>
    %c52 = arith.constant 52 : index
    %331 = memref.load %arg1[%c52] : memref<160xf32, #tpu.memory_space<smem>>
    %332 = vector.broadcast %331 : f32 to vector<8x128xf32>
    %333 = arith.addf %330, %332 : vector<8x128xf32>
    %334 = arith.mulf %312, %326 : vector<8x128xf32>
    %c49 = arith.constant 49 : index
    %335 = memref.load %arg1[%c49] : memref<160xf32, #tpu.memory_space<smem>>
    %336 = vector.broadcast %335 : f32 to vector<8x128xf32>
    %337 = arith.mulf %334, %336 : vector<8x128xf32>
    %c53 = arith.constant 53 : index
    %338 = memref.load %arg1[%c53] : memref<160xf32, #tpu.memory_space<smem>>
    %339 = vector.broadcast %338 : f32 to vector<8x128xf32>
    %340 = arith.addf %337, %339 : vector<8x128xf32>
    %341 = arith.mulf %313, %326 : vector<8x128xf32>
    %c50 = arith.constant 50 : index
    %342 = memref.load %arg1[%c50] : memref<160xf32, #tpu.memory_space<smem>>
    %343 = vector.broadcast %342 : f32 to vector<8x128xf32>
    %344 = arith.mulf %341, %343 : vector<8x128xf32>
    %c54 = arith.constant 54 : index
    %345 = memref.load %arg1[%c54] : memref<160xf32, #tpu.memory_space<smem>>
    %346 = vector.broadcast %345 : f32 to vector<8x128xf32>
    %347 = arith.addf %344, %346 : vector<8x128xf32>
    %348 = arith.mulf %314, %326 : vector<8x128xf32>
    %c51 = arith.constant 51 : index
    %349 = memref.load %arg1[%c51] : memref<160xf32, #tpu.memory_space<smem>>
    %350 = vector.broadcast %349 : f32 to vector<8x128xf32>
    %351 = arith.mulf %348, %350 : vector<8x128xf32>
    %c55 = arith.constant 55 : index
    %352 = memref.load %arg1[%c55] : memref<160xf32, #tpu.memory_space<smem>>
    %353 = vector.broadcast %352 : f32 to vector<8x128xf32>
    %354 = arith.addf %351, %353 : vector<8x128xf32>
    %c56 = arith.constant 56 : index
    %355 = memref.load %arg1[%c56] : memref<160xf32, #tpu.memory_space<smem>>
    %356 = vector.broadcast %355 : f32 to vector<8x128xf32>
    %357 = arith.mulf %333, %356 : vector<8x128xf32>
    %c60 = arith.constant 60 : index
    %358 = memref.load %arg1[%c60] : memref<160xf32, #tpu.memory_space<smem>>
    %359 = vector.broadcast %358 : f32 to vector<8x128xf32>
    %360 = arith.mulf %340, %359 : vector<8x128xf32>
    %361 = arith.addf %357, %360 : vector<8x128xf32>
    %c64 = arith.constant 64 : index
    %362 = memref.load %arg1[%c64] : memref<160xf32, #tpu.memory_space<smem>>
    %363 = vector.broadcast %362 : f32 to vector<8x128xf32>
    %364 = arith.mulf %347, %363 : vector<8x128xf32>
    %365 = arith.addf %361, %364 : vector<8x128xf32>
    %c68 = arith.constant 68 : index
    %366 = memref.load %arg1[%c68] : memref<160xf32, #tpu.memory_space<smem>>
    %367 = vector.broadcast %366 : f32 to vector<8x128xf32>
    %368 = arith.mulf %354, %367 : vector<8x128xf32>
    %369 = arith.addf %365, %368 : vector<8x128xf32>
    %c72 = arith.constant 72 : index
    %370 = memref.load %arg1[%c72] : memref<160xf32, #tpu.memory_space<smem>>
    %371 = vector.broadcast %370 : f32 to vector<8x128xf32>
    %372 = arith.addf %369, %371 : vector<8x128xf32>
    %c57 = arith.constant 57 : index
    %373 = memref.load %arg1[%c57] : memref<160xf32, #tpu.memory_space<smem>>
    %374 = vector.broadcast %373 : f32 to vector<8x128xf32>
    %375 = arith.mulf %333, %374 : vector<8x128xf32>
    %c61 = arith.constant 61 : index
    %376 = memref.load %arg1[%c61] : memref<160xf32, #tpu.memory_space<smem>>
    %377 = vector.broadcast %376 : f32 to vector<8x128xf32>
    %378 = arith.mulf %340, %377 : vector<8x128xf32>
    %379 = arith.addf %375, %378 : vector<8x128xf32>
    %c65 = arith.constant 65 : index
    %380 = memref.load %arg1[%c65] : memref<160xf32, #tpu.memory_space<smem>>
    %381 = vector.broadcast %380 : f32 to vector<8x128xf32>
    %382 = arith.mulf %347, %381 : vector<8x128xf32>
    %383 = arith.addf %379, %382 : vector<8x128xf32>
    %c69 = arith.constant 69 : index
    %384 = memref.load %arg1[%c69] : memref<160xf32, #tpu.memory_space<smem>>
    %385 = vector.broadcast %384 : f32 to vector<8x128xf32>
    %386 = arith.mulf %354, %385 : vector<8x128xf32>
    %387 = arith.addf %383, %386 : vector<8x128xf32>
    %c73 = arith.constant 73 : index
    %388 = memref.load %arg1[%c73] : memref<160xf32, #tpu.memory_space<smem>>
    %389 = vector.broadcast %388 : f32 to vector<8x128xf32>
    %390 = arith.addf %387, %389 : vector<8x128xf32>
    %c58 = arith.constant 58 : index
    %391 = memref.load %arg1[%c58] : memref<160xf32, #tpu.memory_space<smem>>
    %392 = vector.broadcast %391 : f32 to vector<8x128xf32>
    %393 = arith.mulf %333, %392 : vector<8x128xf32>
    %c62 = arith.constant 62 : index
    %394 = memref.load %arg1[%c62] : memref<160xf32, #tpu.memory_space<smem>>
    %395 = vector.broadcast %394 : f32 to vector<8x128xf32>
    %396 = arith.mulf %340, %395 : vector<8x128xf32>
    %397 = arith.addf %393, %396 : vector<8x128xf32>
    %c66 = arith.constant 66 : index
    %398 = memref.load %arg1[%c66] : memref<160xf32, #tpu.memory_space<smem>>
    %399 = vector.broadcast %398 : f32 to vector<8x128xf32>
    %400 = arith.mulf %347, %399 : vector<8x128xf32>
    %401 = arith.addf %397, %400 : vector<8x128xf32>
    %c70 = arith.constant 70 : index
    %402 = memref.load %arg1[%c70] : memref<160xf32, #tpu.memory_space<smem>>
    %403 = vector.broadcast %402 : f32 to vector<8x128xf32>
    %404 = arith.mulf %354, %403 : vector<8x128xf32>
    %405 = arith.addf %401, %404 : vector<8x128xf32>
    %c74 = arith.constant 74 : index
    %406 = memref.load %arg1[%c74] : memref<160xf32, #tpu.memory_space<smem>>
    %407 = vector.broadcast %406 : f32 to vector<8x128xf32>
    %408 = arith.addf %405, %407 : vector<8x128xf32>
    %c59 = arith.constant 59 : index
    %409 = memref.load %arg1[%c59] : memref<160xf32, #tpu.memory_space<smem>>
    %410 = vector.broadcast %409 : f32 to vector<8x128xf32>
    %411 = arith.mulf %333, %410 : vector<8x128xf32>
    %c63 = arith.constant 63 : index
    %412 = memref.load %arg1[%c63] : memref<160xf32, #tpu.memory_space<smem>>
    %413 = vector.broadcast %412 : f32 to vector<8x128xf32>
    %414 = arith.mulf %340, %413 : vector<8x128xf32>
    %415 = arith.addf %411, %414 : vector<8x128xf32>
    %c67 = arith.constant 67 : index
    %416 = memref.load %arg1[%c67] : memref<160xf32, #tpu.memory_space<smem>>
    %417 = vector.broadcast %416 : f32 to vector<8x128xf32>
    %418 = arith.mulf %347, %417 : vector<8x128xf32>
    %419 = arith.addf %415, %418 : vector<8x128xf32>
    %c71 = arith.constant 71 : index
    %420 = memref.load %arg1[%c71] : memref<160xf32, #tpu.memory_space<smem>>
    %421 = vector.broadcast %420 : f32 to vector<8x128xf32>
    %422 = arith.mulf %354, %421 : vector<8x128xf32>
    %423 = arith.addf %419, %422 : vector<8x128xf32>
    %c75 = arith.constant 75 : index
    %424 = memref.load %arg1[%c75] : memref<160xf32, #tpu.memory_space<smem>>
    %425 = vector.broadcast %424 : f32 to vector<8x128xf32>
    %426 = arith.addf %423, %425 : vector<8x128xf32>
    %cst_40 = arith.constant 5.000000e-01 : f32
    %427 = vector.broadcast %cst_40 : f32 to vector<8x128xf32>
    %428 = arith.mulf %427, %372 : vector<8x128xf32>
    %cst_41 = arith.constant 4.471500e-02 : f32
    %429 = vector.broadcast %cst_41 : f32 to vector<8x128xf32>
    %430 = arith.mulf %429, %372 : vector<8x128xf32>
    %431 = arith.mulf %430, %372 : vector<8x128xf32>
    %432 = arith.mulf %431, %372 : vector<8x128xf32>
    %433 = arith.addf %372, %432 : vector<8x128xf32>
    %cst_42 = arith.constant 0.797884583 : f32
    %434 = vector.broadcast %cst_42 : f32 to vector<8x128xf32>
    %435 = arith.mulf %434, %433 : vector<8x128xf32>
    %436 = math.tanh %435 : vector<8x128xf32>
    %cst_43 = arith.constant 1.000000e+00 : f32
    %437 = vector.broadcast %cst_43 : f32 to vector<8x128xf32>
    %438 = arith.addf %437, %436 : vector<8x128xf32>
    %439 = arith.mulf %428, %438 : vector<8x128xf32>
    %cst_44 = arith.constant 5.000000e-01 : f32
    %440 = vector.broadcast %cst_44 : f32 to vector<8x128xf32>
    %441 = arith.mulf %440, %390 : vector<8x128xf32>
    %cst_45 = arith.constant 4.471500e-02 : f32
    %442 = vector.broadcast %cst_45 : f32 to vector<8x128xf32>
    %443 = arith.mulf %442, %390 : vector<8x128xf32>
    %444 = arith.mulf %443, %390 : vector<8x128xf32>
    %445 = arith.mulf %444, %390 : vector<8x128xf32>
    %446 = arith.addf %390, %445 : vector<8x128xf32>
    %cst_46 = arith.constant 0.797884583 : f32
    %447 = vector.broadcast %cst_46 : f32 to vector<8x128xf32>
    %448 = arith.mulf %447, %446 : vector<8x128xf32>
    %449 = math.tanh %448 : vector<8x128xf32>
    %cst_47 = arith.constant 1.000000e+00 : f32
    %450 = vector.broadcast %cst_47 : f32 to vector<8x128xf32>
    %451 = arith.addf %450, %449 : vector<8x128xf32>
    %452 = arith.mulf %441, %451 : vector<8x128xf32>
    %cst_48 = arith.constant 5.000000e-01 : f32
    %453 = vector.broadcast %cst_48 : f32 to vector<8x128xf32>
    %454 = arith.mulf %453, %408 : vector<8x128xf32>
    %cst_49 = arith.constant 4.471500e-02 : f32
    %455 = vector.broadcast %cst_49 : f32 to vector<8x128xf32>
    %456 = arith.mulf %455, %408 : vector<8x128xf32>
    %457 = arith.mulf %456, %408 : vector<8x128xf32>
    %458 = arith.mulf %457, %408 : vector<8x128xf32>
    %459 = arith.addf %408, %458 : vector<8x128xf32>
    %cst_50 = arith.constant 0.797884583 : f32
    %460 = vector.broadcast %cst_50 : f32 to vector<8x128xf32>
    %461 = arith.mulf %460, %459 : vector<8x128xf32>
    %462 = math.tanh %461 : vector<8x128xf32>
    %cst_51 = arith.constant 1.000000e+00 : f32
    %463 = vector.broadcast %cst_51 : f32 to vector<8x128xf32>
    %464 = arith.addf %463, %462 : vector<8x128xf32>
    %465 = arith.mulf %454, %464 : vector<8x128xf32>
    %cst_52 = arith.constant 5.000000e-01 : f32
    %466 = vector.broadcast %cst_52 : f32 to vector<8x128xf32>
    %467 = arith.mulf %466, %426 : vector<8x128xf32>
    %cst_53 = arith.constant 4.471500e-02 : f32
    %468 = vector.broadcast %cst_53 : f32 to vector<8x128xf32>
    %469 = arith.mulf %468, %426 : vector<8x128xf32>
    %470 = arith.mulf %469, %426 : vector<8x128xf32>
    %471 = arith.mulf %470, %426 : vector<8x128xf32>
    %472 = arith.addf %426, %471 : vector<8x128xf32>
    %cst_54 = arith.constant 0.797884583 : f32
    %473 = vector.broadcast %cst_54 : f32 to vector<8x128xf32>
    %474 = arith.mulf %473, %472 : vector<8x128xf32>
    %475 = math.tanh %474 : vector<8x128xf32>
    %cst_55 = arith.constant 1.000000e+00 : f32
    %476 = vector.broadcast %cst_55 : f32 to vector<8x128xf32>
    %477 = arith.addf %476, %475 : vector<8x128xf32>
    %478 = arith.mulf %467, %477 : vector<8x128xf32>
    %c76 = arith.constant 76 : index
    %479 = memref.load %arg1[%c76] : memref<160xf32, #tpu.memory_space<smem>>
    %480 = vector.broadcast %479 : f32 to vector<8x128xf32>
    %481 = arith.mulf %333, %480 : vector<8x128xf32>
    %c80 = arith.constant 80 : index
    %482 = memref.load %arg1[%c80] : memref<160xf32, #tpu.memory_space<smem>>
    %483 = vector.broadcast %482 : f32 to vector<8x128xf32>
    %484 = arith.mulf %340, %483 : vector<8x128xf32>
    %485 = arith.addf %481, %484 : vector<8x128xf32>
    %c84 = arith.constant 84 : index
    %486 = memref.load %arg1[%c84] : memref<160xf32, #tpu.memory_space<smem>>
    %487 = vector.broadcast %486 : f32 to vector<8x128xf32>
    %488 = arith.mulf %347, %487 : vector<8x128xf32>
    %489 = arith.addf %485, %488 : vector<8x128xf32>
    %c88 = arith.constant 88 : index
    %490 = memref.load %arg1[%c88] : memref<160xf32, #tpu.memory_space<smem>>
    %491 = vector.broadcast %490 : f32 to vector<8x128xf32>
    %492 = arith.mulf %354, %491 : vector<8x128xf32>
    %493 = arith.addf %489, %492 : vector<8x128xf32>
    %c92 = arith.constant 92 : index
    %494 = memref.load %arg1[%c92] : memref<160xf32, #tpu.memory_space<smem>>
    %495 = vector.broadcast %494 : f32 to vector<8x128xf32>
    %496 = arith.addf %493, %495 : vector<8x128xf32>
    %c77 = arith.constant 77 : index
    %497 = memref.load %arg1[%c77] : memref<160xf32, #tpu.memory_space<smem>>
    %498 = vector.broadcast %497 : f32 to vector<8x128xf32>
    %499 = arith.mulf %333, %498 : vector<8x128xf32>
    %c81 = arith.constant 81 : index
    %500 = memref.load %arg1[%c81] : memref<160xf32, #tpu.memory_space<smem>>
    %501 = vector.broadcast %500 : f32 to vector<8x128xf32>
    %502 = arith.mulf %340, %501 : vector<8x128xf32>
    %503 = arith.addf %499, %502 : vector<8x128xf32>
    %c85 = arith.constant 85 : index
    %504 = memref.load %arg1[%c85] : memref<160xf32, #tpu.memory_space<smem>>
    %505 = vector.broadcast %504 : f32 to vector<8x128xf32>
    %506 = arith.mulf %347, %505 : vector<8x128xf32>
    %507 = arith.addf %503, %506 : vector<8x128xf32>
    %c89 = arith.constant 89 : index
    %508 = memref.load %arg1[%c89] : memref<160xf32, #tpu.memory_space<smem>>
    %509 = vector.broadcast %508 : f32 to vector<8x128xf32>
    %510 = arith.mulf %354, %509 : vector<8x128xf32>
    %511 = arith.addf %507, %510 : vector<8x128xf32>
    %c93 = arith.constant 93 : index
    %512 = memref.load %arg1[%c93] : memref<160xf32, #tpu.memory_space<smem>>
    %513 = vector.broadcast %512 : f32 to vector<8x128xf32>
    %514 = arith.addf %511, %513 : vector<8x128xf32>
    %c78 = arith.constant 78 : index
    %515 = memref.load %arg1[%c78] : memref<160xf32, #tpu.memory_space<smem>>
    %516 = vector.broadcast %515 : f32 to vector<8x128xf32>
    %517 = arith.mulf %333, %516 : vector<8x128xf32>
    %c82 = arith.constant 82 : index
    %518 = memref.load %arg1[%c82] : memref<160xf32, #tpu.memory_space<smem>>
    %519 = vector.broadcast %518 : f32 to vector<8x128xf32>
    %520 = arith.mulf %340, %519 : vector<8x128xf32>
    %521 = arith.addf %517, %520 : vector<8x128xf32>
    %c86 = arith.constant 86 : index
    %522 = memref.load %arg1[%c86] : memref<160xf32, #tpu.memory_space<smem>>
    %523 = vector.broadcast %522 : f32 to vector<8x128xf32>
    %524 = arith.mulf %347, %523 : vector<8x128xf32>
    %525 = arith.addf %521, %524 : vector<8x128xf32>
    %c90 = arith.constant 90 : index
    %526 = memref.load %arg1[%c90] : memref<160xf32, #tpu.memory_space<smem>>
    %527 = vector.broadcast %526 : f32 to vector<8x128xf32>
    %528 = arith.mulf %354, %527 : vector<8x128xf32>
    %529 = arith.addf %525, %528 : vector<8x128xf32>
    %c94 = arith.constant 94 : index
    %530 = memref.load %arg1[%c94] : memref<160xf32, #tpu.memory_space<smem>>
    %531 = vector.broadcast %530 : f32 to vector<8x128xf32>
    %532 = arith.addf %529, %531 : vector<8x128xf32>
    %c79 = arith.constant 79 : index
    %533 = memref.load %arg1[%c79] : memref<160xf32, #tpu.memory_space<smem>>
    %534 = vector.broadcast %533 : f32 to vector<8x128xf32>
    %535 = arith.mulf %333, %534 : vector<8x128xf32>
    %c83 = arith.constant 83 : index
    %536 = memref.load %arg1[%c83] : memref<160xf32, #tpu.memory_space<smem>>
    %537 = vector.broadcast %536 : f32 to vector<8x128xf32>
    %538 = arith.mulf %340, %537 : vector<8x128xf32>
    %539 = arith.addf %535, %538 : vector<8x128xf32>
    %c87 = arith.constant 87 : index
    %540 = memref.load %arg1[%c87] : memref<160xf32, #tpu.memory_space<smem>>
    %541 = vector.broadcast %540 : f32 to vector<8x128xf32>
    %542 = arith.mulf %347, %541 : vector<8x128xf32>
    %543 = arith.addf %539, %542 : vector<8x128xf32>
    %c91 = arith.constant 91 : index
    %544 = memref.load %arg1[%c91] : memref<160xf32, #tpu.memory_space<smem>>
    %545 = vector.broadcast %544 : f32 to vector<8x128xf32>
    %546 = arith.mulf %354, %545 : vector<8x128xf32>
    %547 = arith.addf %543, %546 : vector<8x128xf32>
    %c95 = arith.constant 95 : index
    %548 = memref.load %arg1[%c95] : memref<160xf32, #tpu.memory_space<smem>>
    %549 = vector.broadcast %548 : f32 to vector<8x128xf32>
    %550 = arith.addf %547, %549 : vector<8x128xf32>
    %cst_56 = arith.constant 5.000000e-01 : f32
    %551 = vector.broadcast %cst_56 : f32 to vector<8x128xf32>
    %552 = arith.mulf %551, %496 : vector<8x128xf32>
    %cst_57 = arith.constant 4.471500e-02 : f32
    %553 = vector.broadcast %cst_57 : f32 to vector<8x128xf32>
    %554 = arith.mulf %553, %496 : vector<8x128xf32>
    %555 = arith.mulf %554, %496 : vector<8x128xf32>
    %556 = arith.mulf %555, %496 : vector<8x128xf32>
    %557 = arith.addf %496, %556 : vector<8x128xf32>
    %cst_58 = arith.constant 0.797884583 : f32
    %558 = vector.broadcast %cst_58 : f32 to vector<8x128xf32>
    %559 = arith.mulf %558, %557 : vector<8x128xf32>
    %560 = math.tanh %559 : vector<8x128xf32>
    %cst_59 = arith.constant 1.000000e+00 : f32
    %561 = vector.broadcast %cst_59 : f32 to vector<8x128xf32>
    %562 = arith.addf %561, %560 : vector<8x128xf32>
    %563 = arith.mulf %552, %562 : vector<8x128xf32>
    %cst_60 = arith.constant 5.000000e-01 : f32
    %564 = vector.broadcast %cst_60 : f32 to vector<8x128xf32>
    %565 = arith.mulf %564, %514 : vector<8x128xf32>
    %cst_61 = arith.constant 4.471500e-02 : f32
    %566 = vector.broadcast %cst_61 : f32 to vector<8x128xf32>
    %567 = arith.mulf %566, %514 : vector<8x128xf32>
    %568 = arith.mulf %567, %514 : vector<8x128xf32>
    %569 = arith.mulf %568, %514 : vector<8x128xf32>
    %570 = arith.addf %514, %569 : vector<8x128xf32>
    %cst_62 = arith.constant 0.797884583 : f32
    %571 = vector.broadcast %cst_62 : f32 to vector<8x128xf32>
    %572 = arith.mulf %571, %570 : vector<8x128xf32>
    %573 = math.tanh %572 : vector<8x128xf32>
    %cst_63 = arith.constant 1.000000e+00 : f32
    %574 = vector.broadcast %cst_63 : f32 to vector<8x128xf32>
    %575 = arith.addf %574, %573 : vector<8x128xf32>
    %576 = arith.mulf %565, %575 : vector<8x128xf32>
    %cst_64 = arith.constant 5.000000e-01 : f32
    %577 = vector.broadcast %cst_64 : f32 to vector<8x128xf32>
    %578 = arith.mulf %577, %532 : vector<8x128xf32>
    %cst_65 = arith.constant 4.471500e-02 : f32
    %579 = vector.broadcast %cst_65 : f32 to vector<8x128xf32>
    %580 = arith.mulf %579, %532 : vector<8x128xf32>
    %581 = arith.mulf %580, %532 : vector<8x128xf32>
    %582 = arith.mulf %581, %532 : vector<8x128xf32>
    %583 = arith.addf %532, %582 : vector<8x128xf32>
    %cst_66 = arith.constant 0.797884583 : f32
    %584 = vector.broadcast %cst_66 : f32 to vector<8x128xf32>
    %585 = arith.mulf %584, %583 : vector<8x128xf32>
    %586 = math.tanh %585 : vector<8x128xf32>
    %cst_67 = arith.constant 1.000000e+00 : f32
    %587 = vector.broadcast %cst_67 : f32 to vector<8x128xf32>
    %588 = arith.addf %587, %586 : vector<8x128xf32>
    %589 = arith.mulf %578, %588 : vector<8x128xf32>
    %cst_68 = arith.constant 5.000000e-01 : f32
    %590 = vector.broadcast %cst_68 : f32 to vector<8x128xf32>
    %591 = arith.mulf %590, %550 : vector<8x128xf32>
    %cst_69 = arith.constant 4.471500e-02 : f32
    %592 = vector.broadcast %cst_69 : f32 to vector<8x128xf32>
    %593 = arith.mulf %592, %550 : vector<8x128xf32>
    %594 = arith.mulf %593, %550 : vector<8x128xf32>
    %595 = arith.mulf %594, %550 : vector<8x128xf32>
    %596 = arith.addf %550, %595 : vector<8x128xf32>
    %cst_70 = arith.constant 0.797884583 : f32
    %597 = vector.broadcast %cst_70 : f32 to vector<8x128xf32>
    %598 = arith.mulf %597, %596 : vector<8x128xf32>
    %599 = math.tanh %598 : vector<8x128xf32>
    %cst_71 = arith.constant 1.000000e+00 : f32
    %600 = vector.broadcast %cst_71 : f32 to vector<8x128xf32>
    %601 = arith.addf %600, %599 : vector<8x128xf32>
    %602 = arith.mulf %591, %601 : vector<8x128xf32>
    %603 = arith.addf %563, %576 : vector<8x128xf32>
    %604 = arith.addf %603, %589 : vector<8x128xf32>
    %605 = arith.addf %604, %602 : vector<8x128xf32>
    %cst_72 = arith.constant 2.500000e-01 : f32
    %606 = vector.broadcast %cst_72 : f32 to vector<8x128xf32>
    %607 = arith.mulf %605, %606 : vector<8x128xf32>
    %608 = arith.subf %563, %607 : vector<8x128xf32>
    %609 = arith.subf %576, %607 : vector<8x128xf32>
    %610 = arith.subf %589, %607 : vector<8x128xf32>
    %611 = arith.subf %602, %607 : vector<8x128xf32>
    %612 = arith.mulf %608, %608 : vector<8x128xf32>
    %613 = arith.mulf %609, %609 : vector<8x128xf32>
    %614 = arith.addf %612, %613 : vector<8x128xf32>
    %615 = arith.mulf %610, %610 : vector<8x128xf32>
    %616 = arith.addf %614, %615 : vector<8x128xf32>
    %617 = arith.mulf %611, %611 : vector<8x128xf32>
    %618 = arith.addf %616, %617 : vector<8x128xf32>
    %cst_73 = arith.constant 2.500000e-01 : f32
    %619 = vector.broadcast %cst_73 : f32 to vector<8x128xf32>
    %620 = arith.mulf %618, %619 : vector<8x128xf32>
    %cst_74 = arith.constant 9.99999974E-6 : f32
    %621 = vector.broadcast %cst_74 : f32 to vector<8x128xf32>
    %622 = arith.addf %620, %621 : vector<8x128xf32>
    %623 = math.rsqrt %622 : vector<8x128xf32>
    %624 = arith.mulf %608, %623 : vector<8x128xf32>
    %c96 = arith.constant 96 : index
    %625 = memref.load %arg1[%c96] : memref<160xf32, #tpu.memory_space<smem>>
    %626 = vector.broadcast %625 : f32 to vector<8x128xf32>
    %627 = arith.mulf %624, %626 : vector<8x128xf32>
    %c100 = arith.constant 100 : index
    %628 = memref.load %arg1[%c100] : memref<160xf32, #tpu.memory_space<smem>>
    %629 = vector.broadcast %628 : f32 to vector<8x128xf32>
    %630 = arith.addf %627, %629 : vector<8x128xf32>
    %631 = arith.mulf %609, %623 : vector<8x128xf32>
    %c97 = arith.constant 97 : index
    %632 = memref.load %arg1[%c97] : memref<160xf32, #tpu.memory_space<smem>>
    %633 = vector.broadcast %632 : f32 to vector<8x128xf32>
    %634 = arith.mulf %631, %633 : vector<8x128xf32>
    %c101 = arith.constant 101 : index
    %635 = memref.load %arg1[%c101] : memref<160xf32, #tpu.memory_space<smem>>
    %636 = vector.broadcast %635 : f32 to vector<8x128xf32>
    %637 = arith.addf %634, %636 : vector<8x128xf32>
    %638 = arith.mulf %610, %623 : vector<8x128xf32>
    %c98 = arith.constant 98 : index
    %639 = memref.load %arg1[%c98] : memref<160xf32, #tpu.memory_space<smem>>
    %640 = vector.broadcast %639 : f32 to vector<8x128xf32>
    %641 = arith.mulf %638, %640 : vector<8x128xf32>
    %c102 = arith.constant 102 : index
    %642 = memref.load %arg1[%c102] : memref<160xf32, #tpu.memory_space<smem>>
    %643 = vector.broadcast %642 : f32 to vector<8x128xf32>
    %644 = arith.addf %641, %643 : vector<8x128xf32>
    %645 = arith.mulf %611, %623 : vector<8x128xf32>
    %c99 = arith.constant 99 : index
    %646 = memref.load %arg1[%c99] : memref<160xf32, #tpu.memory_space<smem>>
    %647 = vector.broadcast %646 : f32 to vector<8x128xf32>
    %648 = arith.mulf %645, %647 : vector<8x128xf32>
    %c103 = arith.constant 103 : index
    %649 = memref.load %arg1[%c103] : memref<160xf32, #tpu.memory_space<smem>>
    %650 = vector.broadcast %649 : f32 to vector<8x128xf32>
    %651 = arith.addf %648, %650 : vector<8x128xf32>
    %652 = arith.addf %266, %279 : vector<8x128xf32>
    %653 = arith.addf %652, %292 : vector<8x128xf32>
    %654 = arith.addf %653, %305 : vector<8x128xf32>
    %cst_75 = arith.constant 2.500000e-01 : f32
    %655 = vector.broadcast %cst_75 : f32 to vector<8x128xf32>
    %656 = arith.mulf %654, %655 : vector<8x128xf32>
    %657 = arith.subf %266, %656 : vector<8x128xf32>
    %658 = arith.subf %279, %656 : vector<8x128xf32>
    %659 = arith.subf %292, %656 : vector<8x128xf32>
    %660 = arith.subf %305, %656 : vector<8x128xf32>
    %661 = arith.mulf %657, %657 : vector<8x128xf32>
    %662 = arith.mulf %658, %658 : vector<8x128xf32>
    %663 = arith.addf %661, %662 : vector<8x128xf32>
    %664 = arith.mulf %659, %659 : vector<8x128xf32>
    %665 = arith.addf %663, %664 : vector<8x128xf32>
    %666 = arith.mulf %660, %660 : vector<8x128xf32>
    %667 = arith.addf %665, %666 : vector<8x128xf32>
    %cst_76 = arith.constant 2.500000e-01 : f32
    %668 = vector.broadcast %cst_76 : f32 to vector<8x128xf32>
    %669 = arith.mulf %667, %668 : vector<8x128xf32>
    %cst_77 = arith.constant 9.99999974E-6 : f32
    %670 = vector.broadcast %cst_77 : f32 to vector<8x128xf32>
    %671 = arith.addf %669, %670 : vector<8x128xf32>
    %672 = math.rsqrt %671 : vector<8x128xf32>
    %673 = arith.mulf %657, %672 : vector<8x128xf32>
    %c104 = arith.constant 104 : index
    %674 = memref.load %arg1[%c104] : memref<160xf32, #tpu.memory_space<smem>>
    %675 = vector.broadcast %674 : f32 to vector<8x128xf32>
    %676 = arith.mulf %673, %675 : vector<8x128xf32>
    %c108 = arith.constant 108 : index
    %677 = memref.load %arg1[%c108] : memref<160xf32, #tpu.memory_space<smem>>
    %678 = vector.broadcast %677 : f32 to vector<8x128xf32>
    %679 = arith.addf %676, %678 : vector<8x128xf32>
    %680 = arith.mulf %658, %672 : vector<8x128xf32>
    %c105 = arith.constant 105 : index
    %681 = memref.load %arg1[%c105] : memref<160xf32, #tpu.memory_space<smem>>
    %682 = vector.broadcast %681 : f32 to vector<8x128xf32>
    %683 = arith.mulf %680, %682 : vector<8x128xf32>
    %c109 = arith.constant 109 : index
    %684 = memref.load %arg1[%c109] : memref<160xf32, #tpu.memory_space<smem>>
    %685 = vector.broadcast %684 : f32 to vector<8x128xf32>
    %686 = arith.addf %683, %685 : vector<8x128xf32>
    %687 = arith.mulf %659, %672 : vector<8x128xf32>
    %c106 = arith.constant 106 : index
    %688 = memref.load %arg1[%c106] : memref<160xf32, #tpu.memory_space<smem>>
    %689 = vector.broadcast %688 : f32 to vector<8x128xf32>
    %690 = arith.mulf %687, %689 : vector<8x128xf32>
    %c110 = arith.constant 110 : index
    %691 = memref.load %arg1[%c110] : memref<160xf32, #tpu.memory_space<smem>>
    %692 = vector.broadcast %691 : f32 to vector<8x128xf32>
    %693 = arith.addf %690, %692 : vector<8x128xf32>
    %694 = arith.mulf %660, %672 : vector<8x128xf32>
    %c107 = arith.constant 107 : index
    %695 = memref.load %arg1[%c107] : memref<160xf32, #tpu.memory_space<smem>>
    %696 = vector.broadcast %695 : f32 to vector<8x128xf32>
    %697 = arith.mulf %694, %696 : vector<8x128xf32>
    %c111 = arith.constant 111 : index
    %698 = memref.load %arg1[%c111] : memref<160xf32, #tpu.memory_space<smem>>
    %699 = vector.broadcast %698 : f32 to vector<8x128xf32>
    %700 = arith.addf %697, %699 : vector<8x128xf32>
    %c112 = arith.constant 112 : index
    %701 = memref.load %arg1[%c112] : memref<160xf32, #tpu.memory_space<smem>>
    %702 = vector.broadcast %701 : f32 to vector<8x128xf32>
    %703 = arith.mulf %679, %702 : vector<8x128xf32>
    %c116 = arith.constant 116 : index
    %704 = memref.load %arg1[%c116] : memref<160xf32, #tpu.memory_space<smem>>
    %705 = vector.broadcast %704 : f32 to vector<8x128xf32>
    %706 = arith.mulf %686, %705 : vector<8x128xf32>
    %707 = arith.addf %703, %706 : vector<8x128xf32>
    %c120 = arith.constant 120 : index
    %708 = memref.load %arg1[%c120] : memref<160xf32, #tpu.memory_space<smem>>
    %709 = vector.broadcast %708 : f32 to vector<8x128xf32>
    %710 = arith.mulf %693, %709 : vector<8x128xf32>
    %711 = arith.addf %707, %710 : vector<8x128xf32>
    %c124 = arith.constant 124 : index
    %712 = memref.load %arg1[%c124] : memref<160xf32, #tpu.memory_space<smem>>
    %713 = vector.broadcast %712 : f32 to vector<8x128xf32>
    %714 = arith.mulf %700, %713 : vector<8x128xf32>
    %715 = arith.addf %711, %714 : vector<8x128xf32>
    %c128 = arith.constant 128 : index
    %716 = memref.load %arg1[%c128] : memref<160xf32, #tpu.memory_space<smem>>
    %717 = vector.broadcast %716 : f32 to vector<8x128xf32>
    %718 = arith.addf %715, %717 : vector<8x128xf32>
    %c113 = arith.constant 113 : index
    %719 = memref.load %arg1[%c113] : memref<160xf32, #tpu.memory_space<smem>>
    %720 = vector.broadcast %719 : f32 to vector<8x128xf32>
    %721 = arith.mulf %679, %720 : vector<8x128xf32>
    %c117 = arith.constant 117 : index
    %722 = memref.load %arg1[%c117] : memref<160xf32, #tpu.memory_space<smem>>
    %723 = vector.broadcast %722 : f32 to vector<8x128xf32>
    %724 = arith.mulf %686, %723 : vector<8x128xf32>
    %725 = arith.addf %721, %724 : vector<8x128xf32>
    %c121 = arith.constant 121 : index
    %726 = memref.load %arg1[%c121] : memref<160xf32, #tpu.memory_space<smem>>
    %727 = vector.broadcast %726 : f32 to vector<8x128xf32>
    %728 = arith.mulf %693, %727 : vector<8x128xf32>
    %729 = arith.addf %725, %728 : vector<8x128xf32>
    %c125 = arith.constant 125 : index
    %730 = memref.load %arg1[%c125] : memref<160xf32, #tpu.memory_space<smem>>
    %731 = vector.broadcast %730 : f32 to vector<8x128xf32>
    %732 = arith.mulf %700, %731 : vector<8x128xf32>
    %733 = arith.addf %729, %732 : vector<8x128xf32>
    %c129 = arith.constant 129 : index
    %734 = memref.load %arg1[%c129] : memref<160xf32, #tpu.memory_space<smem>>
    %735 = vector.broadcast %734 : f32 to vector<8x128xf32>
    %736 = arith.addf %733, %735 : vector<8x128xf32>
    %c114 = arith.constant 114 : index
    %737 = memref.load %arg1[%c114] : memref<160xf32, #tpu.memory_space<smem>>
    %738 = vector.broadcast %737 : f32 to vector<8x128xf32>
    %739 = arith.mulf %679, %738 : vector<8x128xf32>
    %c118 = arith.constant 118 : index
    %740 = memref.load %arg1[%c118] : memref<160xf32, #tpu.memory_space<smem>>
    %741 = vector.broadcast %740 : f32 to vector<8x128xf32>
    %742 = arith.mulf %686, %741 : vector<8x128xf32>
    %743 = arith.addf %739, %742 : vector<8x128xf32>
    %c122 = arith.constant 122 : index
    %744 = memref.load %arg1[%c122] : memref<160xf32, #tpu.memory_space<smem>>
    %745 = vector.broadcast %744 : f32 to vector<8x128xf32>
    %746 = arith.mulf %693, %745 : vector<8x128xf32>
    %747 = arith.addf %743, %746 : vector<8x128xf32>
    %c126 = arith.constant 126 : index
    %748 = memref.load %arg1[%c126] : memref<160xf32, #tpu.memory_space<smem>>
    %749 = vector.broadcast %748 : f32 to vector<8x128xf32>
    %750 = arith.mulf %700, %749 : vector<8x128xf32>
    %751 = arith.addf %747, %750 : vector<8x128xf32>
    %c130 = arith.constant 130 : index
    %752 = memref.load %arg1[%c130] : memref<160xf32, #tpu.memory_space<smem>>
    %753 = vector.broadcast %752 : f32 to vector<8x128xf32>
    %754 = arith.addf %751, %753 : vector<8x128xf32>
    %c115 = arith.constant 115 : index
    %755 = memref.load %arg1[%c115] : memref<160xf32, #tpu.memory_space<smem>>
    %756 = vector.broadcast %755 : f32 to vector<8x128xf32>
    %757 = arith.mulf %679, %756 : vector<8x128xf32>
    %c119 = arith.constant 119 : index
    %758 = memref.load %arg1[%c119] : memref<160xf32, #tpu.memory_space<smem>>
    %759 = vector.broadcast %758 : f32 to vector<8x128xf32>
    %760 = arith.mulf %686, %759 : vector<8x128xf32>
    %761 = arith.addf %757, %760 : vector<8x128xf32>
    %c123 = arith.constant 123 : index
    %762 = memref.load %arg1[%c123] : memref<160xf32, #tpu.memory_space<smem>>
    %763 = vector.broadcast %762 : f32 to vector<8x128xf32>
    %764 = arith.mulf %693, %763 : vector<8x128xf32>
    %765 = arith.addf %761, %764 : vector<8x128xf32>
    %c127 = arith.constant 127 : index
    %766 = memref.load %arg1[%c127] : memref<160xf32, #tpu.memory_space<smem>>
    %767 = vector.broadcast %766 : f32 to vector<8x128xf32>
    %768 = arith.mulf %700, %767 : vector<8x128xf32>
    %769 = arith.addf %765, %768 : vector<8x128xf32>
    %c131 = arith.constant 131 : index
    %770 = memref.load %arg1[%c131] : memref<160xf32, #tpu.memory_space<smem>>
    %771 = vector.broadcast %770 : f32 to vector<8x128xf32>
    %772 = arith.addf %769, %771 : vector<8x128xf32>
    %cst_78 = arith.constant 5.000000e-01 : f32
    %773 = vector.broadcast %cst_78 : f32 to vector<8x128xf32>
    %774 = arith.mulf %773, %718 : vector<8x128xf32>
    %cst_79 = arith.constant 4.471500e-02 : f32
    %775 = vector.broadcast %cst_79 : f32 to vector<8x128xf32>
    %776 = arith.mulf %775, %718 : vector<8x128xf32>
    %777 = arith.mulf %776, %718 : vector<8x128xf32>
    %778 = arith.mulf %777, %718 : vector<8x128xf32>
    %779 = arith.addf %718, %778 : vector<8x128xf32>
    %cst_80 = arith.constant 0.797884583 : f32
    %780 = vector.broadcast %cst_80 : f32 to vector<8x128xf32>
    %781 = arith.mulf %780, %779 : vector<8x128xf32>
    %782 = math.tanh %781 : vector<8x128xf32>
    %cst_81 = arith.constant 1.000000e+00 : f32
    %783 = vector.broadcast %cst_81 : f32 to vector<8x128xf32>
    %784 = arith.addf %783, %782 : vector<8x128xf32>
    %785 = arith.mulf %774, %784 : vector<8x128xf32>
    %cst_82 = arith.constant 5.000000e-01 : f32
    %786 = vector.broadcast %cst_82 : f32 to vector<8x128xf32>
    %787 = arith.mulf %786, %736 : vector<8x128xf32>
    %cst_83 = arith.constant 4.471500e-02 : f32
    %788 = vector.broadcast %cst_83 : f32 to vector<8x128xf32>
    %789 = arith.mulf %788, %736 : vector<8x128xf32>
    %790 = arith.mulf %789, %736 : vector<8x128xf32>
    %791 = arith.mulf %790, %736 : vector<8x128xf32>
    %792 = arith.addf %736, %791 : vector<8x128xf32>
    %cst_84 = arith.constant 0.797884583 : f32
    %793 = vector.broadcast %cst_84 : f32 to vector<8x128xf32>
    %794 = arith.mulf %793, %792 : vector<8x128xf32>
    %795 = math.tanh %794 : vector<8x128xf32>
    %cst_85 = arith.constant 1.000000e+00 : f32
    %796 = vector.broadcast %cst_85 : f32 to vector<8x128xf32>
    %797 = arith.addf %796, %795 : vector<8x128xf32>
    %798 = arith.mulf %787, %797 : vector<8x128xf32>
    %cst_86 = arith.constant 5.000000e-01 : f32
    %799 = vector.broadcast %cst_86 : f32 to vector<8x128xf32>
    %800 = arith.mulf %799, %754 : vector<8x128xf32>
    %cst_87 = arith.constant 4.471500e-02 : f32
    %801 = vector.broadcast %cst_87 : f32 to vector<8x128xf32>
    %802 = arith.mulf %801, %754 : vector<8x128xf32>
    %803 = arith.mulf %802, %754 : vector<8x128xf32>
    %804 = arith.mulf %803, %754 : vector<8x128xf32>
    %805 = arith.addf %754, %804 : vector<8x128xf32>
    %cst_88 = arith.constant 0.797884583 : f32
    %806 = vector.broadcast %cst_88 : f32 to vector<8x128xf32>
    %807 = arith.mulf %806, %805 : vector<8x128xf32>
    %808 = math.tanh %807 : vector<8x128xf32>
    %cst_89 = arith.constant 1.000000e+00 : f32
    %809 = vector.broadcast %cst_89 : f32 to vector<8x128xf32>
    %810 = arith.addf %809, %808 : vector<8x128xf32>
    %811 = arith.mulf %800, %810 : vector<8x128xf32>
    %cst_90 = arith.constant 5.000000e-01 : f32
    %812 = vector.broadcast %cst_90 : f32 to vector<8x128xf32>
    %813 = arith.mulf %812, %772 : vector<8x128xf32>
    %cst_91 = arith.constant 4.471500e-02 : f32
    %814 = vector.broadcast %cst_91 : f32 to vector<8x128xf32>
    %815 = arith.mulf %814, %772 : vector<8x128xf32>
    %816 = arith.mulf %815, %772 : vector<8x128xf32>
    %817 = arith.mulf %816, %772 : vector<8x128xf32>
    %818 = arith.addf %772, %817 : vector<8x128xf32>
    %cst_92 = arith.constant 0.797884583 : f32
    %819 = vector.broadcast %cst_92 : f32 to vector<8x128xf32>
    %820 = arith.mulf %819, %818 : vector<8x128xf32>
    %821 = math.tanh %820 : vector<8x128xf32>
    %cst_93 = arith.constant 1.000000e+00 : f32
    %822 = vector.broadcast %cst_93 : f32 to vector<8x128xf32>
    %823 = arith.addf %822, %821 : vector<8x128xf32>
    %824 = arith.mulf %813, %823 : vector<8x128xf32>
    %c132 = arith.constant 132 : index
    %825 = memref.load %arg1[%c132] : memref<160xf32, #tpu.memory_space<smem>>
    %826 = vector.broadcast %825 : f32 to vector<8x128xf32>
    %827 = arith.mulf %679, %826 : vector<8x128xf32>
    %c136 = arith.constant 136 : index
    %828 = memref.load %arg1[%c136] : memref<160xf32, #tpu.memory_space<smem>>
    %829 = vector.broadcast %828 : f32 to vector<8x128xf32>
    %830 = arith.mulf %686, %829 : vector<8x128xf32>
    %831 = arith.addf %827, %830 : vector<8x128xf32>
    %c140 = arith.constant 140 : index
    %832 = memref.load %arg1[%c140] : memref<160xf32, #tpu.memory_space<smem>>
    %833 = vector.broadcast %832 : f32 to vector<8x128xf32>
    %834 = arith.mulf %693, %833 : vector<8x128xf32>
    %835 = arith.addf %831, %834 : vector<8x128xf32>
    %c144 = arith.constant 144 : index
    %836 = memref.load %arg1[%c144] : memref<160xf32, #tpu.memory_space<smem>>
    %837 = vector.broadcast %836 : f32 to vector<8x128xf32>
    %838 = arith.mulf %700, %837 : vector<8x128xf32>
    %839 = arith.addf %835, %838 : vector<8x128xf32>
    %c148 = arith.constant 148 : index
    %840 = memref.load %arg1[%c148] : memref<160xf32, #tpu.memory_space<smem>>
    %841 = vector.broadcast %840 : f32 to vector<8x128xf32>
    %842 = arith.addf %839, %841 : vector<8x128xf32>
    %c133 = arith.constant 133 : index
    %843 = memref.load %arg1[%c133] : memref<160xf32, #tpu.memory_space<smem>>
    %844 = vector.broadcast %843 : f32 to vector<8x128xf32>
    %845 = arith.mulf %679, %844 : vector<8x128xf32>
    %c137 = arith.constant 137 : index
    %846 = memref.load %arg1[%c137] : memref<160xf32, #tpu.memory_space<smem>>
    %847 = vector.broadcast %846 : f32 to vector<8x128xf32>
    %848 = arith.mulf %686, %847 : vector<8x128xf32>
    %849 = arith.addf %845, %848 : vector<8x128xf32>
    %c141 = arith.constant 141 : index
    %850 = memref.load %arg1[%c141] : memref<160xf32, #tpu.memory_space<smem>>
    %851 = vector.broadcast %850 : f32 to vector<8x128xf32>
    %852 = arith.mulf %693, %851 : vector<8x128xf32>
    %853 = arith.addf %849, %852 : vector<8x128xf32>
    %c145 = arith.constant 145 : index
    %854 = memref.load %arg1[%c145] : memref<160xf32, #tpu.memory_space<smem>>
    %855 = vector.broadcast %854 : f32 to vector<8x128xf32>
    %856 = arith.mulf %700, %855 : vector<8x128xf32>
    %857 = arith.addf %853, %856 : vector<8x128xf32>
    %c149 = arith.constant 149 : index
    %858 = memref.load %arg1[%c149] : memref<160xf32, #tpu.memory_space<smem>>
    %859 = vector.broadcast %858 : f32 to vector<8x128xf32>
    %860 = arith.addf %857, %859 : vector<8x128xf32>
    %c134 = arith.constant 134 : index
    %861 = memref.load %arg1[%c134] : memref<160xf32, #tpu.memory_space<smem>>
    %862 = vector.broadcast %861 : f32 to vector<8x128xf32>
    %863 = arith.mulf %679, %862 : vector<8x128xf32>
    %c138 = arith.constant 138 : index
    %864 = memref.load %arg1[%c138] : memref<160xf32, #tpu.memory_space<smem>>
    %865 = vector.broadcast %864 : f32 to vector<8x128xf32>
    %866 = arith.mulf %686, %865 : vector<8x128xf32>
    %867 = arith.addf %863, %866 : vector<8x128xf32>
    %c142 = arith.constant 142 : index
    %868 = memref.load %arg1[%c142] : memref<160xf32, #tpu.memory_space<smem>>
    %869 = vector.broadcast %868 : f32 to vector<8x128xf32>
    %870 = arith.mulf %693, %869 : vector<8x128xf32>
    %871 = arith.addf %867, %870 : vector<8x128xf32>
    %c146 = arith.constant 146 : index
    %872 = memref.load %arg1[%c146] : memref<160xf32, #tpu.memory_space<smem>>
    %873 = vector.broadcast %872 : f32 to vector<8x128xf32>
    %874 = arith.mulf %700, %873 : vector<8x128xf32>
    %875 = arith.addf %871, %874 : vector<8x128xf32>
    %c150 = arith.constant 150 : index
    %876 = memref.load %arg1[%c150] : memref<160xf32, #tpu.memory_space<smem>>
    %877 = vector.broadcast %876 : f32 to vector<8x128xf32>
    %878 = arith.addf %875, %877 : vector<8x128xf32>
    %c135 = arith.constant 135 : index
    %879 = memref.load %arg1[%c135] : memref<160xf32, #tpu.memory_space<smem>>
    %880 = vector.broadcast %879 : f32 to vector<8x128xf32>
    %881 = arith.mulf %679, %880 : vector<8x128xf32>
    %c139 = arith.constant 139 : index
    %882 = memref.load %arg1[%c139] : memref<160xf32, #tpu.memory_space<smem>>
    %883 = vector.broadcast %882 : f32 to vector<8x128xf32>
    %884 = arith.mulf %686, %883 : vector<8x128xf32>
    %885 = arith.addf %881, %884 : vector<8x128xf32>
    %c143 = arith.constant 143 : index
    %886 = memref.load %arg1[%c143] : memref<160xf32, #tpu.memory_space<smem>>
    %887 = vector.broadcast %886 : f32 to vector<8x128xf32>
    %888 = arith.mulf %693, %887 : vector<8x128xf32>
    %889 = arith.addf %885, %888 : vector<8x128xf32>
    %c147 = arith.constant 147 : index
    %890 = memref.load %arg1[%c147] : memref<160xf32, #tpu.memory_space<smem>>
    %891 = vector.broadcast %890 : f32 to vector<8x128xf32>
    %892 = arith.mulf %700, %891 : vector<8x128xf32>
    %893 = arith.addf %889, %892 : vector<8x128xf32>
    %c151 = arith.constant 151 : index
    %894 = memref.load %arg1[%c151] : memref<160xf32, #tpu.memory_space<smem>>
    %895 = vector.broadcast %894 : f32 to vector<8x128xf32>
    %896 = arith.addf %893, %895 : vector<8x128xf32>
    %cst_94 = arith.constant 5.000000e-01 : f32
    %897 = vector.broadcast %cst_94 : f32 to vector<8x128xf32>
    %898 = arith.mulf %897, %842 : vector<8x128xf32>
    %cst_95 = arith.constant 4.471500e-02 : f32
    %899 = vector.broadcast %cst_95 : f32 to vector<8x128xf32>
    %900 = arith.mulf %899, %842 : vector<8x128xf32>
    %901 = arith.mulf %900, %842 : vector<8x128xf32>
    %902 = arith.mulf %901, %842 : vector<8x128xf32>
    %903 = arith.addf %842, %902 : vector<8x128xf32>
    %cst_96 = arith.constant 0.797884583 : f32
    %904 = vector.broadcast %cst_96 : f32 to vector<8x128xf32>
    %905 = arith.mulf %904, %903 : vector<8x128xf32>
    %906 = math.tanh %905 : vector<8x128xf32>
    %cst_97 = arith.constant 1.000000e+00 : f32
    %907 = vector.broadcast %cst_97 : f32 to vector<8x128xf32>
    %908 = arith.addf %907, %906 : vector<8x128xf32>
    %909 = arith.mulf %898, %908 : vector<8x128xf32>
    %cst_98 = arith.constant 5.000000e-01 : f32
    %910 = vector.broadcast %cst_98 : f32 to vector<8x128xf32>
    %911 = arith.mulf %910, %860 : vector<8x128xf32>
    %cst_99 = arith.constant 4.471500e-02 : f32
    %912 = vector.broadcast %cst_99 : f32 to vector<8x128xf32>
    %913 = arith.mulf %912, %860 : vector<8x128xf32>
    %914 = arith.mulf %913, %860 : vector<8x128xf32>
    %915 = arith.mulf %914, %860 : vector<8x128xf32>
    %916 = arith.addf %860, %915 : vector<8x128xf32>
    %cst_100 = arith.constant 0.797884583 : f32
    %917 = vector.broadcast %cst_100 : f32 to vector<8x128xf32>
    %918 = arith.mulf %917, %916 : vector<8x128xf32>
    %919 = math.tanh %918 : vector<8x128xf32>
    %cst_101 = arith.constant 1.000000e+00 : f32
    %920 = vector.broadcast %cst_101 : f32 to vector<8x128xf32>
    %921 = arith.addf %920, %919 : vector<8x128xf32>
    %922 = arith.mulf %911, %921 : vector<8x128xf32>
    %cst_102 = arith.constant 5.000000e-01 : f32
    %923 = vector.broadcast %cst_102 : f32 to vector<8x128xf32>
    %924 = arith.mulf %923, %878 : vector<8x128xf32>
    %cst_103 = arith.constant 4.471500e-02 : f32
    %925 = vector.broadcast %cst_103 : f32 to vector<8x128xf32>
    %926 = arith.mulf %925, %878 : vector<8x128xf32>
    %927 = arith.mulf %926, %878 : vector<8x128xf32>
    %928 = arith.mulf %927, %878 : vector<8x128xf32>
    %929 = arith.addf %878, %928 : vector<8x128xf32>
    %cst_104 = arith.constant 0.797884583 : f32
    %930 = vector.broadcast %cst_104 : f32 to vector<8x128xf32>
    %931 = arith.mulf %930, %929 : vector<8x128xf32>
    %932 = math.tanh %931 : vector<8x128xf32>
    %cst_105 = arith.constant 1.000000e+00 : f32
    %933 = vector.broadcast %cst_105 : f32 to vector<8x128xf32>
    %934 = arith.addf %933, %932 : vector<8x128xf32>
    %935 = arith.mulf %924, %934 : vector<8x128xf32>
    %cst_106 = arith.constant 5.000000e-01 : f32
    %936 = vector.broadcast %cst_106 : f32 to vector<8x128xf32>
    %937 = arith.mulf %936, %896 : vector<8x128xf32>
    %cst_107 = arith.constant 4.471500e-02 : f32
    %938 = vector.broadcast %cst_107 : f32 to vector<8x128xf32>
    %939 = arith.mulf %938, %896 : vector<8x128xf32>
    %940 = arith.mulf %939, %896 : vector<8x128xf32>
    %941 = arith.mulf %940, %896 : vector<8x128xf32>
    %942 = arith.addf %896, %941 : vector<8x128xf32>
    %cst_108 = arith.constant 0.797884583 : f32
    %943 = vector.broadcast %cst_108 : f32 to vector<8x128xf32>
    %944 = arith.mulf %943, %942 : vector<8x128xf32>
    %945 = math.tanh %944 : vector<8x128xf32>
    %cst_109 = arith.constant 1.000000e+00 : f32
    %946 = vector.broadcast %cst_109 : f32 to vector<8x128xf32>
    %947 = arith.addf %946, %945 : vector<8x128xf32>
    %948 = arith.mulf %937, %947 : vector<8x128xf32>
    %949 = arith.addf %909, %922 : vector<8x128xf32>
    %950 = arith.addf %949, %935 : vector<8x128xf32>
    %951 = arith.addf %950, %948 : vector<8x128xf32>
    %cst_110 = arith.constant 2.500000e-01 : f32
    %952 = vector.broadcast %cst_110 : f32 to vector<8x128xf32>
    %953 = arith.mulf %951, %952 : vector<8x128xf32>
    %954 = arith.subf %909, %953 : vector<8x128xf32>
    %955 = arith.subf %922, %953 : vector<8x128xf32>
    %956 = arith.subf %935, %953 : vector<8x128xf32>
    %957 = arith.subf %948, %953 : vector<8x128xf32>
    %958 = arith.mulf %954, %954 : vector<8x128xf32>
    %959 = arith.mulf %955, %955 : vector<8x128xf32>
    %960 = arith.addf %958, %959 : vector<8x128xf32>
    %961 = arith.mulf %956, %956 : vector<8x128xf32>
    %962 = arith.addf %960, %961 : vector<8x128xf32>
    %963 = arith.mulf %957, %957 : vector<8x128xf32>
    %964 = arith.addf %962, %963 : vector<8x128xf32>
    %cst_111 = arith.constant 2.500000e-01 : f32
    %965 = vector.broadcast %cst_111 : f32 to vector<8x128xf32>
    %966 = arith.mulf %964, %965 : vector<8x128xf32>
    %cst_112 = arith.constant 9.99999974E-6 : f32
    %967 = vector.broadcast %cst_112 : f32 to vector<8x128xf32>
    %968 = arith.addf %966, %967 : vector<8x128xf32>
    %969 = math.rsqrt %968 : vector<8x128xf32>
    %970 = arith.mulf %954, %969 : vector<8x128xf32>
    %c152 = arith.constant 152 : index
    %971 = memref.load %arg1[%c152] : memref<160xf32, #tpu.memory_space<smem>>
    %972 = vector.broadcast %971 : f32 to vector<8x128xf32>
    %973 = arith.mulf %970, %972 : vector<8x128xf32>
    %c156 = arith.constant 156 : index
    %974 = memref.load %arg1[%c156] : memref<160xf32, #tpu.memory_space<smem>>
    %975 = vector.broadcast %974 : f32 to vector<8x128xf32>
    %976 = arith.addf %973, %975 : vector<8x128xf32>
    %977 = arith.mulf %955, %969 : vector<8x128xf32>
    %c153 = arith.constant 153 : index
    %978 = memref.load %arg1[%c153] : memref<160xf32, #tpu.memory_space<smem>>
    %979 = vector.broadcast %978 : f32 to vector<8x128xf32>
    %980 = arith.mulf %977, %979 : vector<8x128xf32>
    %c157 = arith.constant 157 : index
    %981 = memref.load %arg1[%c157] : memref<160xf32, #tpu.memory_space<smem>>
    %982 = vector.broadcast %981 : f32 to vector<8x128xf32>
    %983 = arith.addf %980, %982 : vector<8x128xf32>
    %984 = arith.mulf %956, %969 : vector<8x128xf32>
    %c154 = arith.constant 154 : index
    %985 = memref.load %arg1[%c154] : memref<160xf32, #tpu.memory_space<smem>>
    %986 = vector.broadcast %985 : f32 to vector<8x128xf32>
    %987 = arith.mulf %984, %986 : vector<8x128xf32>
    %c158 = arith.constant 158 : index
    %988 = memref.load %arg1[%c158] : memref<160xf32, #tpu.memory_space<smem>>
    %989 = vector.broadcast %988 : f32 to vector<8x128xf32>
    %990 = arith.addf %987, %989 : vector<8x128xf32>
    %991 = arith.mulf %957, %969 : vector<8x128xf32>
    %c155 = arith.constant 155 : index
    %992 = memref.load %arg1[%c155] : memref<160xf32, #tpu.memory_space<smem>>
    %993 = vector.broadcast %992 : f32 to vector<8x128xf32>
    %994 = arith.mulf %991, %993 : vector<8x128xf32>
    %c159 = arith.constant 159 : index
    %995 = memref.load %arg1[%c159] : memref<160xf32, #tpu.memory_space<smem>>
    %996 = vector.broadcast %995 : f32 to vector<8x128xf32>
    %997 = arith.addf %994, %996 : vector<8x128xf32>
    %998 = arith.truncf %142 : vector<8x128xf32> to vector<8x128xbf16>
    %c0_113 = arith.constant 0 : index
    %c0_114 = arith.constant 0 : index
    %c0_115 = arith.constant 0 : index
    %999 = vector.load %arg3[%c0_113, %c0_114, %c0_115] : memref<16x8x128xbf16, #tpu.memory_space<vmem>>, vector<1x8x128xbf16>
    %1000 = vector.shape_cast %999 : vector<1x8x128xbf16> to vector<8x128xbf16>
    %1001 = vector.shape_cast %998 : vector<8x128xbf16> to vector<1x8x128xbf16>
    tpu.vector_store %arg3[%c0_113, %c0_114, %c0_115], %1001 {strides = array<i32>} : memref<16x8x128xbf16, #tpu.memory_space<vmem>>, vector<1x8x128xbf16>,
    %1002 = arith.truncf %155 : vector<8x128xf32> to vector<8x128xbf16>
    %c1_116 = arith.constant 1 : index
    %c0_117 = arith.constant 0 : index
    %c0_118 = arith.constant 0 : index
    %1003 = vector.load %arg3[%c1_116, %c0_117, %c0_118] : memref<16x8x128xbf16, #tpu.memory_space<vmem>>, vector<1x8x128xbf16>
    %1004 = vector.shape_cast %1003 : vector<1x8x128xbf16> to vector<8x128xbf16>
    %1005 = vector.shape_cast %1002 : vector<8x128xbf16> to vector<1x8x128xbf16>
    tpu.vector_store %arg3[%c1_116, %c0_117, %c0_118], %1005 {strides = array<i32>} : memref<16x8x128xbf16, #tpu.memory_space<vmem>>, vector<1x8x128xbf16>,
    %1006 = arith.truncf %168 : vector<8x128xf32> to vector<8x128xbf16>
    %c2_119 = arith.constant 2 : index
    %c0_120 = arith.constant 0 : index
    %c0_121 = arith.constant 0 : index
    %1007 = vector.load %arg3[%c2_119, %c0_120, %c0_121] : memref<16x8x128xbf16, #tpu.memory_space<vmem>>, vector<1x8x128xbf16>
    %1008 = vector.shape_cast %1007 : vector<1x8x128xbf16> to vector<8x128xbf16>
    %1009 = vector.shape_cast %1006 : vector<8x128xbf16> to vector<1x8x128xbf16>
    tpu.vector_store %arg3[%c2_119, %c0_120, %c0_121], %1009 {strides = array<i32>} : memref<16x8x128xbf16, #tpu.memory_space<vmem>>, vector<1x8x128xbf16>,
    %1010 = arith.truncf %181 : vector<8x128xf32> to vector<8x128xbf16>
    %c3_122 = arith.constant 3 : index
    %c0_123 = arith.constant 0 : index
    %c0_124 = arith.constant 0 : index
    %1011 = vector.load %arg3[%c3_122, %c0_123, %c0_124] : memref<16x8x128xbf16, #tpu.memory_space<vmem>>, vector<1x8x128xbf16>
    %1012 = vector.shape_cast %1011 : vector<1x8x128xbf16> to vector<8x128xbf16>
    %1013 = vector.shape_cast %1010 : vector<8x128xbf16> to vector<1x8x128xbf16>
    tpu.vector_store %arg3[%c3_122, %c0_123, %c0_124], %1013 {strides = array<i32>} : memref<16x8x128xbf16, #tpu.memory_space<vmem>>, vector<1x8x128xbf16>,
    %1014 = arith.truncf %266 : vector<8x128xf32> to vector<8x128xbf16>
    %c4_125 = arith.constant 4 : index
    %c0_126 = arith.constant 0 : index
    %c0_127 = arith.constant 0 : index
    %1015 = vector.load %arg3[%c4_125, %c0_126, %c0_127] : memref<16x8x128xbf16, #tpu.memory_space<vmem>>, vector<1x8x128xbf16>
    %1016 = vector.shape_cast %1015 : vector<1x8x128xbf16> to vector<8x128xbf16>
    %1017 = vector.shape_cast %1014 : vector<8x128xbf16> to vector<1x8x128xbf16>
    tpu.vector_store %arg3[%c4_125, %c0_126, %c0_127], %1017 {strides = array<i32>} : memref<16x8x128xbf16, #tpu.memory_space<vmem>>, vector<1x8x128xbf16>,
    %1018 = arith.truncf %279 : vector<8x128xf32> to vector<8x128xbf16>
    %c5_128 = arith.constant 5 : index
    %c0_129 = arith.constant 0 : index
    %c0_130 = arith.constant 0 : index
    %1019 = vector.load %arg3[%c5_128, %c0_129, %c0_130] : memref<16x8x128xbf16, #tpu.memory_space<vmem>>, vector<1x8x128xbf16>
    %1020 = vector.shape_cast %1019 : vector<1x8x128xbf16> to vector<8x128xbf16>
    %1021 = vector.shape_cast %1018 : vector<8x128xbf16> to vector<1x8x128xbf16>
    tpu.vector_store %arg3[%c5_128, %c0_129, %c0_130], %1021 {strides = array<i32>} : memref<16x8x128xbf16, #tpu.memory_space<vmem>>, vector<1x8x128xbf16>,
    %1022 = arith.truncf %292 : vector<8x128xf32> to vector<8x128xbf16>
    %c6_131 = arith.constant 6 : index
    %c0_132 = arith.constant 0 : index
    %c0_133 = arith.constant 0 : index
    %1023 = vector.load %arg3[%c6_131, %c0_132, %c0_133] : memref<16x8x128xbf16, #tpu.memory_space<vmem>>, vector<1x8x128xbf16>
    %1024 = vector.shape_cast %1023 : vector<1x8x128xbf16> to vector<8x128xbf16>
    %1025 = vector.shape_cast %1022 : vector<8x128xbf16> to vector<1x8x128xbf16>
    tpu.vector_store %arg3[%c6_131, %c0_132, %c0_133], %1025 {strides = array<i32>} : memref<16x8x128xbf16, #tpu.memory_space<vmem>>, vector<1x8x128xbf16>,
    %1026 = arith.truncf %305 : vector<8x128xf32> to vector<8x128xbf16>
    %c7_134 = arith.constant 7 : index
    %c0_135 = arith.constant 0 : index
    %c0_136 = arith.constant 0 : index
    %1027 = vector.load %arg3[%c7_134, %c0_135, %c0_136] : memref<16x8x128xbf16, #tpu.memory_space<vmem>>, vector<1x8x128xbf16>
    %1028 = vector.shape_cast %1027 : vector<1x8x128xbf16> to vector<8x128xbf16>
    %1029 = vector.shape_cast %1026 : vector<8x128xbf16> to vector<1x8x128xbf16>
    tpu.vector_store %arg3[%c7_134, %c0_135, %c0_136], %1029 {strides = array<i32>} : memref<16x8x128xbf16, #tpu.memory_space<vmem>>, vector<1x8x128xbf16>,
    %1030 = arith.truncf %439 : vector<8x128xf32> to vector<8x128xbf16>
    %c8_137 = arith.constant 8 : index
    %c0_138 = arith.constant 0 : index
    %c0_139 = arith.constant 0 : index
    %1031 = vector.load %arg3[%c8_137, %c0_138, %c0_139] : memref<16x8x128xbf16, #tpu.memory_space<vmem>>, vector<1x8x128xbf16>
    %1032 = vector.shape_cast %1031 : vector<1x8x128xbf16> to vector<8x128xbf16>
    %1033 = vector.shape_cast %1030 : vector<8x128xbf16> to vector<1x8x128xbf16>
    tpu.vector_store %arg3[%c8_137, %c0_138, %c0_139], %1033 {strides = array<i32>} : memref<16x8x128xbf16, #tpu.memory_space<vmem>>, vector<1x8x128xbf16>,
    %1034 = arith.truncf %452 : vector<8x128xf32> to vector<8x128xbf16>
    %c9_140 = arith.constant 9 : index
    %c0_141 = arith.constant 0 : index
    %c0_142 = arith.constant 0 : index
    %1035 = vector.load %arg3[%c9_140, %c0_141, %c0_142] : memref<16x8x128xbf16, #tpu.memory_space<vmem>>, vector<1x8x128xbf16>
    %1036 = vector.shape_cast %1035 : vector<1x8x128xbf16> to vector<8x128xbf16>
    %1037 = vector.shape_cast %1034 : vector<8x128xbf16> to vector<1x8x128xbf16>
    tpu.vector_store %arg3[%c9_140, %c0_141, %c0_142], %1037 {strides = array<i32>} : memref<16x8x128xbf16, #tpu.memory_space<vmem>>, vector<1x8x128xbf16>,
    %1038 = arith.truncf %465 : vector<8x128xf32> to vector<8x128xbf16>
    %c10_143 = arith.constant 10 : index
    %c0_144 = arith.constant 0 : index
    %c0_145 = arith.constant 0 : index
    %1039 = vector.load %arg3[%c10_143, %c0_144, %c0_145] : memref<16x8x128xbf16, #tpu.memory_space<vmem>>, vector<1x8x128xbf16>
    %1040 = vector.shape_cast %1039 : vector<1x8x128xbf16> to vector<8x128xbf16>
    %1041 = vector.shape_cast %1038 : vector<8x128xbf16> to vector<1x8x128xbf16>
    tpu.vector_store %arg3[%c10_143, %c0_144, %c0_145], %1041 {strides = array<i32>} : memref<16x8x128xbf16, #tpu.memory_space<vmem>>, vector<1x8x128xbf16>,
    %1042 = arith.truncf %478 : vector<8x128xf32> to vector<8x128xbf16>
    %c11_146 = arith.constant 11 : index
    %c0_147 = arith.constant 0 : index
    %c0_148 = arith.constant 0 : index
    %1043 = vector.load %arg3[%c11_146, %c0_147, %c0_148] : memref<16x8x128xbf16, #tpu.memory_space<vmem>>, vector<1x8x128xbf16>
    %1044 = vector.shape_cast %1043 : vector<1x8x128xbf16> to vector<8x128xbf16>
    %1045 = vector.shape_cast %1042 : vector<8x128xbf16> to vector<1x8x128xbf16>
    tpu.vector_store %arg3[%c11_146, %c0_147, %c0_148], %1045 {strides = array<i32>} : memref<16x8x128xbf16, #tpu.memory_space<vmem>>, vector<1x8x128xbf16>,
    %1046 = arith.truncf %785 : vector<8x128xf32> to vector<8x128xbf16>
    %c12_149 = arith.constant 12 : index
    %c0_150 = arith.constant 0 : index
    %c0_151 = arith.constant 0 : index
    %1047 = vector.load %arg3[%c12_149, %c0_150, %c0_151] : memref<16x8x128xbf16, #tpu.memory_space<vmem>>, vector<1x8x128xbf16>
    %1048 = vector.shape_cast %1047 : vector<1x8x128xbf16> to vector<8x128xbf16>
    %1049 = vector.shape_cast %1046 : vector<8x128xbf16> to vector<1x8x128xbf16>
    tpu.vector_store %arg3[%c12_149, %c0_150, %c0_151], %1049 {strides = array<i32>} : memref<16x8x128xbf16, #tpu.memory_space<vmem>>, vector<1x8x128xbf16>,
    %1050 = arith.truncf %798 : vector<8x128xf32> to vector<8x128xbf16>
    %c13_152 = arith.constant 13 : index
    %c0_153 = arith.constant 0 : index
    %c0_154 = arith.constant 0 : index
    %1051 = vector.load %arg3[%c13_152, %c0_153, %c0_154] : memref<16x8x128xbf16, #tpu.memory_space<vmem>>, vector<1x8x128xbf16>
    %1052 = vector.shape_cast %1051 : vector<1x8x128xbf16> to vector<8x128xbf16>
    %1053 = vector.shape_cast %1050 : vector<8x128xbf16> to vector<1x8x128xbf16>
    tpu.vector_store %arg3[%c13_152, %c0_153, %c0_154], %1053 {strides = array<i32>} : memref<16x8x128xbf16, #tpu.memory_space<vmem>>, vector<1x8x128xbf16>,
    %1054 = arith.truncf %811 : vector<8x128xf32> to vector<8x128xbf16>
    %c14_155 = arith.constant 14 : index
    %c0_156 = arith.constant 0 : index
    %c0_157 = arith.constant 0 : index
    %1055 = vector.load %arg3[%c14_155, %c0_156, %c0_157] : memref<16x8x128xbf16, #tpu.memory_space<vmem>>, vector<1x8x128xbf16>
    %1056 = vector.shape_cast %1055 : vector<1x8x128xbf16> to vector<8x128xbf16>
    %1057 = vector.shape_cast %1054 : vector<8x128xbf16> to vector<1x8x128xbf16>
    tpu.vector_store %arg3[%c14_155, %c0_156, %c0_157], %1057 {strides = array<i32>} : memref<16x8x128xbf16, #tpu.memory_space<vmem>>, vector<1x8x128xbf16>,
    %1058 = arith.truncf %824 : vector<8x128xf32> to vector<8x128xbf16>
    %c15_158 = arith.constant 15 : index
    %c0_159 = arith.constant 0 : index
    %c0_160 = arith.constant 0 : index
    %1059 = vector.load %arg3[%c15_158, %c0_159, %c0_160] : memref<16x8x128xbf16, #tpu.memory_space<vmem>>, vector<1x8x128xbf16>
    %1060 = vector.shape_cast %1059 : vector<1x8x128xbf16> to vector<8x128xbf16>
    %1061 = vector.shape_cast %1058 : vector<8x128xbf16> to vector<1x8x128xbf16>
    tpu.vector_store %arg3[%c15_158, %c0_159, %c0_160], %1061 {strides = array<i32>} : memref<16x8x128xbf16, #tpu.memory_space<vmem>>, vector<1x8x128xbf16>,
    %1062 = arith.truncf %630 : vector<8x128xf32> to vector<8x128xbf16>
    %c0_161 = arith.constant 0 : index
    %c0_162 = arith.constant 0 : index
    %c0_163 = arith.constant 0 : index
    %1063 = vector.load %arg4[%c0_161, %c0_162, %c0_163] : memref<4x8x128xbf16, #tpu.memory_space<vmem>>, vector<1x8x128xbf16>
    %1064 = vector.shape_cast %1063 : vector<1x8x128xbf16> to vector<8x128xbf16>
    %1065 = vector.shape_cast %1062 : vector<8x128xbf16> to vector<1x8x128xbf16>
    tpu.vector_store %arg4[%c0_161, %c0_162, %c0_163], %1065 {strides = array<i32>} : memref<4x8x128xbf16, #tpu.memory_space<vmem>>, vector<1x8x128xbf16>,
    %1066 = arith.truncf %976 : vector<8x128xf32> to vector<8x128xbf16>
    %c0_164 = arith.constant 0 : index
    %c0_165 = arith.constant 0 : index
    %c0_166 = arith.constant 0 : index
    %1067 = vector.load %arg5[%c0_164, %c0_165, %c0_166] : memref<4x8x128xbf16, #tpu.memory_space<vmem>>, vector<1x8x128xbf16>
    %1068 = vector.shape_cast %1067 : vector<1x8x128xbf16> to vector<8x128xbf16>
    %1069 = vector.shape_cast %1066 : vector<8x128xbf16> to vector<1x8x128xbf16>
    tpu.vector_store %arg5[%c0_164, %c0_165, %c0_166], %1069 {strides = array<i32>} : memref<4x8x128xbf16, #tpu.memory_space<vmem>>, vector<1x8x128xbf16>,
    %1070 = arith.truncf %637 : vector<8x128xf32> to vector<8x128xbf16>
    %c1_167 = arith.constant 1 : index
    %c0_168 = arith.constant 0 : index
    %c0_169 = arith.constant 0 : index
    %1071 = vector.load %arg4[%c1_167, %c0_168, %c0_169] : memref<4x8x128xbf16, #tpu.memory_space<vmem>>, vector<1x8x128xbf16>
    %1072 = vector.shape_cast %1071 : vector<1x8x128xbf16> to vector<8x128xbf16>
    %1073 = vector.shape_cast %1070 : vector<8x128xbf16> to vector<1x8x128xbf16>
    tpu.vector_store %arg4[%c1_167, %c0_168, %c0_169], %1073 {strides = array<i32>} : memref<4x8x128xbf16, #tpu.memory_space<vmem>>, vector<1x8x128xbf16>,
    %1074 = arith.truncf %983 : vector<8x128xf32> to vector<8x128xbf16>
    %c1_170 = arith.constant 1 : index
    %c0_171 = arith.constant 0 : index
    %c0_172 = arith.constant 0 : index
    %1075 = vector.load %arg5[%c1_170, %c0_171, %c0_172] : memref<4x8x128xbf16, #tpu.memory_space<vmem>>, vector<1x8x128xbf16>
    %1076 = vector.shape_cast %1075 : vector<1x8x128xbf16> to vector<8x128xbf16>
    %1077 = vector.shape_cast %1074 : vector<8x128xbf16> to vector<1x8x128xbf16>
    tpu.vector_store %arg5[%c1_170, %c0_171, %c0_172], %1077 {strides = array<i32>} : memref<4x8x128xbf16, #tpu.memory_space<vmem>>, vector<1x8x128xbf16>,
    %1078 = arith.truncf %644 : vector<8x128xf32> to vector<8x128xbf16>
    %c2_173 = arith.constant 2 : index
    %c0_174 = arith.constant 0 : index
    %c0_175 = arith.constant 0 : index
    %1079 = vector.load %arg4[%c2_173, %c0_174, %c0_175] : memref<4x8x128xbf16, #tpu.memory_space<vmem>>, vector<1x8x128xbf16>
    %1080 = vector.shape_cast %1079 : vector<1x8x128xbf16> to vector<8x128xbf16>
    %1081 = vector.shape_cast %1078 : vector<8x128xbf16> to vector<1x8x128xbf16>
    tpu.vector_store %arg4[%c2_173, %c0_174, %c0_175], %1081 {strides = array<i32>} : memref<4x8x128xbf16, #tpu.memory_space<vmem>>, vector<1x8x128xbf16>,
    %1082 = arith.truncf %990 : vector<8x128xf32> to vector<8x128xbf16>
    %c2_176 = arith.constant 2 : index
    %c0_177 = arith.constant 0 : index
    %c0_178 = arith.constant 0 : index
    %1083 = vector.load %arg5[%c2_176, %c0_177, %c0_178] : memref<4x8x128xbf16, #tpu.memory_space<vmem>>, vector<1x8x128xbf16>
    %1084 = vector.shape_cast %1083 : vector<1x8x128xbf16> to vector<8x128xbf16>
    %1085 = vector.shape_cast %1082 : vector<8x128xbf16> to vector<1x8x128xbf16>
    tpu.vector_store %arg5[%c2_176, %c0_177, %c0_178], %1085 {strides = array<i32>} : memref<4x8x128xbf16, #tpu.memory_space<vmem>>, vector<1x8x128xbf16>,
    %1086 = arith.truncf %651 : vector<8x128xf32> to vector<8x128xbf16>
    %c3_179 = arith.constant 3 : index
    %c0_180 = arith.constant 0 : index
    %c0_181 = arith.constant 0 : index
    %1087 = vector.load %arg4[%c3_179, %c0_180, %c0_181] : memref<4x8x128xbf16, #tpu.memory_space<vmem>>, vector<1x8x128xbf16>
    %1088 = vector.shape_cast %1087 : vector<1x8x128xbf16> to vector<8x128xbf16>
    %1089 = vector.shape_cast %1086 : vector<8x128xbf16> to vector<1x8x128xbf16>
    tpu.vector_store %arg4[%c3_179, %c0_180, %c0_181], %1089 {strides = array<i32>} : memref<4x8x128xbf16, #tpu.memory_space<vmem>>, vector<1x8x128xbf16>,
    %1090 = arith.truncf %997 : vector<8x128xf32> to vector<8x128xbf16>
    %c3_182 = arith.constant 3 : index
    %c0_183 = arith.constant 0 : index
    %c0_184 = arith.constant 0 : index
    %1091 = vector.load %arg5[%c3_182, %c0_183, %c0_184] : memref<4x8x128xbf16, #tpu.memory_space<vmem>>, vector<1x8x128xbf16>
    %1092 = vector.shape_cast %1091 : vector<1x8x128xbf16> to vector<8x128xbf16>
    %1093 = vector.shape_cast %1090 : vector<8x128xbf16> to vector<1x8x128xbf16>
    tpu.vector_store %arg5[%c3_182, %c0_183, %c0_184], %1093 {strides = array<i32>} : memref<4x8x128xbf16, #tpu.memory_space<vmem>>, vector<1x8x128xbf16>,
    return
  }
  func.func @transform_0(%arg0: i32) -> i32 {
    %c0_i32 = arith.constant 0 : i32
    %c0_i32_0 = arith.constant 0 : i32
    return %c0_i32 : i32
  }
  func.func @transform_1(%arg0: i32) -> (i32, i32, i32) {
    %c0_i32 = arith.constant 0 : i32
    %c0_i32_0 = arith.constant 0 : i32
    %c0_i32_1 = arith.constant 0 : i32
    return %c0_i32, %c0_i32_0, %arg0 : i32, i32, i32
  }
  func.func @transform_2(%arg0: i32) -> (i32, i32, i32) {
    %c0_i32 = arith.constant 0 : i32
    %c0_i32_0 = arith.constant 0 : i32
    %c0_i32_1 = arith.constant 0 : i32
    return %c0_i32, %c0_i32_0, %arg0 : i32, i32, i32
  }
  func.func @transform_3(%arg0: i32) -> (i32, i32, i32) {
    %c0_i32 = arith.constant 0 : i32
    %c0_i32_0 = arith.constant 0 : i32
    %c0_i32_1 = arith.constant 0 : i32
    return %c0_i32, %c0_i32_0, %arg0 : i32, i32, i32
  }
  func.func @transform_4(%arg0: i32) -> (i32, i32, i32) {
    %c0_i32 = arith.constant 0 : i32
    %c0_i32_0 = arith.constant 0 : i32
    %c0_i32_1 = arith.constant 0 : i32
    return %c0_i32, %c0_i32_0, %arg0 : i32, i32, i32
  }
}

module attributes {stable_mosaic.version = 11 : i64} {
  func.func @_mix_kernel(%arg0: i32, %arg1: memref<8x512xbf16, #tpu.memory_space<vmem>>, %arg2: memref<8x8xbf16, #tpu.memory_space<vmem>>, %arg3: memref<8x1xf32, #tpu.memory_space<vmem>>, %arg4: memref<8x512xbf16, #tpu.memory_space<vmem>>) attributes {dimension_semantics = [#tpu.dimension_semantics<parallel>], iteration_bounds = array<i64: 1>, scalar_prefetch = 0 : i64, scratch_operands = 0 : i64, tpu.core_type = #tpu.core_type<tc>, window_params = [{transform_indices = @transform_0, window_bounds = array<i64: 8, 512>}, {pipeline_mode = #tpu.pipeline_mode<synchronous>, transform_indices = @transform_1, window_bounds = array<i64: 8, 8>}, {pipeline_mode = #tpu.pipeline_mode<synchronous>, transform_indices = @transform_2, window_bounds = array<i64: 8, 1>}, {transform_indices = @transform_3, window_bounds = array<i64: 8, 512>}]} {
    %c0 = arith.constant 0 : index
    %c0_0 = arith.constant 0 : index
    %0 = vector.load %arg2[%c0, %c0_0] : memref<8x8xbf16, #tpu.memory_space<vmem>>, vector<8x8xbf16>
    %c0_1 = arith.constant 0 : index
    %c0_2 = arith.constant 0 : index
    %1 = vector.load %arg1[%c0_1, %c0_2] : memref<8x512xbf16, #tpu.memory_space<vmem>>, vector<8x512xbf16>
    %cst = arith.constant dense<0.000000e+00> : vector<8x512xf32>
    %2 = tpu.matmul %0, %1, %cst {dimension_numbers = #tpu.dot_dimension_numbers<[1], [0], [0], [1], [0, 0, 1, 1], [], []>} : vector<8x8xbf16>, vector<8x512xbf16>, vector<8x512xf32> -> vector<8x512xf32>
    %c0_3 = arith.constant 0 : index
    %c0_4 = arith.constant 0 : index
    %3 = vector.load %arg3[%c0_3, %c0_4] : memref<8x1xf32, #tpu.memory_space<vmem>>, vector<8x1xf32>
    %4 = vector.broadcast %3 : vector<8x1xf32> to vector<8x512xf32>
    %5 = arith.addf %2, %4 : vector<8x512xf32>
    %6 = arith.truncf %5 : vector<8x512xf32> to vector<8x512xbf16>
    %c0_5 = arith.constant 0 : index
    %c0_6 = arith.constant 0 : index
    %7 = vector.load %arg4[%c0_5, %c0_6] : memref<8x512xbf16, #tpu.memory_space<vmem>>, vector<8x512xbf16>
    tpu.vector_store %arg4[%c0_5, %c0_6], %6 {strides = array<i32>} : memref<8x512xbf16, #tpu.memory_space<vmem>>, vector<8x512xbf16>,
    return
  }
  func.func @transform_0(%arg0: i32) -> (i32, i32) {
    %c0_i32 = arith.constant 0 : i32
    %c0_i32_0 = arith.constant 0 : i32
    return %c0_i32, %arg0 : i32, i32
  }
  func.func @transform_1(%arg0: i32) -> (i32, i32) {
    %c0_i32 = arith.constant 0 : i32
    %c0_i32_0 = arith.constant 0 : i32
    %c0_i32_1 = arith.constant 0 : i32
    return %c0_i32, %c0_i32_0 : i32, i32
  }
  func.func @transform_2(%arg0: i32) -> (i32, i32) {
    %c0_i32 = arith.constant 0 : i32
    %c0_i32_0 = arith.constant 0 : i32
    %c0_i32_1 = arith.constant 0 : i32
    return %c0_i32, %c0_i32_0 : i32, i32
  }
  func.func @transform_3(%arg0: i32) -> (i32, i32) {
    %c0_i32 = arith.constant 0 : i32
    %c0_i32_0 = arith.constant 0 : i32
    return %c0_i32, %arg0 : i32, i32
  }
}

module attributes {stable_mosaic.version = 11 : i64} {
  func.func @_post_kernel(%arg0: i32, %arg1: memref<76xf32, #tpu.memory_space<smem>>, %arg2: memref<16x8x128xbf16, #tpu.memory_space<vmem>>, %arg3: memref<4x8x128xbf16, #tpu.memory_space<vmem>>, %arg4: memref<4x8x128xbf16, #tpu.memory_space<vmem>>, %arg5: memref<4x8x128xf32, #tpu.memory_space<vmem>>, %arg6: memref<4x8x128xf32, #tpu.memory_space<vmem>>) attributes {dimension_semantics = [#tpu.dimension_semantics<parallel>], iteration_bounds = array<i64: 1>, scalar_prefetch = 0 : i64, scratch_operands = 0 : i64, tpu.core_type = #tpu.core_type<tc>, window_params = [{transform_indices = @transform_0, window_bounds = array<i64: 76>}, {transform_indices = @transform_1, window_bounds = array<i64: 16, 8, 128>}, {transform_indices = @transform_2, window_bounds = array<i64: 4, 8, 128>}, {transform_indices = @transform_3, window_bounds = array<i64: 4, 8, 128>}, {transform_indices = @transform_4, window_bounds = array<i64: 4, 8, 128>}, {transform_indices = @transform_5, window_bounds = array<i64: 4, 8, 128>}]} {
    %c0 = arith.constant 0 : index
    %c0_0 = arith.constant 0 : index
    %c0_1 = arith.constant 0 : index
    %0 = vector.load %arg2[%c0, %c0_0, %c0_1] : memref<16x8x128xbf16, #tpu.memory_space<vmem>>, vector<16x8x128xbf16>
    %1 = arith.extf %0 : vector<16x8x128xbf16> to vector<16x8x128xf32>
    %2 = vector.extract_strided_slice %1 {offsets = [0, 0, 0], sizes = [1, 8, 128], strides = [1, 1, 1]} : vector<16x8x128xf32> to vector<1x8x128xf32>
    %3 = vector.shape_cast %2 : vector<1x8x128xf32> to vector<8x128xf32>
    %4 = vector.extract_strided_slice %1 {offsets = [1, 0, 0], sizes = [1, 8, 128], strides = [1, 1, 1]} : vector<16x8x128xf32> to vector<1x8x128xf32>
    %5 = vector.shape_cast %4 : vector<1x8x128xf32> to vector<8x128xf32>
    %6 = vector.extract_strided_slice %1 {offsets = [2, 0, 0], sizes = [1, 8, 128], strides = [1, 1, 1]} : vector<16x8x128xf32> to vector<1x8x128xf32>
    %7 = vector.shape_cast %6 : vector<1x8x128xf32> to vector<8x128xf32>
    %8 = vector.extract_strided_slice %1 {offsets = [3, 0, 0], sizes = [1, 8, 128], strides = [1, 1, 1]} : vector<16x8x128xf32> to vector<1x8x128xf32>
    %9 = vector.shape_cast %8 : vector<1x8x128xf32> to vector<8x128xf32>
    %10 = vector.extract_strided_slice %1 {offsets = [4, 0, 0], sizes = [1, 8, 128], strides = [1, 1, 1]} : vector<16x8x128xf32> to vector<1x8x128xf32>
    %11 = vector.shape_cast %10 : vector<1x8x128xf32> to vector<8x128xf32>
    %12 = vector.extract_strided_slice %1 {offsets = [5, 0, 0], sizes = [1, 8, 128], strides = [1, 1, 1]} : vector<16x8x128xf32> to vector<1x8x128xf32>
    %13 = vector.shape_cast %12 : vector<1x8x128xf32> to vector<8x128xf32>
    %14 = vector.extract_strided_slice %1 {offsets = [6, 0, 0], sizes = [1, 8, 128], strides = [1, 1, 1]} : vector<16x8x128xf32> to vector<1x8x128xf32>
    %15 = vector.shape_cast %14 : vector<1x8x128xf32> to vector<8x128xf32>
    %16 = vector.extract_strided_slice %1 {offsets = [7, 0, 0], sizes = [1, 8, 128], strides = [1, 1, 1]} : vector<16x8x128xf32> to vector<1x8x128xf32>
    %17 = vector.shape_cast %16 : vector<1x8x128xf32> to vector<8x128xf32>
    %18 = vector.extract_strided_slice %1 {offsets = [8, 0, 0], sizes = [1, 8, 128], strides = [1, 1, 1]} : vector<16x8x128xf32> to vector<1x8x128xf32>
    %19 = vector.shape_cast %18 : vector<1x8x128xf32> to vector<8x128xf32>
    %20 = vector.extract_strided_slice %1 {offsets = [9, 0, 0], sizes = [1, 8, 128], strides = [1, 1, 1]} : vector<16x8x128xf32> to vector<1x8x128xf32>
    %21 = vector.shape_cast %20 : vector<1x8x128xf32> to vector<8x128xf32>
    %22 = vector.extract_strided_slice %1 {offsets = [10, 0, 0], sizes = [1, 8, 128], strides = [1, 1, 1]} : vector<16x8x128xf32> to vector<1x8x128xf32>
    %23 = vector.shape_cast %22 : vector<1x8x128xf32> to vector<8x128xf32>
    %24 = vector.extract_strided_slice %1 {offsets = [11, 0, 0], sizes = [1, 8, 128], strides = [1, 1, 1]} : vector<16x8x128xf32> to vector<1x8x128xf32>
    %25 = vector.shape_cast %24 : vector<1x8x128xf32> to vector<8x128xf32>
    %26 = vector.extract_strided_slice %1 {offsets = [12, 0, 0], sizes = [1, 8, 128], strides = [1, 1, 1]} : vector<16x8x128xf32> to vector<1x8x128xf32>
    %27 = vector.shape_cast %26 : vector<1x8x128xf32> to vector<8x128xf32>
    %28 = vector.extract_strided_slice %1 {offsets = [13, 0, 0], sizes = [1, 8, 128], strides = [1, 1, 1]} : vector<16x8x128xf32> to vector<1x8x128xf32>
    %29 = vector.shape_cast %28 : vector<1x8x128xf32> to vector<8x128xf32>
    %30 = vector.extract_strided_slice %1 {offsets = [14, 0, 0], sizes = [1, 8, 128], strides = [1, 1, 1]} : vector<16x8x128xf32> to vector<1x8x128xf32>
    %31 = vector.shape_cast %30 : vector<1x8x128xf32> to vector<8x128xf32>
    %32 = vector.extract_strided_slice %1 {offsets = [15, 0, 0], sizes = [1, 8, 128], strides = [1, 1, 1]} : vector<16x8x128xf32> to vector<1x8x128xf32>
    %33 = vector.shape_cast %32 : vector<1x8x128xf32> to vector<8x128xf32>
    %c0_2 = arith.constant 0 : index
    %c0_3 = arith.constant 0 : index
    %c0_4 = arith.constant 0 : index
    %34 = vector.load %arg3[%c0_2, %c0_3, %c0_4] : memref<4x8x128xbf16, #tpu.memory_space<vmem>>, vector<4x8x128xbf16>
    %35 = arith.extf %34 : vector<4x8x128xbf16> to vector<4x8x128xf32>
    %c0_5 = arith.constant 0 : index
    %c0_6 = arith.constant 0 : index
    %c0_7 = arith.constant 0 : index
    %36 = vector.load %arg4[%c0_5, %c0_6, %c0_7] : memref<4x8x128xbf16, #tpu.memory_space<vmem>>, vector<4x8x128xbf16>
    %37 = arith.extf %36 : vector<4x8x128xbf16> to vector<4x8x128xf32>
    %38 = vector.extract_strided_slice %35 {offsets = [0, 0, 0], sizes = [1, 8, 128], strides = [1, 1, 1]} : vector<4x8x128xf32> to vector<1x8x128xf32>
    %39 = vector.shape_cast %38 : vector<1x8x128xf32> to vector<8x128xf32>
    %cst = arith.constant 1.000000e+00 : f32
    %40 = vector.broadcast %cst : f32 to vector<8x128xf32>
    %41 = arith.addf %39, %40 : vector<8x128xf32>
    %42 = arith.mulf %19, %41 : vector<8x128xf32>
    %43 = vector.extract_strided_slice %35 {offsets = [1, 0, 0], sizes = [1, 8, 128], strides = [1, 1, 1]} : vector<4x8x128xf32> to vector<1x8x128xf32>
    %44 = vector.shape_cast %43 : vector<1x8x128xf32> to vector<8x128xf32>
    %cst_8 = arith.constant 1.000000e+00 : f32
    %45 = vector.broadcast %cst_8 : f32 to vector<8x128xf32>
    %46 = arith.addf %44, %45 : vector<8x128xf32>
    %47 = arith.mulf %21, %46 : vector<8x128xf32>
    %48 = vector.extract_strided_slice %35 {offsets = [2, 0, 0], sizes = [1, 8, 128], strides = [1, 1, 1]} : vector<4x8x128xf32> to vector<1x8x128xf32>
    %49 = vector.shape_cast %48 : vector<1x8x128xf32> to vector<8x128xf32>
    %cst_9 = arith.constant 1.000000e+00 : f32
    %50 = vector.broadcast %cst_9 : f32 to vector<8x128xf32>
    %51 = arith.addf %49, %50 : vector<8x128xf32>
    %52 = arith.mulf %23, %51 : vector<8x128xf32>
    %53 = vector.extract_strided_slice %35 {offsets = [3, 0, 0], sizes = [1, 8, 128], strides = [1, 1, 1]} : vector<4x8x128xf32> to vector<1x8x128xf32>
    %54 = vector.shape_cast %53 : vector<1x8x128xf32> to vector<8x128xf32>
    %cst_10 = arith.constant 1.000000e+00 : f32
    %55 = vector.broadcast %cst_10 : f32 to vector<8x128xf32>
    %56 = arith.addf %54, %55 : vector<8x128xf32>
    %57 = arith.mulf %25, %56 : vector<8x128xf32>
    %58 = vector.extract_strided_slice %37 {offsets = [0, 0, 0], sizes = [1, 8, 128], strides = [1, 1, 1]} : vector<4x8x128xf32> to vector<1x8x128xf32>
    %59 = vector.shape_cast %58 : vector<1x8x128xf32> to vector<8x128xf32>
    %cst_11 = arith.constant 1.000000e+00 : f32
    %60 = vector.broadcast %cst_11 : f32 to vector<8x128xf32>
    %61 = arith.addf %59, %60 : vector<8x128xf32>
    %62 = arith.mulf %27, %61 : vector<8x128xf32>
    %63 = vector.extract_strided_slice %37 {offsets = [1, 0, 0], sizes = [1, 8, 128], strides = [1, 1, 1]} : vector<4x8x128xf32> to vector<1x8x128xf32>
    %64 = vector.shape_cast %63 : vector<1x8x128xf32> to vector<8x128xf32>
    %cst_12 = arith.constant 1.000000e+00 : f32
    %65 = vector.broadcast %cst_12 : f32 to vector<8x128xf32>
    %66 = arith.addf %64, %65 : vector<8x128xf32>
    %67 = arith.mulf %29, %66 : vector<8x128xf32>
    %68 = vector.extract_strided_slice %37 {offsets = [2, 0, 0], sizes = [1, 8, 128], strides = [1, 1, 1]} : vector<4x8x128xf32> to vector<1x8x128xf32>
    %69 = vector.shape_cast %68 : vector<1x8x128xf32> to vector<8x128xf32>
    %cst_13 = arith.constant 1.000000e+00 : f32
    %70 = vector.broadcast %cst_13 : f32 to vector<8x128xf32>
    %71 = arith.addf %69, %70 : vector<8x128xf32>
    %72 = arith.mulf %31, %71 : vector<8x128xf32>
    %73 = vector.extract_strided_slice %37 {offsets = [3, 0, 0], sizes = [1, 8, 128], strides = [1, 1, 1]} : vector<4x8x128xf32> to vector<1x8x128xf32>
    %74 = vector.shape_cast %73 : vector<1x8x128xf32> to vector<8x128xf32>
    %cst_14 = arith.constant 1.000000e+00 : f32
    %75 = vector.broadcast %cst_14 : f32 to vector<8x128xf32>
    %76 = arith.addf %74, %75 : vector<8x128xf32>
    %77 = arith.mulf %33, %76 : vector<8x128xf32>
    %c0_15 = arith.constant 0 : index
    %78 = memref.load %arg1[%c0_15] : memref<76xf32, #tpu.memory_space<smem>>
    %79 = vector.broadcast %78 : f32 to vector<8x128xf32>
    %80 = arith.mulf %42, %79 : vector<8x128xf32>
    %c4 = arith.constant 4 : index
    %81 = memref.load %arg1[%c4] : memref<76xf32, #tpu.memory_space<smem>>
    %82 = vector.broadcast %81 : f32 to vector<8x128xf32>
    %83 = arith.mulf %47, %82 : vector<8x128xf32>
    %84 = arith.addf %80, %83 : vector<8x128xf32>
    %c8 = arith.constant 8 : index
    %85 = memref.load %arg1[%c8] : memref<76xf32, #tpu.memory_space<smem>>
    %86 = vector.broadcast %85 : f32 to vector<8x128xf32>
    %87 = arith.mulf %52, %86 : vector<8x128xf32>
    %88 = arith.addf %84, %87 : vector<8x128xf32>
    %c12 = arith.constant 12 : index
    %89 = memref.load %arg1[%c12] : memref<76xf32, #tpu.memory_space<smem>>
    %90 = vector.broadcast %89 : f32 to vector<8x128xf32>
    %91 = arith.mulf %57, %90 : vector<8x128xf32>
    %92 = arith.addf %88, %91 : vector<8x128xf32>
    %c16 = arith.constant 16 : index
    %93 = memref.load %arg1[%c16] : memref<76xf32, #tpu.memory_space<smem>>
    %94 = vector.broadcast %93 : f32 to vector<8x128xf32>
    %95 = arith.addf %92, %94 : vector<8x128xf32>
    %c1 = arith.constant 1 : index
    %96 = memref.load %arg1[%c1] : memref<76xf32, #tpu.memory_space<smem>>
    %97 = vector.broadcast %96 : f32 to vector<8x128xf32>
    %98 = arith.mulf %42, %97 : vector<8x128xf32>
    %c5 = arith.constant 5 : index
    %99 = memref.load %arg1[%c5] : memref<76xf32, #tpu.memory_space<smem>>
    %100 = vector.broadcast %99 : f32 to vector<8x128xf32>
    %101 = arith.mulf %47, %100 : vector<8x128xf32>
    %102 = arith.addf %98, %101 : vector<8x128xf32>
    %c9 = arith.constant 9 : index
    %103 = memref.load %arg1[%c9] : memref<76xf32, #tpu.memory_space<smem>>
    %104 = vector.broadcast %103 : f32 to vector<8x128xf32>
    %105 = arith.mulf %52, %104 : vector<8x128xf32>
    %106 = arith.addf %102, %105 : vector<8x128xf32>
    %c13 = arith.constant 13 : index
    %107 = memref.load %arg1[%c13] : memref<76xf32, #tpu.memory_space<smem>>
    %108 = vector.broadcast %107 : f32 to vector<8x128xf32>
    %109 = arith.mulf %57, %108 : vector<8x128xf32>
    %110 = arith.addf %106, %109 : vector<8x128xf32>
    %c17 = arith.constant 17 : index
    %111 = memref.load %arg1[%c17] : memref<76xf32, #tpu.memory_space<smem>>
    %112 = vector.broadcast %111 : f32 to vector<8x128xf32>
    %113 = arith.addf %110, %112 : vector<8x128xf32>
    %c2 = arith.constant 2 : index
    %114 = memref.load %arg1[%c2] : memref<76xf32, #tpu.memory_space<smem>>
    %115 = vector.broadcast %114 : f32 to vector<8x128xf32>
    %116 = arith.mulf %42, %115 : vector<8x128xf32>
    %c6 = arith.constant 6 : index
    %117 = memref.load %arg1[%c6] : memref<76xf32, #tpu.memory_space<smem>>
    %118 = vector.broadcast %117 : f32 to vector<8x128xf32>
    %119 = arith.mulf %47, %118 : vector<8x128xf32>
    %120 = arith.addf %116, %119 : vector<8x128xf32>
    %c10 = arith.constant 10 : index
    %121 = memref.load %arg1[%c10] : memref<76xf32, #tpu.memory_space<smem>>
    %122 = vector.broadcast %121 : f32 to vector<8x128xf32>
    %123 = arith.mulf %52, %122 : vector<8x128xf32>
    %124 = arith.addf %120, %123 : vector<8x128xf32>
    %c14 = arith.constant 14 : index
    %125 = memref.load %arg1[%c14] : memref<76xf32, #tpu.memory_space<smem>>
    %126 = vector.broadcast %125 : f32 to vector<8x128xf32>
    %127 = arith.mulf %57, %126 : vector<8x128xf32>
    %128 = arith.addf %124, %127 : vector<8x128xf32>
    %c18 = arith.constant 18 : index
    %129 = memref.load %arg1[%c18] : memref<76xf32, #tpu.memory_space<smem>>
    %130 = vector.broadcast %129 : f32 to vector<8x128xf32>
    %131 = arith.addf %128, %130 : vector<8x128xf32>
    %c3 = arith.constant 3 : index
    %132 = memref.load %arg1[%c3] : memref<76xf32, #tpu.memory_space<smem>>
    %133 = vector.broadcast %132 : f32 to vector<8x128xf32>
    %134 = arith.mulf %42, %133 : vector<8x128xf32>
    %c7 = arith.constant 7 : index
    %135 = memref.load %arg1[%c7] : memref<76xf32, #tpu.memory_space<smem>>
    %136 = vector.broadcast %135 : f32 to vector<8x128xf32>
    %137 = arith.mulf %47, %136 : vector<8x128xf32>
    %138 = arith.addf %134, %137 : vector<8x128xf32>
    %c11 = arith.constant 11 : index
    %139 = memref.load %arg1[%c11] : memref<76xf32, #tpu.memory_space<smem>>
    %140 = vector.broadcast %139 : f32 to vector<8x128xf32>
    %141 = arith.mulf %52, %140 : vector<8x128xf32>
    %142 = arith.addf %138, %141 : vector<8x128xf32>
    %c15 = arith.constant 15 : index
    %143 = memref.load %arg1[%c15] : memref<76xf32, #tpu.memory_space<smem>>
    %144 = vector.broadcast %143 : f32 to vector<8x128xf32>
    %145 = arith.mulf %57, %144 : vector<8x128xf32>
    %146 = arith.addf %142, %145 : vector<8x128xf32>
    %c19 = arith.constant 19 : index
    %147 = memref.load %arg1[%c19] : memref<76xf32, #tpu.memory_space<smem>>
    %148 = vector.broadcast %147 : f32 to vector<8x128xf32>
    %149 = arith.addf %146, %148 : vector<8x128xf32>
    %150 = arith.addf %95, %3 : vector<8x128xf32>
    %151 = arith.addf %113, %5 : vector<8x128xf32>
    %152 = arith.addf %131, %7 : vector<8x128xf32>
    %153 = arith.addf %149, %9 : vector<8x128xf32>
    %c20 = arith.constant 20 : index
    %154 = memref.load %arg1[%c20] : memref<76xf32, #tpu.memory_space<smem>>
    %155 = vector.broadcast %154 : f32 to vector<8x128xf32>
    %156 = arith.mulf %62, %155 : vector<8x128xf32>
    %c24 = arith.constant 24 : index
    %157 = memref.load %arg1[%c24] : memref<76xf32, #tpu.memory_space<smem>>
    %158 = vector.broadcast %157 : f32 to vector<8x128xf32>
    %159 = arith.mulf %67, %158 : vector<8x128xf32>
    %160 = arith.addf %156, %159 : vector<8x128xf32>
    %c28 = arith.constant 28 : index
    %161 = memref.load %arg1[%c28] : memref<76xf32, #tpu.memory_space<smem>>
    %162 = vector.broadcast %161 : f32 to vector<8x128xf32>
    %163 = arith.mulf %72, %162 : vector<8x128xf32>
    %164 = arith.addf %160, %163 : vector<8x128xf32>
    %c32 = arith.constant 32 : index
    %165 = memref.load %arg1[%c32] : memref<76xf32, #tpu.memory_space<smem>>
    %166 = vector.broadcast %165 : f32 to vector<8x128xf32>
    %167 = arith.mulf %77, %166 : vector<8x128xf32>
    %168 = arith.addf %164, %167 : vector<8x128xf32>
    %c36 = arith.constant 36 : index
    %169 = memref.load %arg1[%c36] : memref<76xf32, #tpu.memory_space<smem>>
    %170 = vector.broadcast %169 : f32 to vector<8x128xf32>
    %171 = arith.addf %168, %170 : vector<8x128xf32>
    %c21 = arith.constant 21 : index
    %172 = memref.load %arg1[%c21] : memref<76xf32, #tpu.memory_space<smem>>
    %173 = vector.broadcast %172 : f32 to vector<8x128xf32>
    %174 = arith.mulf %62, %173 : vector<8x128xf32>
    %c25 = arith.constant 25 : index
    %175 = memref.load %arg1[%c25] : memref<76xf32, #tpu.memory_space<smem>>
    %176 = vector.broadcast %175 : f32 to vector<8x128xf32>
    %177 = arith.mulf %67, %176 : vector<8x128xf32>
    %178 = arith.addf %174, %177 : vector<8x128xf32>
    %c29 = arith.constant 29 : index
    %179 = memref.load %arg1[%c29] : memref<76xf32, #tpu.memory_space<smem>>
    %180 = vector.broadcast %179 : f32 to vector<8x128xf32>
    %181 = arith.mulf %72, %180 : vector<8x128xf32>
    %182 = arith.addf %178, %181 : vector<8x128xf32>
    %c33 = arith.constant 33 : index
    %183 = memref.load %arg1[%c33] : memref<76xf32, #tpu.memory_space<smem>>
    %184 = vector.broadcast %183 : f32 to vector<8x128xf32>
    %185 = arith.mulf %77, %184 : vector<8x128xf32>
    %186 = arith.addf %182, %185 : vector<8x128xf32>
    %c37 = arith.constant 37 : index
    %187 = memref.load %arg1[%c37] : memref<76xf32, #tpu.memory_space<smem>>
    %188 = vector.broadcast %187 : f32 to vector<8x128xf32>
    %189 = arith.addf %186, %188 : vector<8x128xf32>
    %c22 = arith.constant 22 : index
    %190 = memref.load %arg1[%c22] : memref<76xf32, #tpu.memory_space<smem>>
    %191 = vector.broadcast %190 : f32 to vector<8x128xf32>
    %192 = arith.mulf %62, %191 : vector<8x128xf32>
    %c26 = arith.constant 26 : index
    %193 = memref.load %arg1[%c26] : memref<76xf32, #tpu.memory_space<smem>>
    %194 = vector.broadcast %193 : f32 to vector<8x128xf32>
    %195 = arith.mulf %67, %194 : vector<8x128xf32>
    %196 = arith.addf %192, %195 : vector<8x128xf32>
    %c30 = arith.constant 30 : index
    %197 = memref.load %arg1[%c30] : memref<76xf32, #tpu.memory_space<smem>>
    %198 = vector.broadcast %197 : f32 to vector<8x128xf32>
    %199 = arith.mulf %72, %198 : vector<8x128xf32>
    %200 = arith.addf %196, %199 : vector<8x128xf32>
    %c34 = arith.constant 34 : index
    %201 = memref.load %arg1[%c34] : memref<76xf32, #tpu.memory_space<smem>>
    %202 = vector.broadcast %201 : f32 to vector<8x128xf32>
    %203 = arith.mulf %77, %202 : vector<8x128xf32>
    %204 = arith.addf %200, %203 : vector<8x128xf32>
    %c38 = arith.constant 38 : index
    %205 = memref.load %arg1[%c38] : memref<76xf32, #tpu.memory_space<smem>>
    %206 = vector.broadcast %205 : f32 to vector<8x128xf32>
    %207 = arith.addf %204, %206 : vector<8x128xf32>
    %c23 = arith.constant 23 : index
    %208 = memref.load %arg1[%c23] : memref<76xf32, #tpu.memory_space<smem>>
    %209 = vector.broadcast %208 : f32 to vector<8x128xf32>
    %210 = arith.mulf %62, %209 : vector<8x128xf32>
    %c27 = arith.constant 27 : index
    %211 = memref.load %arg1[%c27] : memref<76xf32, #tpu.memory_space<smem>>
    %212 = vector.broadcast %211 : f32 to vector<8x128xf32>
    %213 = arith.mulf %67, %212 : vector<8x128xf32>
    %214 = arith.addf %210, %213 : vector<8x128xf32>
    %c31 = arith.constant 31 : index
    %215 = memref.load %arg1[%c31] : memref<76xf32, #tpu.memory_space<smem>>
    %216 = vector.broadcast %215 : f32 to vector<8x128xf32>
    %217 = arith.mulf %72, %216 : vector<8x128xf32>
    %218 = arith.addf %214, %217 : vector<8x128xf32>
    %c35 = arith.constant 35 : index
    %219 = memref.load %arg1[%c35] : memref<76xf32, #tpu.memory_space<smem>>
    %220 = vector.broadcast %219 : f32 to vector<8x128xf32>
    %221 = arith.mulf %77, %220 : vector<8x128xf32>
    %222 = arith.addf %218, %221 : vector<8x128xf32>
    %c39 = arith.constant 39 : index
    %223 = memref.load %arg1[%c39] : memref<76xf32, #tpu.memory_space<smem>>
    %224 = vector.broadcast %223 : f32 to vector<8x128xf32>
    %225 = arith.addf %222, %224 : vector<8x128xf32>
    %226 = arith.addf %171, %11 : vector<8x128xf32>
    %227 = arith.addf %189, %13 : vector<8x128xf32>
    %228 = arith.addf %207, %15 : vector<8x128xf32>
    %229 = arith.addf %225, %17 : vector<8x128xf32>
    %c0_16 = arith.constant 0 : index
    %c0_17 = arith.constant 0 : index
    %c0_18 = arith.constant 0 : index
    %230 = vector.load %arg5[%c0_16, %c0_17, %c0_18] : memref<4x8x128xf32, #tpu.memory_space<vmem>>, vector<4x8x128xf32>
    %c40 = arith.constant 40 : index
    %231 = memref.load %arg1[%c40] : memref<76xf32, #tpu.memory_space<smem>>
    %232 = vector.broadcast %231 : f32 to vector<8x128xf32>
    %233 = arith.mulf %150, %232 : vector<8x128xf32>
    %c44 = arith.constant 44 : index
    %234 = memref.load %arg1[%c44] : memref<76xf32, #tpu.memory_space<smem>>
    %235 = vector.broadcast %234 : f32 to vector<8x128xf32>
    %236 = arith.mulf %151, %235 : vector<8x128xf32>
    %237 = arith.addf %233, %236 : vector<8x128xf32>
    %c48 = arith.constant 48 : index
    %238 = memref.load %arg1[%c48] : memref<76xf32, #tpu.memory_space<smem>>
    %239 = vector.broadcast %238 : f32 to vector<8x128xf32>
    %240 = arith.mulf %152, %239 : vector<8x128xf32>
    %241 = arith.addf %237, %240 : vector<8x128xf32>
    %c52 = arith.constant 52 : index
    %242 = memref.load %arg1[%c52] : memref<76xf32, #tpu.memory_space<smem>>
    %243 = vector.broadcast %242 : f32 to vector<8x128xf32>
    %244 = arith.mulf %153, %243 : vector<8x128xf32>
    %245 = arith.addf %241, %244 : vector<8x128xf32>
    %c56 = arith.constant 56 : index
    %246 = memref.load %arg1[%c56] : memref<76xf32, #tpu.memory_space<smem>>
    %247 = vector.broadcast %246 : f32 to vector<8x128xf32>
    %248 = arith.mulf %226, %247 : vector<8x128xf32>
    %249 = arith.addf %245, %248 : vector<8x128xf32>
    %c60 = arith.constant 60 : index
    %250 = memref.load %arg1[%c60] : memref<76xf32, #tpu.memory_space<smem>>
    %251 = vector.broadcast %250 : f32 to vector<8x128xf32>
    %252 = arith.mulf %227, %251 : vector<8x128xf32>
    %253 = arith.addf %249, %252 : vector<8x128xf32>
    %c64 = arith.constant 64 : index
    %254 = memref.load %arg1[%c64] : memref<76xf32, #tpu.memory_space<smem>>
    %255 = vector.broadcast %254 : f32 to vector<8x128xf32>
    %256 = arith.mulf %228, %255 : vector<8x128xf32>
    %257 = arith.addf %253, %256 : vector<8x128xf32>
    %c68 = arith.constant 68 : index
    %258 = memref.load %arg1[%c68] : memref<76xf32, #tpu.memory_space<smem>>
    %259 = vector.broadcast %258 : f32 to vector<8x128xf32>
    %260 = arith.mulf %229, %259 : vector<8x128xf32>
    %261 = arith.addf %257, %260 : vector<8x128xf32>
    %c72 = arith.constant 72 : index
    %262 = memref.load %arg1[%c72] : memref<76xf32, #tpu.memory_space<smem>>
    %263 = vector.broadcast %262 : f32 to vector<8x128xf32>
    %264 = arith.addf %261, %263 : vector<8x128xf32>
    %265 = vector.extract_strided_slice %230 {offsets = [0, 0, 0], sizes = [1, 8, 128], strides = [1, 1, 1]} : vector<4x8x128xf32> to vector<1x8x128xf32>
    %266 = vector.shape_cast %265 : vector<1x8x128xf32> to vector<8x128xf32>
    %267 = arith.addf %264, %266 : vector<8x128xf32>
    %c0_19 = arith.constant 0 : index
    %c0_20 = arith.constant 0 : index
    %c0_21 = arith.constant 0 : index
    %268 = vector.load %arg6[%c0_19, %c0_20, %c0_21] : memref<4x8x128xf32, #tpu.memory_space<vmem>>, vector<1x8x128xf32>
    %269 = vector.shape_cast %268 : vector<1x8x128xf32> to vector<8x128xf32>
    %270 = vector.shape_cast %267 : vector<8x128xf32> to vector<1x8x128xf32>
    tpu.vector_store %arg6[%c0_19, %c0_20, %c0_21], %270 {strides = array<i32>} : memref<4x8x128xf32, #tpu.memory_space<vmem>>, vector<1x8x128xf32>,
    %c41 = arith.constant 41 : index
    %271 = memref.load %arg1[%c41] : memref<76xf32, #tpu.memory_space<smem>>
    %272 = vector.broadcast %271 : f32 to vector<8x128xf32>
    %273 = arith.mulf %150, %272 : vector<8x128xf32>
    %c45 = arith.constant 45 : index
    %274 = memref.load %arg1[%c45] : memref<76xf32, #tpu.memory_space<smem>>
    %275 = vector.broadcast %274 : f32 to vector<8x128xf32>
    %276 = arith.mulf %151, %275 : vector<8x128xf32>
    %277 = arith.addf %273, %276 : vector<8x128xf32>
    %c49 = arith.constant 49 : index
    %278 = memref.load %arg1[%c49] : memref<76xf32, #tpu.memory_space<smem>>
    %279 = vector.broadcast %278 : f32 to vector<8x128xf32>
    %280 = arith.mulf %152, %279 : vector<8x128xf32>
    %281 = arith.addf %277, %280 : vector<8x128xf32>
    %c53 = arith.constant 53 : index
    %282 = memref.load %arg1[%c53] : memref<76xf32, #tpu.memory_space<smem>>
    %283 = vector.broadcast %282 : f32 to vector<8x128xf32>
    %284 = arith.mulf %153, %283 : vector<8x128xf32>
    %285 = arith.addf %281, %284 : vector<8x128xf32>
    %c57 = arith.constant 57 : index
    %286 = memref.load %arg1[%c57] : memref<76xf32, #tpu.memory_space<smem>>
    %287 = vector.broadcast %286 : f32 to vector<8x128xf32>
    %288 = arith.mulf %226, %287 : vector<8x128xf32>
    %289 = arith.addf %285, %288 : vector<8x128xf32>
    %c61 = arith.constant 61 : index
    %290 = memref.load %arg1[%c61] : memref<76xf32, #tpu.memory_space<smem>>
    %291 = vector.broadcast %290 : f32 to vector<8x128xf32>
    %292 = arith.mulf %227, %291 : vector<8x128xf32>
    %293 = arith.addf %289, %292 : vector<8x128xf32>
    %c65 = arith.constant 65 : index
    %294 = memref.load %arg1[%c65] : memref<76xf32, #tpu.memory_space<smem>>
    %295 = vector.broadcast %294 : f32 to vector<8x128xf32>
    %296 = arith.mulf %228, %295 : vector<8x128xf32>
    %297 = arith.addf %293, %296 : vector<8x128xf32>
    %c69 = arith.constant 69 : index
    %298 = memref.load %arg1[%c69] : memref<76xf32, #tpu.memory_space<smem>>
    %299 = vector.broadcast %298 : f32 to vector<8x128xf32>
    %300 = arith.mulf %229, %299 : vector<8x128xf32>
    %301 = arith.addf %297, %300 : vector<8x128xf32>
    %c73 = arith.constant 73 : index
    %302 = memref.load %arg1[%c73] : memref<76xf32, #tpu.memory_space<smem>>
    %303 = vector.broadcast %302 : f32 to vector<8x128xf32>
    %304 = arith.addf %301, %303 : vector<8x128xf32>
    %305 = vector.extract_strided_slice %230 {offsets = [1, 0, 0], sizes = [1, 8, 128], strides = [1, 1, 1]} : vector<4x8x128xf32> to vector<1x8x128xf32>
    %306 = vector.shape_cast %305 : vector<1x8x128xf32> to vector<8x128xf32>
    %307 = arith.addf %304, %306 : vector<8x128xf32>
    %c1_22 = arith.constant 1 : index
    %c0_23 = arith.constant 0 : index
    %c0_24 = arith.constant 0 : index
    %308 = vector.load %arg6[%c1_22, %c0_23, %c0_24] : memref<4x8x128xf32, #tpu.memory_space<vmem>>, vector<1x8x128xf32>
    %309 = vector.shape_cast %308 : vector<1x8x128xf32> to vector<8x128xf32>
    %310 = vector.shape_cast %307 : vector<8x128xf32> to vector<1x8x128xf32>
    tpu.vector_store %arg6[%c1_22, %c0_23, %c0_24], %310 {strides = array<i32>} : memref<4x8x128xf32, #tpu.memory_space<vmem>>, vector<1x8x128xf32>,
    %c42 = arith.constant 42 : index
    %311 = memref.load %arg1[%c42] : memref<76xf32, #tpu.memory_space<smem>>
    %312 = vector.broadcast %311 : f32 to vector<8x128xf32>
    %313 = arith.mulf %150, %312 : vector<8x128xf32>
    %c46 = arith.constant 46 : index
    %314 = memref.load %arg1[%c46] : memref<76xf32, #tpu.memory_space<smem>>
    %315 = vector.broadcast %314 : f32 to vector<8x128xf32>
    %316 = arith.mulf %151, %315 : vector<8x128xf32>
    %317 = arith.addf %313, %316 : vector<8x128xf32>
    %c50 = arith.constant 50 : index
    %318 = memref.load %arg1[%c50] : memref<76xf32, #tpu.memory_space<smem>>
    %319 = vector.broadcast %318 : f32 to vector<8x128xf32>
    %320 = arith.mulf %152, %319 : vector<8x128xf32>
    %321 = arith.addf %317, %320 : vector<8x128xf32>
    %c54 = arith.constant 54 : index
    %322 = memref.load %arg1[%c54] : memref<76xf32, #tpu.memory_space<smem>>
    %323 = vector.broadcast %322 : f32 to vector<8x128xf32>
    %324 = arith.mulf %153, %323 : vector<8x128xf32>
    %325 = arith.addf %321, %324 : vector<8x128xf32>
    %c58 = arith.constant 58 : index
    %326 = memref.load %arg1[%c58] : memref<76xf32, #tpu.memory_space<smem>>
    %327 = vector.broadcast %326 : f32 to vector<8x128xf32>
    %328 = arith.mulf %226, %327 : vector<8x128xf32>
    %329 = arith.addf %325, %328 : vector<8x128xf32>
    %c62 = arith.constant 62 : index
    %330 = memref.load %arg1[%c62] : memref<76xf32, #tpu.memory_space<smem>>
    %331 = vector.broadcast %330 : f32 to vector<8x128xf32>
    %332 = arith.mulf %227, %331 : vector<8x128xf32>
    %333 = arith.addf %329, %332 : vector<8x128xf32>
    %c66 = arith.constant 66 : index
    %334 = memref.load %arg1[%c66] : memref<76xf32, #tpu.memory_space<smem>>
    %335 = vector.broadcast %334 : f32 to vector<8x128xf32>
    %336 = arith.mulf %228, %335 : vector<8x128xf32>
    %337 = arith.addf %333, %336 : vector<8x128xf32>
    %c70 = arith.constant 70 : index
    %338 = memref.load %arg1[%c70] : memref<76xf32, #tpu.memory_space<smem>>
    %339 = vector.broadcast %338 : f32 to vector<8x128xf32>
    %340 = arith.mulf %229, %339 : vector<8x128xf32>
    %341 = arith.addf %337, %340 : vector<8x128xf32>
    %c74 = arith.constant 74 : index
    %342 = memref.load %arg1[%c74] : memref<76xf32, #tpu.memory_space<smem>>
    %343 = vector.broadcast %342 : f32 to vector<8x128xf32>
    %344 = arith.addf %341, %343 : vector<8x128xf32>
    %345 = vector.extract_strided_slice %230 {offsets = [2, 0, 0], sizes = [1, 8, 128], strides = [1, 1, 1]} : vector<4x8x128xf32> to vector<1x8x128xf32>
    %346 = vector.shape_cast %345 : vector<1x8x128xf32> to vector<8x128xf32>
    %347 = arith.addf %344, %346 : vector<8x128xf32>
    %c2_25 = arith.constant 2 : index
    %c0_26 = arith.constant 0 : index
    %c0_27 = arith.constant 0 : index
    %348 = vector.load %arg6[%c2_25, %c0_26, %c0_27] : memref<4x8x128xf32, #tpu.memory_space<vmem>>, vector<1x8x128xf32>
    %349 = vector.shape_cast %348 : vector<1x8x128xf32> to vector<8x128xf32>
    %350 = vector.shape_cast %347 : vector<8x128xf32> to vector<1x8x128xf32>
    tpu.vector_store %arg6[%c2_25, %c0_26, %c0_27], %350 {strides = array<i32>} : memref<4x8x128xf32, #tpu.memory_space<vmem>>, vector<1x8x128xf32>,
    %c43 = arith.constant 43 : index
    %351 = memref.load %arg1[%c43] : memref<76xf32, #tpu.memory_space<smem>>
    %352 = vector.broadcast %351 : f32 to vector<8x128xf32>
    %353 = arith.mulf %150, %352 : vector<8x128xf32>
    %c47 = arith.constant 47 : index
    %354 = memref.load %arg1[%c47] : memref<76xf32, #tpu.memory_space<smem>>
    %355 = vector.broadcast %354 : f32 to vector<8x128xf32>
    %356 = arith.mulf %151, %355 : vector<8x128xf32>
    %357 = arith.addf %353, %356 : vector<8x128xf32>
    %c51 = arith.constant 51 : index
    %358 = memref.load %arg1[%c51] : memref<76xf32, #tpu.memory_space<smem>>
    %359 = vector.broadcast %358 : f32 to vector<8x128xf32>
    %360 = arith.mulf %152, %359 : vector<8x128xf32>
    %361 = arith.addf %357, %360 : vector<8x128xf32>
    %c55 = arith.constant 55 : index
    %362 = memref.load %arg1[%c55] : memref<76xf32, #tpu.memory_space<smem>>
    %363 = vector.broadcast %362 : f32 to vector<8x128xf32>
    %364 = arith.mulf %153, %363 : vector<8x128xf32>
    %365 = arith.addf %361, %364 : vector<8x128xf32>
    %c59 = arith.constant 59 : index
    %366 = memref.load %arg1[%c59] : memref<76xf32, #tpu.memory_space<smem>>
    %367 = vector.broadcast %366 : f32 to vector<8x128xf32>
    %368 = arith.mulf %226, %367 : vector<8x128xf32>
    %369 = arith.addf %365, %368 : vector<8x128xf32>
    %c63 = arith.constant 63 : index
    %370 = memref.load %arg1[%c63] : memref<76xf32, #tpu.memory_space<smem>>
    %371 = vector.broadcast %370 : f32 to vector<8x128xf32>
    %372 = arith.mulf %227, %371 : vector<8x128xf32>
    %373 = arith.addf %369, %372 : vector<8x128xf32>
    %c67 = arith.constant 67 : index
    %374 = memref.load %arg1[%c67] : memref<76xf32, #tpu.memory_space<smem>>
    %375 = vector.broadcast %374 : f32 to vector<8x128xf32>
    %376 = arith.mulf %228, %375 : vector<8x128xf32>
    %377 = arith.addf %373, %376 : vector<8x128xf32>
    %c71 = arith.constant 71 : index
    %378 = memref.load %arg1[%c71] : memref<76xf32, #tpu.memory_space<smem>>
    %379 = vector.broadcast %378 : f32 to vector<8x128xf32>
    %380 = arith.mulf %229, %379 : vector<8x128xf32>
    %381 = arith.addf %377, %380 : vector<8x128xf32>
    %c75 = arith.constant 75 : index
    %382 = memref.load %arg1[%c75] : memref<76xf32, #tpu.memory_space<smem>>
    %383 = vector.broadcast %382 : f32 to vector<8x128xf32>
    %384 = arith.addf %381, %383 : vector<8x128xf32>
    %385 = vector.extract_strided_slice %230 {offsets = [3, 0, 0], sizes = [1, 8, 128], strides = [1, 1, 1]} : vector<4x8x128xf32> to vector<1x8x128xf32>
    %386 = vector.shape_cast %385 : vector<1x8x128xf32> to vector<8x128xf32>
    %387 = arith.addf %384, %386 : vector<8x128xf32>
    %c3_28 = arith.constant 3 : index
    %c0_29 = arith.constant 0 : index
    %c0_30 = arith.constant 0 : index
    %388 = vector.load %arg6[%c3_28, %c0_29, %c0_30] : memref<4x8x128xf32, #tpu.memory_space<vmem>>, vector<1x8x128xf32>
    %389 = vector.shape_cast %388 : vector<1x8x128xf32> to vector<8x128xf32>
    %390 = vector.shape_cast %387 : vector<8x128xf32> to vector<1x8x128xf32>
    tpu.vector_store %arg6[%c3_28, %c0_29, %c0_30], %390 {strides = array<i32>} : memref<4x8x128xf32, #tpu.memory_space<vmem>>, vector<1x8x128xf32>,
    return
  }
  func.func @transform_0(%arg0: i32) -> i32 {
    %c0_i32 = arith.constant 0 : i32
    %c0_i32_0 = arith.constant 0 : i32
    return %c0_i32 : i32
  }
  func.func @transform_1(%arg0: i32) -> (i32, i32, i32) {
    %c0_i32 = arith.constant 0 : i32
    %c0_i32_0 = arith.constant 0 : i32
    %c0_i32_1 = arith.constant 0 : i32
    return %c0_i32, %c0_i32_0, %arg0 : i32, i32, i32
  }
  func.func @transform_2(%arg0: i32) -> (i32, i32, i32) {
    %c0_i32 = arith.constant 0 : i32
    %c0_i32_0 = arith.constant 0 : i32
    %c0_i32_1 = arith.constant 0 : i32
    return %c0_i32, %c0_i32_0, %arg0 : i32, i32, i32
  }
  func.func @transform_3(%arg0: i32) -> (i32, i32, i32) {
    %c0_i32 = arith.constant 0 : i32
    %c0_i32_0 = arith.constant 0 : i32
    %c0_i32_1 = arith.constant 0 : i32
    return %c0_i32, %c0_i32_0, %arg0 : i32, i32, i32
  }
  func.func @transform_4(%arg0: i32) -> (i32, i32, i32) {
    %c0_i32 = arith.constant 0 : i32
    %c0_i32_0 = arith.constant 0 : i32
    %c0_i32_1 = arith.constant 0 : i32
    return %c0_i32, %c0_i32_0, %arg0 : i32, i32, i32
  }
  func.func @transform_5(%arg0: i32) -> (i32, i32, i32) {
    %c0_i32 = arith.constant 0 : i32
    %c0_i32_0 = arith.constant 0 : i32
    %c0_i32_1 = arith.constant 0 : i32
    return %c0_i32, %c0_i32_0, %arg0 : i32, i32, i32
  }
}

</mosaic_0001>

<llo_original>
// kernel: multi_axis_gmlp_forward.4
$region0: #{multi_axis_gmlp_forward.4}
  #allocation0 [shape = 'u32[]', space=smem, size = 0x4, offset = 0x4, fixed_abs, tag = 'smem constant byte address 0x4 - core index']
  #allocation1 [shape = 'u32[72,128]{1,0:T(1,128)}', space=vmem, size = 0x9000, scoped, tag = 'internal scratch']
  %s0 = inlined_call_operand.vmem [shape: f32[160], index: 0, kind: input, shape index: {}]
  %s1 = inlined_call_operand.vmem [shape: f32[4,8,128], index: 1, kind: input, shape index: {}]
  %s2 = inlined_call_operand.vmem [shape: bf16[16,8,128], index: 2, kind: output, shape index: {0}]
  %s3 = inlined_call_operand.vmem [shape: bf16[4,8,128], index: 3, kind: output, shape index: {1}]
  %s4 = inlined_call_operand.vmem [shape: bf16[4,8,128], index: 4, kind: output, shape index: {2}]
  %5 = xla_tuple %s2, %s3, %s4
  %s6 = sld [smem:[#allocation0]]
  $region38: #{multi_axis_gmlp_forward.4} parent=0
    _
  %s8 = ssub.s32 1, %s6
  %s9 = scalar_select 0, %s8, %s6
  $region1: #{multi_axis_gmlp_forward.4} parent=0
    #allocation2 [shape = 'u8[1024]{0}', space=smem, size = 0x400, scoped, tag = 'input window, operand 0, single buffered']
    #allocation3 [shape = 's32[1]{0}', space=sflag, size = 0x4, scoped, tag = 'scoped memory for multi_axis_gmlp_forward.4']
    %10 = vsyncpa [#allocation3], 0
    // Predicated region
    $region2: #{multi_axis_gmlp_forward.4} parent=1 // pred_check
      _
    $region3: #{multi_axis_gmlp_forward.4} parent=1 // pred_check_branch
      %12 = sbr.rel (0) target = $region5
    $region4: #{multi_axis_gmlp_forward.4} parent=1 // pred_region
      %14 = vsyncadd [#allocation3], 0
      %s16 = sshll.u32 %s0, 4
      %s17 = int_to_ptr.vmem [resolvable:$true] %s16
      %19 = dma.vmem_to_smem %s17, 32, [#allocation2], [#allocation3]
    $region5: #{multi_axis_gmlp_forward.4} parent=1 // pred_fallthru
      _
    // Predicated region
    $region6: #{multi_axis_gmlp_forward.4} parent=1 // pred_check
      _
    $region7: #{multi_axis_gmlp_forward.4} parent=1 // pred_check_branch
      %21 = sbr.rel (0) target = $region9
    $region8: #{multi_axis_gmlp_forward.4} parent=1 // pred_region
      _
    $region9: #{multi_axis_gmlp_forward.4} parent=1 // pred_fallthru
      _
    // Predicated region
    $region10: #{multi_axis_gmlp_forward.4} parent=1 // pred_check
      _
    $region11: #{multi_axis_gmlp_forward.4} parent=1 // pred_check_branch
      %23 = sbr.rel (0) target = $region13
    $region12: #{multi_axis_gmlp_forward.4} parent=1 // pred_region
      %25 = dma.done [#allocation3], 32
    $region13: #{multi_axis_gmlp_forward.4} parent=1 // pred_fallthru
      _
    %26 = sfence
    %v27 = vld [vmem:[%s1] sm:$0xff]
    %v28 = vld [vmem:[%s1 + $0x8] sm:$0xff]
    %v29 = vld [vmem:[%s1 + $0x10] sm:$0xff]
    %v30 = vld [vmem:[%s1 + $0x18] sm:$0xff]
    %v31 = vadd.f32 %v27, %v28
    %v32 = vadd.f32 %v31, %v29
    %v33 = vadd.f32 %v32, %v30
    %v34 = vmul.f32 %v33, 0.25
    %v35 = vsub.f32 %v27, %v34
    %v36 = vsub.f32 %v28, %v34
    %v37 = vsub.f32 %v29, %v34
    %v38 = vsub.f32 %v30, %v34
    %v39 = vmul.f32 %v35, %v35
    %v40 = vmul.f32 %v36, %v36
    %v41 = vadd.f32 %v39, %v40
    %v42 = vmul.f32 %v37, %v37
    %v43 = vadd.f32 %v41, %v42
    %v44 = vmul.f32 %v38, %v38
    %v45 = vadd.f32 %v43, %v44
    %v46 = vmul.f32 %v45, 0.25
    %v47 = vadd.f32 %v46, 1e-05
    %v48 = vrsqrt.pop %v47
    %v49 = vmul.f32 %v48, %v47
    %v50 = vmul.f32 %v49, %v48
    %v51 = vmul.f32 0.5, %v50
    %v52 = vsub.f32 1.5, %v51
    %v53 = vmul.f32 %v48, %v52
    %vm54 = vweird.f32 %v47
    %vm55 = vweird.f32 %v48
    %vm56 = vmor %vm54, %vm55
    %v57 = vsel %vm56, %v48, %v53
    %v58 = vmul.f32 %v35, %v57
    %s59 = sld [smem:[#allocation2]]
    %v60 = vstv %s59
    %v61 = vmul.f32 %v58, %v60
    %s62 = sld [smem:[#allocation2 + $0x4]]
    %v63 = vstv %s62
    %v64 = vadd.f32 %v61, %v63
    %v65 = vmul.f32 %v36, %v57
    %s66 = sld [smem:[#allocation2 + $0x1]]
    %v67 = vstv %s66
    %v68 = vmul.f32 %v65, %v67
    %s69 = sld [smem:[#allocation2 + $0x5]]
    %v70 = vstv %s69
    %v71 = vadd.f32 %v68, %v70
    %v72 = vmul.f32 %v37, %v57
    %s73 = sld [smem:[#allocation2 + $0x2]]
    %v74 = vstv %s73
    %v75 = vmul.f32 %v72, %v74
    %s76 = sld [smem:[#allocation2 + $0x6]]
    %v77 = vstv %s76
    %v78 = vadd.f32 %v75, %v77
    %v79 = vmul.f32 %v38, %v57
    %s80 = sld [smem:[#allocation2 + $0x3]]
    %v81 = vstv %s80
    %v82 = vmul.f32 %v79, %v81
    %s83 = sld [smem:[#allocation2 + $0x7]]
    %v84 = vstv %s83
    %v85 = vadd.f32 %v82, %v84
    %s86 = sld [smem:[#allocation2 + $0x8]]
    %v87 = vstv %s86
    %v88 = vmul.f32 %v64, %v87
    %s89 = sld [smem:[#allocation2 + $0xc]]
    %v90 = vstv %s89
    %v91 = vmul.f32 %v71, %v90
    %v92 = vadd.f32 %v88, %v91
    %s93 = sld [smem:[#allocation2 + $0x10]]
    %v94 = vstv %s93
    %v95 = vmul.f32 %v78, %v94
    %v96 = vadd.f32 %v92, %v95
    %s97 = sld [smem:[#allocation2 + $0x14]]
    %v98 = vstv %s97
    %v99 = vmul.f32 %v85, %v98
    %v100 = vadd.f32 %v96, %v99
    %s101 = sld [smem:[#allocation2 + $0x18]]
    %v102 = vstv %s101
    %v103 = vadd.f32 %v100, %v102
    %s104 = sld [smem:[#allocation2 + $0x9]]
    %v105 = vstv %s104
    %v106 = vmul.f32 %v64, %v105
    %s107 = sld [smem:[#allocation2 + $0xd]]
    %v108 = vstv %s107
    %v109 = vmul.f32 %v71, %v108
    %v110 = vadd.f32 %v106, %v109
    %s111 = sld [smem:[#allocation2 + $0x11]]
    %v112 = vstv %s111
    %v113 = vmul.f32 %v78, %v112
    %v114 = vadd.f32 %v110, %v113
    %s115 = sld [smem:[#allocation2 + $0x15]]
    %v116 = vstv %s115
    %v117 = vmul.f32 %v85, %v116
    %v118 = vadd.f32 %v114, %v117
    %s119 = sld [smem:[#allocation2 + $0x19]]
    %v120 = vstv %s119
    %v121 = vadd.f32 %v118, %v120
    %s122 = sld [smem:[#allocation2 + $0xa]]
    %v123 = vstv %s122
    %v124 = vmul.f32 %v64, %v123
    %s125 = sld [smem:[#allocation2 + $0xe]]
    %v126 = vstv %s125
    %v127 = vmul.f32 %v71, %v126
    %v128 = vadd.f32 %v124, %v127
    %s129 = sld [smem:[#allocation2 + $0x12]]
    %v130 = vstv %s129
    %v131 = vmul.f32 %v78, %v130
    %v132 = vadd.f32 %v128, %v131
    %s133 = sld [smem:[#allocation2 + $0x16]]
    %v134 = vstv %s133
    %v135 = vmul.f32 %v85, %v134
    %v136 = vadd.f32 %v132, %v135
    %s137 = sld [smem:[#allocation2 + $0x1a]]
    %v138 = vstv %s137
    %v139 = vadd.f32 %v136, %v138
    %s140 = sld [smem:[#allocation2 + $0xb]]
    %v141 = vstv %s140
    %v142 = vmul.f32 %v64, %v141
    %s143 = sld [smem:[#allocation2 + $0xf]]
    %v144 = vstv %s143
    %v145 = vmul.f32 %v71, %v144
    %v146 = vadd.f32 %v142, %v145
    %s147 = sld [smem:[#allocation2 + $0x13]]
    %v148 = vstv %s147
    %v149 = vmul.f32 %v78, %v148
    %v150 = vadd.f32 %v146, %v149
    %s151 = sld [smem:[#allocation2 + $0x17]]
    %v152 = vstv %s151
    %v153 = vmul.f32 %v85, %v152
    %v154 = vadd.f32 %v150, %v153
    %s155 = sld [smem:[#allocation2 + $0x1b]]
    %v156 = vstv %s155
    %v157 = vadd.f32 %v154, %v156
    %v158 = vmul.f32 %v103, 0.5
    %v159 = vmul.f32 %v103, 0.044715
    %v160 = vmul.f32 %v159, %v103
    %v161 = vmul.f32 %v160, %v103
    %v162 = vadd.f32 %v103, %v161
    %v163 = vmul.f32 %v162, 0.7978846
    %v164 = vtanh.pop %v163
    %v165 = vadd.f32 %v164, 1.0
    %v166 = vmul.f32 %v158, %v165
    %v167 = vmul.f32 %v121, 0.5
    %v168 = vmul.f32 %v121, 0.044715
    %v169 = vmul.f32 %v168, %v121
    %v170 = vmul.f32 %v169, %v121
    %v171 = vadd.f32 %v121, %v170
    %v172 = vmul.f32 %v171, 0.7978846
    %v173 = vtanh.pop %v172
    %v174 = vadd.f32 %v173, 1.0
    %v175 = vmul.f32 %v167, %v174
    %v176 = vmul.f32 %v139, 0.5
    %v177 = vmul.f32 %v139, 0.044715
    %v178 = vmul.f32 %v177, %v139
    %v179 = vmul.f32 %v178, %v139
    %v180 = vadd.f32 %v139, %v179
    %v181 = vmul.f32 %v180, 0.7978846
    %v182 = vtanh.pop %v181
    %v183 = vadd.f32 %v182, 1.0
    %v184 = vmul.f32 %v176, %v183
    %v185 = vmul.f32 %v157, 0.5
    %v186 = vmul.f32 %v157, 0.044715
    %v187 = vmul.f32 %v186, %v157
    %v188 = vmul.f32 %v187, %v157
    %v189 = vadd.f32 %v157, %v188
    %v190 = vmul.f32 %v189, 0.7978846
    %v191 = vtanh.pop %v190
    %v192 = vadd.f32 %v191, 1.0
    %v193 = vmul.f32 %v185, %v192
    %s194 = sld [smem:[#allocation2 + $0x1c]]
    %v195 = vstv %s194
    %v196 = vmul.f32 %v64, %v195
    %s197 = sld [smem:[#allocation2 + $0x20]]
    %v198 = vstv %s197
    %v199 = vmul.f32 %v71, %v198
    %v200 = vadd.f32 %v196, %v199
    %s201 = sld [smem:[#allocation2 + $0x24]]
    %v202 = vstv %s201
    %v203 = vmul.f32 %v78, %v202
    %v204 = vadd.f32 %v200, %v203
    %s205 = sld [smem:[#allocation2 + $0x28]]
    %v206 = vstv %s205
    %v207 = vmul.f32 %v85, %v206
    %v208 = vadd.f32 %v204, %v207
    %s209 = sld [smem:[#allocation2 + $0x2c]]
    %v210 = vstv %s209
    %v211 = vadd.f32 %v208, %v210
    %s212 = sld [smem:[#allocation2 + $0x1d]]
    %v213 = vstv %s212
    %v214 = vmul.f32 %v64, %v213
    %s215 = sld [smem:[#allocation2 + $0x21]]
    %v216 = vstv %s215
    %v217 = vmul.f32 %v71, %v216
    %v218 = vadd.f32 %v214, %v217
    %s219 = sld [smem:[#allocation2 + $0x25]]
    %v220 = vstv %s219
    %v221 = vmul.f32 %v78, %v220
    %v222 = vadd.f32 %v218, %v221
    %s223 = sld [smem:[#allocation2 + $0x29]]
    %v224 = vstv %s223
    %v225 = vmul.f32 %v85, %v224
    %v226 = vadd.f32 %v222, %v225
    %s227 = sld [smem:[#allocation2 + $0x2d]]
    %v228 = vstv %s227
    %v229 = vadd.f32 %v226, %v228
    %s230 = sld [smem:[#allocation2 + $0x1e]]
    %v231 = vstv %s230
    %v232 = vmul.f32 %v64, %v231
    %s233 = sld [smem:[#allocation2 + $0x22]]
    %v234 = vstv %s233
    %v235 = vmul.f32 %v71, %v234
    %v236 = vadd.f32 %v232, %v235
    %s237 = sld [smem:[#allocation2 + $0x26]]
    %v238 = vstv %s237
    %v239 = vmul.f32 %v78, %v238
    %v240 = vadd.f32 %v236, %v239
    %s241 = sld [smem:[#allocation2 + $0x2a]]
    %v242 = vstv %s241
    %v243 = vmul.f32 %v85, %v242
    %v244 = vadd.f32 %v240, %v243
    %s245 = sld [smem:[#allocation2 + $0x2e]]
    %v246 = vstv %s245
    %v247 = vadd.f32 %v244, %v246
    %s248 = sld [smem:[#allocation2 + $0x1f]]
    %v249 = vstv %s248
    %v250 = vmul.f32 %v64, %v249
    %s251 = sld [smem:[#allocation2 + $0x23]]
    %v252 = vstv %s251
    %v253 = vmul.f32 %v71, %v252
    %v254 = vadd.f32 %v250, %v253
    %s255 = sld [smem:[#allocation2 + $0x27]]
    %v256 = vstv %s255
    %v257 = vmul.f32 %v78, %v256
    %v258 = vadd.f32 %v254, %v257
    %s259 = sld [smem:[#allocation2 + $0x2b]]
    %v260 = vstv %s259
    %v261 = vmul.f32 %v85, %v260
    %v262 = vadd.f32 %v258, %v261
    %s263 = sld [smem:[#allocation2 + $0x2f]]
    %v264 = vstv %s263
    %v265 = vadd.f32 %v262, %v264
    %v266 = vmul.f32 %v211, 0.5
    %v267 = vmul.f32 %v211, 0.044715
    %v268 = vmul.f32 %v267, %v211
    %v269 = vmul.f32 %v268, %v211
    %v270 = vadd.f32 %v211, %v269
    %v271 = vmul.f32 %v270, 0.7978846
    %v272 = vtanh.pop %v271
    %v273 = vadd.f32 %v272, 1.0
    %v274 = vmul.f32 %v266, %v273
    %v275 = vmul.f32 %v229, 0.5
    %v276 = vmul.f32 %v229, 0.044715
    %v277 = vmul.f32 %v276, %v229
    %v278 = vmul.f32 %v277, %v229
    %v279 = vadd.f32 %v229, %v278
    %v280 = vmul.f32 %v279, 0.7978846
    %v281 = vtanh.pop %v280
    %v282 = vadd.f32 %v281, 1.0
    %v283 = vmul.f32 %v275, %v282
    %v284 = vmul.f32 %v247, 0.5
    %v285 = vmul.f32 %v247, 0.044715
    %v286 = vmul.f32 %v285, %v247
    %v287 = vmul.f32 %v286, %v247
    %v288 = vadd.f32 %v247, %v287
    %v289 = vmul.f32 %v288, 0.7978846
    %v290 = vtanh.pop %v289
    %v291 = vadd.f32 %v290, 1.0
    %v292 = vmul.f32 %v284, %v291
    %v293 = vmul.f32 %v265, 0.5
    %v294 = vmul.f32 %v265, 0.044715
    %v295 = vmul.f32 %v294, %v265
    %v296 = vmul.f32 %v295, %v265
    %v297 = vadd.f32 %v265, %v296
    %v298 = vmul.f32 %v297, 0.7978846
    %v299 = vtanh.pop %v298
    %v300 = vadd.f32 %v299, 1.0
    %v301 = vmul.f32 %v293, %v300
    %v302 = vadd.f32 %v166, %v175
    %v303 = vadd.f32 %v302, %v184
    %v304 = vadd.f32 %v303, %v193
    %v305 = vmul.f32 %v304, 0.25
    %v306 = vsub.f32 %v166, %v305
    %v307 = vsub.f32 %v175, %v305
    %v308 = vsub.f32 %v184, %v305
    %v309 = vsub.f32 %v193, %v305
    %v310 = vmul.f32 %v306, %v306
    %v311 = vmul.f32 %v307, %v307
    %v312 = vadd.f32 %v310, %v311
    %v313 = vmul.f32 %v308, %v308
    %v314 = vadd.f32 %v312, %v313
    %v315 = vmul.f32 %v309, %v309
    %v316 = vadd.f32 %v314, %v315
    %v317 = vmul.f32 %v316, 0.25
    %v318 = vadd.f32 %v317, 1e-05
    %v319 = vrsqrt.pop %v318
    %v320 = vmul.f32 %v319, %v318
    %v321 = vmul.f32 %v320, %v319
    %v322 = vmul.f32 0.5, %v321
    %v323 = vsub.f32 1.5, %v322
    %v324 = vmul.f32 %v319, %v323
    %vm325 = vweird.f32 %v318
    %vm326 = vweird.f32 %v319
    %vm327 = vmor %vm325, %vm326
    %v328 = vsel %vm327, %v319, %v324
    %v329 = vmul.f32 %v306, %v328
    %s330 = sld [smem:[#allocation2 + $0x30]]
    %v331 = vstv %s330
    %v332 = vmul.f32 %v329, %v331
    %s333 = sld [smem:[#allocation2 + $0x34]]
    %v334 = vstv %s333
    %v335 = vadd.f32 %v332, %v334
    %v336 = vmul.f32 %v307, %v328
    %s337 = sld [smem:[#allocation2 + $0x31]]
    %v338 = vstv %s337
    %v339 = vmul.f32 %v336, %v338
    %s340 = sld [smem:[#allocation2 + $0x35]]
    %v341 = vstv %s340
    %v342 = vadd.f32 %v339, %v341
    %v343 = vmul.f32 %v308, %v328
    %s344 = sld [smem:[#allocation2 + $0x32]]
    %v345 = vstv %s344
    %v346 = vmul.f32 %v343, %v345
    %s347 = sld [smem:[#allocation2 + $0x36]]
    %v348 = vstv %s347
    %v349 = vadd.f32 %v346, %v348
    %v350 = vmul.f32 %v309, %v328
    %s351 = sld [smem:[#allocation2 + $0x33]]
    %v352 = vstv %s351
    %v353 = vmul.f32 %v350, %v352
    %s354 = sld [smem:[#allocation2 + $0x37]]
    %v355 = vstv %s354
    %v356 = vadd.f32 %v353, %v355
    %s357 = sld [smem:[#allocation2 + $0x38]]
    %v358 = vstv %s357
    %v359 = vmul.f32 %v335, %v358
    %s360 = sld [smem:[#allocation2 + $0x3c]]
    %v361 = vstv %s360
    %v362 = vmul.f32 %v342, %v361
    %v363 = vadd.f32 %v359, %v362
    %s364 = sld [smem:[#allocation2 + $0x40]]
    %v365 = vstv %s364
    %v366 = vmul.f32 %v349, %v365
    %v367 = vadd.f32 %v363, %v366
    %s368 = sld [smem:[#allocation2 + $0x44]]
    %v369 = vstv %s368
    %v370 = vmul.f32 %v356, %v369
    %v371 = vadd.f32 %v367, %v370
    %s372 = sld [smem:[#allocation2 + $0x48]]
    %v373 = vstv %s372
    %v374 = vadd.f32 %v371, %v373
    %s375 = sld [smem:[#allocation2 + $0x39]]
    %v376 = vstv %s375
    %v377 = vmul.f32 %v335, %v376
    %s378 = sld [smem:[#allocation2 + $0x3d]]
    %v379 = vstv %s378
    %v380 = vmul.f32 %v342, %v379
    %v381 = vadd.f32 %v377, %v380
    %s382 = sld [smem:[#allocation2 + $0x41]]
    %v383 = vstv %s382
    %v384 = vmul.f32 %v349, %v383
    %v385 = vadd.f32 %v381, %v384
    %s386 = sld [smem:[#allocation2 + $0x45]]
    %v387 = vstv %s386
    %v388 = vmul.f32 %v356, %v387
    %v389 = vadd.f32 %v385, %v388
    %s390 = sld [smem:[#allocation2 + $0x49]]
    %v391 = vstv %s390
    %v392 = vadd.f32 %v389, %v391
    %s393 = sld [smem:[#allocation2 + $0x3a]]
    %v394 = vstv %s393
    %v395 = vmul.f32 %v335, %v394
    %s396 = sld [smem:[#allocation2 + $0x3e]]
    %v397 = vstv %s396
    %v398 = vmul.f32 %v342, %v397
    %v399 = vadd.f32 %v395, %v398
    %s400 = sld [smem:[#allocation2 + $0x42]]
    %v401 = vstv %s400
    %v402 = vmul.f32 %v349, %v401
    %v403 = vadd.f32 %v399, %v402
    %s404 = sld [smem:[#allocation2 + $0x46]]
    %v405 = vstv %s404
    %v406 = vmul.f32 %v356, %v405
    %v407 = vadd.f32 %v403, %v406
    %s408 = sld [smem:[#allocation2 + $0x4a]]
    %v409 = vstv %s408
    %v410 = vadd.f32 %v407, %v409
    %s411 = sld [smem:[#allocation2 + $0x3b]]
    %v412 = vstv %s411
    %v413 = vmul.f32 %v335, %v412
    %s414 = sld [smem:[#allocation2 + $0x3f]]
    %v415 = vstv %s414
    %v416 = vmul.f32 %v342, %v415
    %v417 = vadd.f32 %v413, %v416
    %s418 = sld [smem:[#allocation2 + $0x43]]
    %v419 = vstv %s418
    %v420 = vmul.f32 %v349, %v419
    %v421 = vadd.f32 %v417, %v420
    %s422 = sld [smem:[#allocation2 + $0x47]]
    %v423 = vstv %s422
    %v424 = vmul.f32 %v356, %v423
    %v425 = vadd.f32 %v421, %v424
    %s426 = sld [smem:[#allocation2 + $0x4b]]
    %v427 = vstv %s426
    %v428 = vadd.f32 %v425, %v427
    %v429 = vmul.f32 %v374, 0.5
    %v430 = vmul.f32 %v374, 0.044715
    %v431 = vmul.f32 %v430, %v374
    %v432 = vmul.f32 %v431, %v374
    %v433 = vadd.f32 %v374, %v432
    %v434 = vmul.f32 %v433, 0.7978846
    %v435 = vtanh.pop %v434
    %v436 = vadd.f32 %v435, 1.0
    %v437 = vmul.f32 %v429, %v436
    %v438 = vmul.f32 %v392, 0.5
    %v439 = vmul.f32 %v392, 0.044715
    %v440 = vmul.f32 %v439, %v392
    %v441 = vmul.f32 %v440, %v392
    %v442 = vadd.f32 %v392, %v441
    %v443 = vmul.f32 %v442, 0.7978846
    %v444 = vtanh.pop %v443
    %v445 = vadd.f32 %v444, 1.0
    %v446 = vmul.f32 %v438, %v445
    %v447 = vmul.f32 %v410, 0.5
    %v448 = vmul.f32 %v410, 0.044715
    %v449 = vmul.f32 %v448, %v410
    %v450 = vmul.f32 %v449, %v410
    %v451 = vadd.f32 %v410, %v450
    %v452 = vmul.f32 %v451, 0.7978846
    %v453 = vtanh.pop %v452
    %v454 = vadd.f32 %v453, 1.0
    %v455 = vmul.f32 %v447, %v454
    %v456 = vmul.f32 %v428, 0.5
    %v457 = vmul.f32 %v428, 0.044715
    %v458 = vmul.f32 %v457, %v428
    %v459 = vmul.f32 %v458, %v428
    %v460 = vadd.f32 %v428, %v459
    %v461 = vmul.f32 %v460, 0.7978846
    %v462 = vtanh.pop %v461
    %v463 = vadd.f32 %v462, 1.0
    %v464 = vmul.f32 %v456, %v463
    %s465 = sld [smem:[#allocation2 + $0x4c]]
    %v466 = vstv %s465
    %v467 = vmul.f32 %v335, %v466
    %s468 = sld [smem:[#allocation2 + $0x50]]
    %v469 = vstv %s468
    %v470 = vmul.f32 %v342, %v469
    %v471 = vadd.f32 %v467, %v470
    %s472 = sld [smem:[#allocation2 + $0x54]]
    %v473 = vstv %s472
    %v474 = vmul.f32 %v349, %v473
    %v475 = vadd.f32 %v471, %v474
    %s476 = sld [smem:[#allocation2 + $0x58]]
    %v477 = vstv %s476
    %v478 = vmul.f32 %v356, %v477
    %v479 = vadd.f32 %v475, %v478
    %s480 = sld [smem:[#allocation2 + $0x5c]]
    %v481 = vstv %s480
    %v482 = vadd.f32 %v479, %v481
    %s483 = sld [smem:[#allocation2 + $0x4d]]
    %v484 = vstv %s483
    %v485 = vmul.f32 %v335, %v484
    %s486 = sld [smem:[#allocation2 + $0x51]]
    %v487 = vstv %s486
    %v488 = vmul.f32 %v342, %v487
    %v489 = vadd.f32 %v485, %v488
    %s490 = sld [smem:[#allocation2 + $0x55]]
    %v491 = vstv %s490
    %v492 = vmul.f32 %v349, %v491
    %v493 = vadd.f32 %v489, %v492
    %s494 = sld [smem:[#allocation2 + $0x59]]
    %v495 = vstv %s494
    %v496 = vmul.f32 %v356, %v495
    %v497 = vadd.f32 %v493, %v496
    %s498 = sld [smem:[#allocation2 + $0x5d]]
    %v499 = vstv %s498
    %v500 = vadd.f32 %v497, %v499
    %s501 = sld [smem:[#allocation2 + $0x4e]]
    %v502 = vstv %s501
    %v503 = vmul.f32 %v335, %v502
    %s504 = sld [smem:[#allocation2 + $0x52]]
    %v505 = vstv %s504
    %v506 = vmul.f32 %v342, %v505
    %v507 = vadd.f32 %v503, %v506
    %s508 = sld [smem:[#allocation2 + $0x56]]
    %v509 = vstv %s508
    %v510 = vmul.f32 %v349, %v509
    %v511 = vadd.f32 %v507, %v510
    %s512 = sld [smem:[#allocation2 + $0x5a]]
    %v513 = vstv %s512
    %v514 = vmul.f32 %v356, %v513
    %v515 = vadd.f32 %v511, %v514
    %s516 = sld [smem:[#allocation2 + $0x5e]]
    %v517 = vstv %s516
    %v518 = vadd.f32 %v515, %v517
    %s519 = sld [smem:[#allocation2 + $0x4f]]
    %v520 = vstv %s519
    %v521 = vmul.f32 %v335, %v520
    %s522 = sld [smem:[#allocation2 + $0x53]]
    %v523 = vstv %s522
    %v524 = vmul.f32 %v342, %v523
    %v525 = vadd.f32 %v521, %v524
    %s526 = sld [smem:[#allocation2 + $0x57]]
    %v527 = vstv %s526
    %v528 = vmul.f32 %v349, %v527
    %v529 = vadd.f32 %v525, %v528
    %s530 = sld [smem:[#allocation2 + $0x5b]]
    %v531 = vstv %s530
    %v532 = vmul.f32 %v356, %v531
    %v533 = vadd.f32 %v529, %v532
    %s534 = sld [smem:[#allocation2 + $0x5f]]
    %v535 = vstv %s534
    %v536 = vadd.f32 %v533, %v535
    %v537 = vmul.f32 %v482, 0.5
    %v538 = vmul.f32 %v482, 0.044715
    %v539 = vmul.f32 %v538, %v482
    %v540 = vmul.f32 %v539, %v482
    %v541 = vadd.f32 %v482, %v540
    %v542 = vmul.f32 %v541, 0.7978846
    %v543 = vtanh.pop %v542
    %v544 = vadd.f32 %v543, 1.0
    %v545 = vmul.f32 %v537, %v544
    %v546 = vmul.f32 %v500, 0.5
    %v547 = vmul.f32 %v500, 0.044715
    %v548 = vmul.f32 %v547, %v500
    %v549 = vmul.f32 %v548, %v500
    %v550 = vadd.f32 %v500, %v549
    %v551 = vmul.f32 %v550, 0.7978846
    %v552 = vtanh.pop %v551
    %v553 = vadd.f32 %v552, 1.0
    %v554 = vmul.f32 %v546, %v553
    %v555 = vmul.f32 %v518, 0.5
    %v556 = vmul.f32 %v518, 0.044715
    %v557 = vmul.f32 %v556, %v518
    %v558 = vmul.f32 %v557, %v518
    %v559 = vadd.f32 %v518, %v558
    %v560 = vmul.f32 %v559, 0.7978846
    %v561 = vtanh.pop %v560
    %v562 = vadd.f32 %v561, 1.0
    %v563 = vmul.f32 %v555, %v562
    %v564 = vmul.f32 %v536, 0.5
    %v565 = vmul.f32 %v536, 0.044715
    %v566 = vmul.f32 %v565, %v536
    %v567 = vmul.f32 %v566, %v536
    %v568 = vadd.f32 %v536, %v567
    %v569 = vmul.f32 %v568, 0.7978846
    %v570 = vtanh.pop %v569
    %v571 = vadd.f32 %v570, 1.0
    %v572 = vmul.f32 %v564, %v571
    %v573 = vadd.f32 %v545, %v554
    %v574 = vadd.f32 %v573, %v563
    %v575 = vadd.f32 %v574, %v572
    %v576 = vmul.f32 %v575, 0.25
    %v577 = vsub.f32 %v545, %v576
    %v578 = vsub.f32 %v554, %v576
    %v579 = vsub.f32 %v563, %v576
    %v580 = vsub.f32 %v572, %v576
    %v581 = vmul.f32 %v577, %v577
    %v582 = vmul.f32 %v578, %v578
    %v583 = vadd.f32 %v581, %v582
    %v584 = vmul.f32 %v579, %v579
    %v585 = vadd.f32 %v583, %v584
    %v586 = vmul.f32 %v580, %v580
    %v587 = vadd.f32 %v585, %v586
    %v588 = vmul.f32 %v587, 0.25
    %v589 = vadd.f32 %v588, 1e-05
    %v590 = vrsqrt.pop %v589
    %v591 = vmul.f32 %v590, %v589
    %v592 = vmul.f32 %v591, %v590
    %v593 = vmul.f32 0.5, %v592
    %v594 = vsub.f32 1.5, %v593
    %v595 = vmul.f32 %v590, %v594
    %vm596 = vweird.f32 %v589
    %vm597 = vweird.f32 %v590
    %vm598 = vmor %vm596, %vm597
    %v599 = vsel %vm598, %v590, %v595
    %v600 = vmul.f32 %v577, %v599
    %s601 = sld [smem:[#allocation2 + $0x60]]
    %v602 = vstv %s601
    %v603 = vmul.f32 %v600, %v602
    %s604 = sld [smem:[#allocation2 + $0x64]]
    %v605 = vstv %s604
    %v606 = vadd.f32 %v603, %v605
    %v607 = vmul.f32 %v578, %v599
    %s608 = sld [smem:[#allocation2 + $0x61]]
    %v609 = vstv %s608
    %v610 = vmul.f32 %v607, %v609
    %s611 = sld [smem:[#allocation2 + $0x65]]
    %v612 = vstv %s611
    %v613 = vadd.f32 %v610, %v612
    %v614 = vmul.f32 %v579, %v599
    %s615 = sld [smem:[#allocation2 + $0x62]]
    %v616 = vstv %s615
    %v617 = vmul.f32 %v614, %v616
    %s618 = sld [smem:[#allocation2 + $0x66]]
    %v619 = vstv %s618
    %v620 = vadd.f32 %v617, %v619
    %v621 = vmul.f32 %v580, %v599
    %s622 = sld [smem:[#allocation2 + $0x63]]
    %v623 = vstv %s622
    %v624 = vmul.f32 %v621, %v623
    %s625 = sld [smem:[#allocation2 + $0x67]]
    %v626 = vstv %s625
    %v627 = vadd.f32 %v624, %v626
    %v628 = vadd.f32 %v274, %v283
    %v629 = vadd.f32 %v628, %v292
    %v630 = vadd.f32 %v629, %v301
    %v631 = vmul.f32 %v630, 0.25
    %v632 = vsub.f32 %v274, %v631
    %v633 = vsub.f32 %v283, %v631
    %v634 = vsub.f32 %v292, %v631
    %v635 = vsub.f32 %v301, %v631
    %v636 = vmul.f32 %v632, %v632
    %v637 = vmul.f32 %v633, %v633
    %v638 = vadd.f32 %v636, %v637
    %v639 = vmul.f32 %v634, %v634
    %v640 = vadd.f32 %v638, %v639
    %v641 = vmul.f32 %v635, %v635
    %v642 = vadd.f32 %v640, %v641
    %v643 = vmul.f32 %v642, 0.25
    %v644 = vadd.f32 %v643, 1e-05
    %v645 = vrsqrt.pop %v644
    %v646 = vmul.f32 %v645, %v644
    %v647 = vmul.f32 %v646, %v645
    %v648 = vmul.f32 0.5, %v647
    %v649 = vsub.f32 1.5, %v648
    %v650 = vmul.f32 %v645, %v649
    %vm651 = vweird.f32 %v644
    %vm652 = vweird.f32 %v645
    %vm653 = vmor %vm651, %vm652
    %v654 = vsel %vm653, %v645, %v650
    %v655 = vmul.f32 %v632, %v654
    %s656 = sld [smem:[#allocation2 + $0x68]]
    %v657 = vstv %s656
    %v658 = vmul.f32 %v655, %v657
    %s659 = sld [smem:[#allocation2 + $0x6c]]
    %v660 = vstv %s659
    %v661 = vadd.f32 %v658, %v660
    %v662 = vmul.f32 %v633, %v654
    %s663 = sld [smem:[#allocation2 + $0x69]]
    %v664 = vstv %s663
    %v665 = vmul.f32 %v662, %v664
    %s666 = sld [smem:[#allocation2 + $0x6d]]
    %v667 = vstv %s666
    %v668 = vadd.f32 %v665, %v667
    %v669 = vmul.f32 %v634, %v654
    %s670 = sld [smem:[#allocation2 + $0x6a]]
    %v671 = vstv %s670
    %v672 = vmul.f32 %v669, %v671
    %s673 = sld [smem:[#allocation2 + $0x6e]]
    %v674 = vstv %s673
    %v675 = vadd.f32 %v672, %v674
    %v676 = vmul.f32 %v635, %v654
    %s677 = sld [smem:[#allocation2 + $0x6b]]
    %v678 = vstv %s677
    %v679 = vmul.f32 %v676, %v678
    %s680 = sld [smem:[#allocation2 + $0x6f]]
    %v681 = vstv %s680
    %v682 = vadd.f32 %v679, %v681
    %s683 = sld [smem:[#allocation2 + $0x70]]
    %v684 = vstv %s683
    %v685 = vmul.f32 %v661, %v684
    %s686 = sld [smem:[#allocation2 + $0x74]]
    %v687 = vstv %s686
    %v688 = vmul.f32 %v668, %v687
    %v689 = vadd.f32 %v685, %v688
    %s690 = sld [smem:[#allocation2 + $0x78]]
    %v691 = vstv %s690
    %v692 = vmul.f32 %v675, %v691
    %v693 = vadd.f32 %v689, %v692
    %s694 = sld [smem:[#allocation2 + $0x7c]]
    %v695 = vstv %s694
    %v696 = vmul.f32 %v682, %v695
    %v697 = vadd.f32 %v693, %v696
    %s698 = sld [smem:[#allocation2 + $0x80]]
    %v699 = vstv %s698
    %v700 = vadd.f32 %v697, %v699
    %s701 = sld [smem:[#allocation2 + $0x71]]
    %v702 = vstv %s701
    %v703 = vmul.f32 %v661, %v702
    %s704 = sld [smem:[#allocation2 + $0x75]]
    %v705 = vstv %s704
    %v706 = vmul.f32 %v668, %v705
    %v707 = vadd.f32 %v703, %v706
    %s708 = sld [smem:[#allocation2 + $0x79]]
    %v709 = vstv %s708
    %v710 = vmul.f32 %v675, %v709
    %v711 = vadd.f32 %v707, %v710
    %s712 = sld [smem:[#allocation2 + $0x7d]]
    %v713 = vstv %s712
    %v714 = vmul.f32 %v682, %v713
    %v715 = vadd.f32 %v711, %v714
    %s716 = sld [smem:[#allocation2 + $0x81]]
    %v717 = vstv %s716
    %v718 = vadd.f32 %v715, %v717
    %s719 = sld [smem:[#allocation2 + $0x72]]
    %v720 = vstv %s719
    %v721 = vmul.f32 %v661, %v720
    %s722 = sld [smem:[#allocation2 + $0x76]]
    %v723 = vstv %s722
    %v724 = vmul.f32 %v668, %v723
    %v725 = vadd.f32 %v721, %v724
    %s726 = sld [smem:[#allocation2 + $0x7a]]
    %v727 = vstv %s726
    %v728 = vmul.f32 %v675, %v727
    %v729 = vadd.f32 %v725, %v728
    %s730 = sld [smem:[#allocation2 + $0x7e]]
    %v731 = vstv %s730
    %v732 = vmul.f32 %v682, %v731
    %v733 = vadd.f32 %v729, %v732
    %s734 = sld [smem:[#allocation2 + $0x82]]
    %v735 = vstv %s734
    %v736 = vadd.f32 %v733, %v735
    %s737 = sld [smem:[#allocation2 + $0x73]]
    %v738 = vstv %s737
    %v739 = vmul.f32 %v661, %v738
    %s740 = sld [smem:[#allocation2 + $0x77]]
    %v741 = vstv %s740
    %v742 = vmul.f32 %v668, %v741
    %v743 = vadd.f32 %v739, %v742
    %s744 = sld [smem:[#allocation2 + $0x7b]]
    %v745 = vstv %s744
    %v746 = vmul.f32 %v675, %v745
    %v747 = vadd.f32 %v743, %v746
    %s748 = sld [smem:[#allocation2 + $0x7f]]
    %v749 = vstv %s748
    %v750 = vmul.f32 %v682, %v749
    %v751 = vadd.f32 %v747, %v750
    %s752 = sld [smem:[#allocation2 + $0x83]]
    %v753 = vstv %s752
    %v754 = vadd.f32 %v751, %v753
    %v755 = vmul.f32 %v700, 0.5
    %v756 = vmul.f32 %v700, 0.044715
    %v757 = vmul.f32 %v756, %v700
    %v758 = vmul.f32 %v757, %v700
    %v759 = vadd.f32 %v700, %v758
    %v760 = vmul.f32 %v759, 0.7978846
    %v761 = vtanh.pop %v760
    %v762 = vadd.f32 %v761, 1.0
    %v763 = vmul.f32 %v755, %v762
    %v764 = vmul.f32 %v718, 0.5
    %v765 = vmul.f32 %v718, 0.044715
    %v766 = vmul.f32 %v765, %v718
    %v767 = vmul.f32 %v766, %v718
    %v768 = vadd.f32 %v718, %v767
    %v769 = vmul.f32 %v768, 0.7978846
    %v770 = vtanh.pop %v769
    %v771 = vadd.f32 %v770, 1.0
    %v772 = vmul.f32 %v764, %v771
    %v773 = vmul.f32 %v736, 0.5
    %v774 = vmul.f32 %v736, 0.044715
    %v775 = vmul.f32 %v774, %v736
    %v776 = vmul.f32 %v775, %v736
    %v777 = vadd.f32 %v736, %v776
    %v778 = vmul.f32 %v777, 0.7978846
    %v779 = vtanh.pop %v778
    %v780 = vadd.f32 %v779, 1.0
    %v781 = vmul.f32 %v773, %v780
    %v782 = vmul.f32 %v754, 0.5
    %v783 = vmul.f32 %v754, 0.044715
    %v784 = vmul.f32 %v783, %v754
    %v785 = vmul.f32 %v784, %v754
    %v786 = vadd.f32 %v754, %v785
    %v787 = vmul.f32 %v786, 0.7978846
    %v788 = vtanh.pop %v787
    %v789 = vadd.f32 %v788, 1.0
    %v790 = vmul.f32 %v782, %v789
    %s791 = sld [smem:[#allocation2 + $0x84]]
    %v792 = vstv %s791
    %v793 = vmul.f32 %v661, %v792
    %s794 = sld [smem:[#allocation2 + $0x88]]
    %v795 = vstv %s794
    %v796 = vmul.f32 %v668, %v795
    %v797 = vadd.f32 %v793, %v796
    %s798 = sld [smem:[#allocation2 + $0x8c]]
    %v799 = vstv %s798
    %v800 = vmul.f32 %v675, %v799
    %v801 = vadd.f32 %v797, %v800
    %s802 = sld [smem:[#allocation2 + $0x90]]
    %v803 = vstv %s802
    %v804 = vmul.f32 %v682, %v803
    %v805 = vadd.f32 %v801, %v804
    %s806 = sld [smem:[#allocation2 + $0x94]]
    %v807 = vstv %s806
    %v808 = vadd.f32 %v805, %v807
    %s809 = sld [smem:[#allocation2 + $0x85]]
    %v810 = vstv %s809
    %v811 = vmul.f32 %v661, %v810
    %s812 = sld [smem:[#allocation2 + $0x89]]
    %v813 = vstv %s812
    %v814 = vmul.f32 %v668, %v813
    %v815 = vadd.f32 %v811, %v814
    %s816 = sld [smem:[#allocation2 + $0x8d]]
    %v817 = vstv %s816
    %v818 = vmul.f32 %v675, %v817
    %v819 = vadd.f32 %v815, %v818
    %s820 = sld [smem:[#allocation2 + $0x91]]
    %v821 = vstv %s820
    %v822 = vmul.f32 %v682, %v821
    %v823 = vadd.f32 %v819, %v822
    %s824 = sld [smem:[#allocation2 + $0x95]]
    %v825 = vstv %s824
    %v826 = vadd.f32 %v823, %v825
    %s827 = sld [smem:[#allocation2 + $0x86]]
    %v828 = vstv %s827
    %v829 = vmul.f32 %v661, %v828
    %s830 = sld [smem:[#allocation2 + $0x8a]]
    %v831 = vstv %s830
    %v832 = vmul.f32 %v668, %v831
    %v833 = vadd.f32 %v829, %v832
    %s834 = sld [smem:[#allocation2 + $0x8e]]
    %v835 = vstv %s834
    %v836 = vmul.f32 %v675, %v835
    %v837 = vadd.f32 %v833, %v836
    %s838 = sld [smem:[#allocation2 + $0x92]]
    %v839 = vstv %s838
    %v840 = vmul.f32 %v682, %v839
    %v841 = vadd.f32 %v837, %v840
    %s842 = sld [smem:[#allocation2 + $0x96]]
    %v843 = vstv %s842
    %v844 = vadd.f32 %v841, %v843
    %s845 = sld [smem:[#allocation2 + $0x87]]
    %v846 = vstv %s845
    %v847 = vmul.f32 %v661, %v846
    %s848 = sld [smem:[#allocation2 + $0x8b]]
    %v849 = vstv %s848
    %v850 = vmul.f32 %v668, %v849
    %v851 = vadd.f32 %v847, %v850
    %s852 = sld [smem:[#allocation2 + $0x8f]]
    %v853 = vstv %s852
    %v854 = vmul.f32 %v675, %v853
    %v855 = vadd.f32 %v851, %v854
    %s856 = sld [smem:[#allocation2 + $0x93]]
    %v857 = vstv %s856
    %v858 = vmul.f32 %v682, %v857
    %v859 = vadd.f32 %v855, %v858
    %s860 = sld [smem:[#allocation2 + $0x97]]
    %v861 = vstv %s860
    %v862 = vadd.f32 %v859, %v861
    %v863 = vmul.f32 %v808, 0.5
    %v864 = vmul.f32 %v808, 0.044715
    %v865 = vmul.f32 %v864, %v808
    %v866 = vmul.f32 %v865, %v808
    %v867 = vadd.f32 %v808, %v866
    %v868 = vmul.f32 %v867, 0.7978846
    %v869 = vtanh.pop %v868
    %v870 = vadd.f32 %v869, 1.0
    %v871 = vmul.f32 %v863, %v870
    %v872 = vmul.f32 %v826, 0.5
    %v873 = vmul.f32 %v826, 0.044715
    %v874 = vmul.f32 %v873, %v826
    %v875 = vmul.f32 %v874, %v826
    %v876 = vadd.f32 %v826, %v875
    %v877 = vmul.f32 %v876, 0.7978846
    %v878 = vtanh.pop %v877
    %v879 = vadd.f32 %v878, 1.0
    %v880 = vmul.f32 %v872, %v879
    %v881 = vmul.f32 %v844, 0.5
    %v882 = vmul.f32 %v844, 0.044715
    %v883 = vmul.f32 %v882, %v844
    %v884 = vmul.f32 %v883, %v844
    %v885 = vadd.f32 %v844, %v884
    %v886 = vmul.f32 %v885, 0.7978846
    %v887 = vtanh.pop %v886
    %v888 = vadd.f32 %v887, 1.0
    %v889 = vmul.f32 %v881, %v888
    %v890 = vmul.f32 %v862, 0.5
    %v891 = vmul.f32 %v862, 0.044715
    %v892 = vmul.f32 %v891, %v862
    %v893 = vmul.f32 %v892, %v862
    %v894 = vadd.f32 %v862, %v893
    %v895 = vmul.f32 %v894, 0.7978846
    %v896 = vtanh.pop %v895
    %v897 = vadd.f32 %v896, 1.0
    %v898 = vmul.f32 %v890, %v897
    %v899 = vadd.f32 %v871, %v880
    %v900 = vadd.f32 %v899, %v889
    %v901 = vadd.f32 %v900, %v898
    %v902 = vmul.f32 %v901, 0.25
    %v903 = vsub.f32 %v871, %v902
    %v904 = vsub.f32 %v880, %v902
    %v905 = vsub.f32 %v889, %v902
    %v906 = vsub.f32 %v898, %v902
    %v907 = vmul.f32 %v903, %v903
    %v908 = vmul.f32 %v904, %v904
    %v909 = vadd.f32 %v907, %v908
    %v910 = vmul.f32 %v905, %v905
    %v911 = vadd.f32 %v909, %v910
    %v912 = vmul.f32 %v906, %v906
    %v913 = vadd.f32 %v911, %v912
    %v914 = vmul.f32 %v913, 0.25
    %v915 = vadd.f32 %v914, 1e-05
    %v916 = vrsqrt.pop %v915
    %v917 = vmul.f32 %v916, %v915
    %v918 = vmul.f32 %v917, %v916
    %v919 = vmul.f32 0.5, %v918
    %v920 = vsub.f32 1.5, %v919
    %v921 = vmul.f32 %v916, %v920
    %vm922 = vweird.f32 %v915
    %vm923 = vweird.f32 %v916
    %vm924 = vmor %vm922, %vm923
    %v925 = vsel %vm924, %v916, %v921
    %v926 = vmul.f32 %v903, %v925
    %s927 = sld [smem:[#allocation2 + $0x98]]
    %v928 = vstv %s927
    %v929 = vmul.f32 %v926, %v928
    %s930 = sld [smem:[#allocation2 + $0x9c]]
    %v931 = vstv %s930
    %v932 = vadd.f32 %v929, %v931
    %v933 = vmul.f32 %v904, %v925
    %s934 = sld [smem:[#allocation2 + $0x99]]
    %v935 = vstv %s934
    %v936 = vmul.f32 %v933, %v935
    %s937 = sld [smem:[#allocation2 + $0x9d]]
    %v938 = vstv %s937
    %v939 = vadd.f32 %v936, %v938
    %v940 = vmul.f32 %v905, %v925
    %s941 = sld [smem:[#allocation2 + $0x9a]]
    %v942 = vstv %s941
    %v943 = vmul.f32 %v940, %v942
    %s944 = sld [smem:[#allocation2 + $0x9e]]
    %v945 = vstv %s944
    %v946 = vadd.f32 %v943, %v945
    %v947 = vmul.f32 %v906, %v925
    %s948 = sld [smem:[#allocation2 + $0x9b]]
    %v949 = vstv %s948
    %v950 = vmul.f32 %v947, %v949
    %s951 = sld [smem:[#allocation2 + $0x9f]]
    %v952 = vstv %s951
    %v953 = vadd.f32 %v950, %v952
    %v954 = vpack.c.bf16 %v166, %v166
    %955 = vst [vmem:[%s2] sm:$0xf] %v954
    %v956 = vpack.c.bf16 %v175, %v175
    %s957 = scalar_lea.vmem %s2, 4
    %958 = vst [vmem:[%s957] sm:$0xf] %v956
    %v959 = vpack.c.bf16 %v184, %v184
    %s960 = scalar_lea.vmem %s2, 8
    %961 = vst [vmem:[%s960] sm:$0xf] %v959
    %v962 = vpack.c.bf16 %v193, %v193
    %s963 = scalar_lea.vmem %s2, 12
    %964 = vst [vmem:[%s963] sm:$0xf] %v962
    %v965 = vpack.c.bf16 %v274, %v274
    %s966 = scalar_lea.vmem %s2, 16
    %967 = vst [vmem:[%s966] sm:$0xf] %v965
    %v968 = vpack.c.bf16 %v283, %v283
    %s969 = scalar_lea.vmem %s2, 20
    %970 = vst [vmem:[%s969] sm:$0xf] %v968
    %v971 = vpack.c.bf16 %v292, %v292
    %s972 = scalar_lea.vmem %s2, 24
    %973 = vst [vmem:[%s972] sm:$0xf] %v971
    %v974 = vpack.c.bf16 %v301, %v301
    %s975 = scalar_lea.vmem %s2, 28
    %976 = vst [vmem:[%s975] sm:$0xf] %v974
    %v977 = vpack.c.bf16 %v437, %v437
    %s978 = scalar_lea.vmem %s2, 32
    %979 = vst [vmem:[%s978] sm:$0xf] %v977
    %v980 = vpack.c.bf16 %v446, %v446
    %s981 = scalar_lea.vmem %s2, 36
    %982 = vst [vmem:[%s981] sm:$0xf] %v980
    %v983 = vpack.c.bf16 %v455, %v455
    %s984 = scalar_lea.vmem %s2, 40
    %985 = vst [vmem:[%s984] sm:$0xf] %v983
    %v986 = vpack.c.bf16 %v464, %v464
    %s987 = scalar_lea.vmem %s2, 44
    %988 = vst [vmem:[%s987] sm:$0xf] %v986
    %v989 = vpack.c.bf16 %v763, %v763
    %s990 = scalar_lea.vmem %s2, 48
    %991 = vst [vmem:[%s990] sm:$0xf] %v989
    %v992 = vpack.c.bf16 %v772, %v772
    %s993 = scalar_lea.vmem %s2, 52
    %994 = vst [vmem:[%s993] sm:$0xf] %v992
    %v995 = vpack.c.bf16 %v781, %v781
    %s996 = scalar_lea.vmem %s2, 56
    %997 = vst [vmem:[%s996] sm:$0xf] %v995
    %v998 = vpack.c.bf16 %v790, %v790
    %s999 = scalar_lea.vmem %s2, 60
    %1000 = vst [vmem:[%s999] sm:$0xf] %v998
    %v1001 = vpack.c.bf16 %v606, %v606
    %1002 = vst [vmem:[%s3] sm:$0xf] %v1001
    %v1003 = vpack.c.bf16 %v932, %v932
    %1004 = vst [vmem:[%s4] sm:$0xf] %v1003
    %v1005 = vpack.c.bf16 %v613, %v613
    %s1006 = scalar_lea.vmem %s3, 4
    %1007 = vst [vmem:[%s1006] sm:$0xf] %v1005
    %v1008 = vpack.c.bf16 %v939, %v939
    %s1009 = scalar_lea.vmem %s4, 4
    %1010 = vst [vmem:[%s1009] sm:$0xf] %v1008
    %v1011 = vpack.c.bf16 %v620, %v620
    %s1012 = scalar_lea.vmem %s3, 8
    %1013 = vst [vmem:[%s1012] sm:$0xf] %v1011
    %v1014 = vpack.c.bf16 %v946, %v946
    %s1015 = scalar_lea.vmem %s4, 8
    %1016 = vst [vmem:[%s1015] sm:$0xf] %v1014
    %v1017 = vpack.c.bf16 %v627, %v627
    %s1018 = scalar_lea.vmem %s3, 12
    %1019 = vst [vmem:[%s1018] sm:$0xf] %v1017
    %v1020 = vpack.c.bf16 %v953, %v953
    %s1021 = scalar_lea.vmem %s4, 12
    %1022 = vst [vmem:[%s1021] sm:$0xf] %v1020
    // Predicated region
    $region14: #{multi_axis_gmlp_forward.4} parent=1 // pred_check
      _
    $region15: #{multi_axis_gmlp_forward.4} parent=1 // pred_check_branch
      %1024 = sbr.rel (0) target = $region17
    $region16: #{multi_axis_gmlp_forward.4} parent=1 // pred_region
      _
    $region17: #{multi_axis_gmlp_forward.4} parent=1 // pred_fallthru
      _
    // Predicated region
    $region18: #{multi_axis_gmlp_forward.4} parent=1 // pred_check
      _
    $region19: #{multi_axis_gmlp_forward.4} parent=1 // pred_check_branch
      %1026 = sbr.rel (0) target = $region21
    $region20: #{multi_axis_gmlp_forward.4} parent=1 // pred_region
      _
    $region21: #{multi_axis_gmlp_forward.4} parent=1 // pred_fallthru
      _
    // Predicated region
    $region22: #{multi_axis_gmlp_forward.4} parent=1 // pred_check
      _
    $region23: #{multi_axis_gmlp_forward.4} parent=1 // pred_check_branch
      %1028 = sbr.rel (0) target = $region25
    $region24: #{multi_axis_gmlp_forward.4} parent=1 // pred_region
      _
    $region25: #{multi_axis_gmlp_forward.4} parent=1 // pred_fallthru
      _
    // Predicated region
    $region26: #{multi_axis_gmlp_forward.4} parent=1 // pred_check
      _
    $region27: #{multi_axis_gmlp_forward.4} parent=1 // pred_check_branch
      %1030 = sbr.rel (0) target = $region29
    $region28: #{multi_axis_gmlp_forward.4} parent=1 // pred_region
      _
    $region29: #{multi_axis_gmlp_forward.4} parent=1 // pred_fallthru
      _
    // Predicated region
    $region30: #{multi_axis_gmlp_forward.4} parent=1 // pred_check
      _
    $region31: #{multi_axis_gmlp_forward.4} parent=1 // pred_check_branch
      %1032 = sbr.rel (0) target = $region33
    $region32: #{multi_axis_gmlp_forward.4} parent=1 // pred_region
      _
    $region33: #{multi_axis_gmlp_forward.4} parent=1 // pred_fallthru
      _
    // Predicated region
    $region34: #{multi_axis_gmlp_forward.4} parent=1 // pred_check
      _
    $region35: #{multi_axis_gmlp_forward.4} parent=1 // pred_check_branch
      %1034 = sbr.rel (0) target = $region37
    $region36: #{multi_axis_gmlp_forward.4} parent=1 // pred_region
      _
    $region37: #{multi_axis_gmlp_forward.4} parent=1 // pred_fallthru
      _
    %1035 = vsyncpa [#allocation3], 1

// kernel: multi_axis_gmlp_forward.6
$region0: #{multi_axis_gmlp_forward.6}
  #allocation0 [shape = 'u32[]', space=smem, size = 0x4, offset = 0x4, fixed_abs, tag = 'smem constant byte address 0x4 - core index']
  #allocation1 [shape = 'u32[72,128]{1,0:T(1,128)}', space=vmem, size = 0x9000, scoped, tag = 'internal scratch']
  %s0 = inlined_call_operand.vmem [shape: bf16[8,512], index: 0, kind: input, shape index: {}]
  %s1 = inlined_call_operand.vmem [shape: bf16[8,8], index: 1, kind: input, shape index: {}]
  %s2 = inlined_call_operand.vmem [shape: f32[8,1], index: 2, kind: input, shape index: {}]
  %s3 = inlined_call_operand.vmem [shape: bf16[8,512], index: 3, kind: output, shape index: {}]
  %s4 = sld [smem:[#allocation0]]
  $region22: #{multi_axis_gmlp_forward.6} parent=0
    _
  %s6 = ssub.s32 1, %s4
  %s7 = scalar_select 0, %s6, %s4
  // Predicated region
  $region2: #{multi_axis_gmlp_forward.6} parent=0 // pred_check
    _
  $region3: #{multi_axis_gmlp_forward.6} parent=0 // pred_check_branch
    %9 = sbr.rel (0) target = $region5
  $region4: #{multi_axis_gmlp_forward.6} parent=0 // pred_region
    _
  $region5: #{multi_axis_gmlp_forward.6} parent=0 // pred_fallthru
    _
  // Predicated region
  $region6: #{multi_axis_gmlp_forward.6} parent=0 // pred_check
    _
  $region7: #{multi_axis_gmlp_forward.6} parent=0 // pred_check_branch
    %11 = sbr.rel (0) target = $region9
  $region8: #{multi_axis_gmlp_forward.6} parent=0 // pred_region
    _
  $region9: #{multi_axis_gmlp_forward.6} parent=0 // pred_fallthru
    _
  // Predicated region
  $region10: #{multi_axis_gmlp_forward.6} parent=0 // pred_check
    _
  $region11: #{multi_axis_gmlp_forward.6} parent=0 // pred_check_branch
    %13 = sbr.rel (0) target = $region13
  $region12: #{multi_axis_gmlp_forward.6} parent=0 // pred_region
    _
  $region13: #{multi_axis_gmlp_forward.6} parent=0 // pred_fallthru
    _
  %v15 = vld [vmem:[%s1] sm:$0xf]
  %v16 = vld [vmem:[%s0] sm:$0xff]
  %v17 = vld [vmem:[%s0 + $0x8] sm:$0xff]
  %v18 = vld [vmem:[%s2] sm:$0xff]
  %20 = vset.pattern.permute.xlu0 0
  %21 = vperm.xlu0 %20, %v18
  %v22 = vpop.permute.xlu0 %21
  %v26 = vunpack.c.l.b16 %v16
  %v27 = vunpack.c.h.b16 %v16
  %v28 = vunpack.c.l.b16 %v17
  %v29 = vunpack.c.h.b16 %v17
  %v30 = vpack.c.b16 %v26, %v26
  %v31 = vpack.c.b16 %v27, %v27
  %v32 = vpack.c.b16 %v28, %v28
  %v33 = vpack.c.b16 %v29, %v29
  %vm34 = vcmask 64512
  %v36 = vsel %vm34, %v15, 0
  %vm38 = vcmask 1043456
  %v40 = vsel %vm38, %v30, 0
  %v43 = vsel %vm38, %v31, 0
  %v46 = vsel %vm38, %v32, 0
  %v49 = vsel %vm38, %v33, 0
  %51 = vmatpush.bf16.msra.mxu0 0
  %52 = vmatpush.bf16.msra.mxu0 0
  %53 = vmatpush.bf16.msra.mxu0 0
  %54 = vmatpush.bf16.msra.mxu0 0
  %55 = vmatpush.bf16.msra.mxu0 0
  %56 = vmatpush.bf16.msra.mxu0 0
  %57 = vmatpush.bf16.msra.mxu0 0
  %58 = vmatpush.bf16.msra.mxu0 %v40
  %59 = vmatmul.bf16.gmra.mxu0 %v36
  %v60 = vpop.f32.mrf.mxu0
  %v61 = vadd.f32 %v22, %v60
  %v62 = vpop.f32.mrf.mxu0
  %63 = vdwg.mxu0
  %64 = vmatpush.bf16.msra.mxu0 0
  %65 = vmatpush.bf16.msra.mxu0 0
  %66 = vmatpush.bf16.msra.mxu0 0
  %67 = vmatpush.bf16.msra.mxu0 0
  %68 = vmatpush.bf16.msra.mxu0 0
  %69 = vmatpush.bf16.msra.mxu0 0
  %70 = vmatpush.bf16.msra.mxu0 0
  %71 = vmatpush.bf16.msra.mxu0 %v43
  %72 = vmatmul.bf16.gmra.mxu0 %v36
  %v73 = vpop.f32.mrf.mxu0
  %v74 = vadd.f32 %v22, %v73
  %v75 = vpop.f32.mrf.mxu0
  %76 = vdwg.mxu0
  %77 = vmatpush.bf16.msra.mxu0 0
  %78 = vmatpush.bf16.msra.mxu0 0
  %79 = vmatpush.bf16.msra.mxu0 0
  %80 = vmatpush.bf16.msra.mxu0 0
  %81 = vmatpush.bf16.msra.mxu0 0
  %82 = vmatpush.bf16.msra.mxu0 0
  %83 = vmatpush.bf16.msra.mxu0 0
  %84 = vmatpush.bf16.msra.mxu0 %v46
  %85 = vmatmul.bf16.gmra.mxu0 %v36
  %v86 = vpop.f32.mrf.mxu0
  %v87 = vadd.f32 %v22, %v86
  %v88 = vpop.f32.mrf.mxu0
  %89 = vdwg.mxu0
  %90 = vmatpush.bf16.msra.mxu0 0
  %91 = vmatpush.bf16.msra.mxu0 0
  %92 = vmatpush.bf16.msra.mxu0 0
  %93 = vmatpush.bf16.msra.mxu0 0
  %94 = vmatpush.bf16.msra.mxu0 0
  %95 = vmatpush.bf16.msra.mxu0 0
  %96 = vmatpush.bf16.msra.mxu0 0
  %97 = vmatpush.bf16.msra.mxu0 %v49
  %98 = vmatmul.bf16.gmra.mxu0 %v36
  %v99 = vpop.f32.mrf.mxu0
  %v100 = vadd.f32 %v22, %v99
  %v101 = vpop.f32.mrf.mxu0
  %102 = vdwg.mxu0
  %v103 = vpack.c.bf16 %v74, %v61
  %v104 = vpack.c.bf16 %v100, %v87
  %105 = vst [vmem:[%s3] sm:$0xff] %v103
  %106 = vst [vmem:[%s3 + $0x8] sm:$0xff] %v104
  // Predicated region
  $region14: #{multi_axis_gmlp_forward.6} parent=0 // pred_check
    _
  $region15: #{multi_axis_gmlp_forward.6} parent=0 // pred_check_branch
    %108 = sbr.rel (0) target = $region17
  $region16: #{multi_axis_gmlp_forward.6} parent=0 // pred_region
    _
  $region17: #{multi_axis_gmlp_forward.6} parent=0 // pred_fallthru
    _
  // Predicated region
  $region18: #{multi_axis_gmlp_forward.6} parent=0 // pred_check
    _
  $region19: #{multi_axis_gmlp_forward.6} parent=0 // pred_check_branch
    %110 = sbr.rel (0) target = $region21
  $region20: #{multi_axis_gmlp_forward.6} parent=0 // pred_region
    _
  $region21: #{multi_axis_gmlp_forward.6} parent=0 // pred_fallthru
    _

// kernel: multi_axis_gmlp_forward.7
$region0: #{multi_axis_gmlp_forward.7}
  #allocation0 [shape = 'u32[]', space=smem, size = 0x4, offset = 0x4, fixed_abs, tag = 'smem constant byte address 0x4 - core index']
  #allocation1 [shape = 'u32[72,128]{1,0:T(1,128)}', space=vmem, size = 0x9000, scoped, tag = 'internal scratch']
  %s0 = inlined_call_operand.vmem [shape: f32[76], index: 0, kind: input, shape index: {}]
  %s1 = inlined_call_operand.vmem [shape: bf16[16,8,128], index: 1, kind: input, shape index: {}]
  %s2 = inlined_call_operand.vmem [shape: bf16[4,8,128], index: 2, kind: input, shape index: {}]
  %s3 = inlined_call_operand.vmem [shape: bf16[4,8,128], index: 3, kind: input, shape index: {}]
  %s4 = inlined_call_operand.vmem [shape: f32[4,8,128], index: 4, kind: input, shape index: {}]
  %s5 = inlined_call_operand.vmem [shape: f32[4,8,128], index: 5, kind: output, shape index: {}]
  %s6 = sld [smem:[#allocation0]]
  $region34: #{multi_axis_gmlp_forward.7} parent=0
    _
  %s8 = ssub.s32 1, %s6
  %s9 = scalar_select 0, %s8, %s6
  $region1: #{multi_axis_gmlp_forward.7} parent=0
    #allocation2 [shape = 'u8[512]{0}', space=smem, size = 0x200, scoped, tag = 'input window, operand 0, single buffered']
    #allocation3 [shape = 's32[1]{0}', space=sflag, size = 0x4, scoped, tag = 'scoped memory for multi_axis_gmlp_forward.7']
    %10 = vsyncpa [#allocation3], 0
    // Predicated region
    $region2: #{multi_axis_gmlp_forward.7} parent=1 // pred_check
      _
    $region3: #{multi_axis_gmlp_forward.7} parent=1 // pred_check_branch
      %12 = sbr.rel (0) target = $region5
    $region4: #{multi_axis_gmlp_forward.7} parent=1 // pred_region
      %14 = vsyncadd [#allocation3], 0
      %s16 = sshll.u32 %s0, 4
      %s17 = int_to_ptr.vmem [resolvable:$true] %s16
      %19 = dma.vmem_to_smem %s17, 16, [#allocation2], [#allocation3]
    $region5: #{multi_axis_gmlp_forward.7} parent=1 // pred_fallthru
      _
    // Predicated region
    $region6: #{multi_axis_gmlp_forward.7} parent=1 // pred_check
      _
    $region7: #{multi_axis_gmlp_forward.7} parent=1 // pred_check_branch
      %21 = sbr.rel (0) target = $region9
    $region8: #{multi_axis_gmlp_forward.7} parent=1 // pred_region
      _
    $region9: #{multi_axis_gmlp_forward.7} parent=1 // pred_fallthru
      _
    // Predicated region
    $region10: #{multi_axis_gmlp_forward.7} parent=1 // pred_check
      _
    $region11: #{multi_axis_gmlp_forward.7} parent=1 // pred_check_branch
      %23 = sbr.rel (0) target = $region13
    $region12: #{multi_axis_gmlp_forward.7} parent=1 // pred_region
      _
    $region13: #{multi_axis_gmlp_forward.7} parent=1 // pred_fallthru
      _
    // Predicated region
    $region14: #{multi_axis_gmlp_forward.7} parent=1 // pred_check
      _
    $region15: #{multi_axis_gmlp_forward.7} parent=1 // pred_check_branch
      %25 = sbr.rel (0) target = $region17
    $region16: #{multi_axis_gmlp_forward.7} parent=1 // pred_region
      _
    $region17: #{multi_axis_gmlp_forward.7} parent=1 // pred_fallthru
      _
    // Predicated region
    $region18: #{multi_axis_gmlp_forward.7} parent=1 // pred_check
      _
    $region19: #{multi_axis_gmlp_forward.7} parent=1 // pred_check_branch
      %27 = sbr.rel (0) target = $region21
    $region20: #{multi_axis_gmlp_forward.7} parent=1 // pred_region
      _
    $region21: #{multi_axis_gmlp_forward.7} parent=1 // pred_fallthru
      _
    // Predicated region
    $region22: #{multi_axis_gmlp_forward.7} parent=1 // pred_check
      _
    $region23: #{multi_axis_gmlp_forward.7} parent=1 // pred_check_branch
      %29 = sbr.rel (0) target = $region25
    $region24: #{multi_axis_gmlp_forward.7} parent=1 // pred_region
      %31 = dma.done [#allocation3], 16
    $region25: #{multi_axis_gmlp_forward.7} parent=1 // pred_fallthru
      _
    %32 = sfence
    %v33 = vld [vmem:[%s1] sm:$0xf]
    %v34 = vld [vmem:[%s1 + $0x4] sm:$0xf]
    %v35 = vld [vmem:[%s1 + $0x8] sm:$0xf]
    %v36 = vld [vmem:[%s1 + $0xc] sm:$0xf]
    %v37 = vld [vmem:[%s1 + $0x10] sm:$0xf]
    %v38 = vld [vmem:[%s1 + $0x14] sm:$0xf]
    %v39 = vld [vmem:[%s1 + $0x18] sm:$0xf]
    %v40 = vld [vmem:[%s1 + $0x1c] sm:$0xf]
    %v41 = vld [vmem:[%s1 + $0x20] sm:$0xf]
    %v42 = vld [vmem:[%s1 + $0x24] sm:$0xf]
    %v43 = vld [vmem:[%s1 + $0x28] sm:$0xf]
    %v44 = vld [vmem:[%s1 + $0x2c] sm:$0xf]
    %v45 = vld [vmem:[%s1 + $0x30] sm:$0xf]
    %v46 = vld [vmem:[%s1 + $0x34] sm:$0xf]
    %v47 = vld [vmem:[%s1 + $0x38] sm:$0xf]
    %v48 = vld [vmem:[%s1 + $0x3c] sm:$0xf]
    %v49 = vunpack.c.l.bf16 %v33
    %v50 = vunpack.c.l.bf16 %v34
    %v51 = vunpack.c.l.bf16 %v35
    %v52 = vunpack.c.l.bf16 %v36
    %v53 = vunpack.c.l.bf16 %v37
    %v54 = vunpack.c.l.bf16 %v38
    %v55 = vunpack.c.l.bf16 %v39
    %v56 = vunpack.c.l.bf16 %v40
    %v57 = vunpack.c.l.bf16 %v41
    %v58 = vunpack.c.l.bf16 %v42
    %v59 = vunpack.c.l.bf16 %v43
    %v60 = vunpack.c.l.bf16 %v44
    %v61 = vunpack.c.l.bf16 %v45
    %v62 = vunpack.c.l.bf16 %v46
    %v63 = vunpack.c.l.bf16 %v47
    %v64 = vunpack.c.l.bf16 %v48
    %v65 = vld [vmem:[%s2] sm:$0xf]
    %v66 = vld [vmem:[%s2 + $0x4] sm:$0xf]
    %v67 = vld [vmem:[%s2 + $0x8] sm:$0xf]
    %v68 = vld [vmem:[%s2 + $0xc] sm:$0xf]
    %v69 = vunpack.c.l.bf16 %v65
    %v70 = vunpack.c.l.bf16 %v66
    %v71 = vunpack.c.l.bf16 %v67
    %v72 = vunpack.c.l.bf16 %v68
    %v73 = vld [vmem:[%s3] sm:$0xf]
    %v74 = vld [vmem:[%s3 + $0x4] sm:$0xf]
    %v75 = vld [vmem:[%s3 + $0x8] sm:$0xf]
    %v76 = vld [vmem:[%s3 + $0xc] sm:$0xf]
    %v77 = vunpack.c.l.bf16 %v73
    %v78 = vunpack.c.l.bf16 %v74
    %v79 = vunpack.c.l.bf16 %v75
    %v80 = vunpack.c.l.bf16 %v76
    %v81 = vadd.f32 %v69, 1.0
    %v82 = vmul.f32 %v57, %v81
    %v83 = vadd.f32 %v70, 1.0
    %v84 = vmul.f32 %v58, %v83
    %v85 = vadd.f32 %v71, 1.0
    %v86 = vmul.f32 %v59, %v85
    %v87 = vadd.f32 %v72, 1.0
    %v88 = vmul.f32 %v60, %v87
    %v89 = vadd.f32 %v77, 1.0
    %v90 = vmul.f32 %v61, %v89
    %v91 = vadd.f32 %v78, 1.0
    %v92 = vmul.f32 %v62, %v91
    %v93 = vadd.f32 %v79, 1.0
    %v94 = vmul.f32 %v63, %v93
    %v95 = vadd.f32 %v80, 1.0
    %v96 = vmul.f32 %v64, %v95
    %s97 = sld [smem:[#allocation2]]
    %v98 = vstv %s97
    %v99 = vmul.f32 %v82, %v98
    %s100 = sld [smem:[#allocation2 + $0x4]]
    %v101 = vstv %s100
    %v102 = vmul.f32 %v84, %v101
    %v103 = vadd.f32 %v99, %v102
    %s104 = sld [smem:[#allocation2 + $0x8]]
    %v105 = vstv %s104
    %v106 = vmul.f32 %v86, %v105
    %v107 = vadd.f32 %v103, %v106
    %s108 = sld [smem:[#allocation2 + $0xc]]
    %v109 = vstv %s108
    %v110 = vmul.f32 %v88, %v109
    %v111 = vadd.f32 %v107, %v110
    %s112 = sld [smem:[#allocation2 + $0x10]]
    %v113 = vstv %s112
    %v114 = vadd.f32 %v111, %v113
    %s115 = sld [smem:[#allocation2 + $0x1]]
    %v116 = vstv %s115
    %v117 = vmul.f32 %v82, %v116
    %s118 = sld [smem:[#allocation2 + $0x5]]
    %v119 = vstv %s118
    %v120 = vmul.f32 %v84, %v119
    %v121 = vadd.f32 %v117, %v120
    %s122 = sld [smem:[#allocation2 + $0x9]]
    %v123 = vstv %s122
    %v124 = vmul.f32 %v86, %v123
    %v125 = vadd.f32 %v121, %v124
    %s126 = sld [smem:[#allocation2 + $0xd]]
    %v127 = vstv %s126
    %v128 = vmul.f32 %v88, %v127
    %v129 = vadd.f32 %v125, %v128
    %s130 = sld [smem:[#allocation2 + $0x11]]
    %v131 = vstv %s130
    %v132 = vadd.f32 %v129, %v131
    %s133 = sld [smem:[#allocation2 + $0x2]]
    %v134 = vstv %s133
    %v135 = vmul.f32 %v82, %v134
    %s136 = sld [smem:[#allocation2 + $0x6]]
    %v137 = vstv %s136
    %v138 = vmul.f32 %v84, %v137
    %v139 = vadd.f32 %v135, %v138
    %s140 = sld [smem:[#allocation2 + $0xa]]
    %v141 = vstv %s140
    %v142 = vmul.f32 %v86, %v141
    %v143 = vadd.f32 %v139, %v142
    %s144 = sld [smem:[#allocation2 + $0xe]]
    %v145 = vstv %s144
    %v146 = vmul.f32 %v88, %v145
    %v147 = vadd.f32 %v143, %v146
    %s148 = sld [smem:[#allocation2 + $0x12]]
    %v149 = vstv %s148
    %v150 = vadd.f32 %v147, %v149
    %s151 = sld [smem:[#allocation2 + $0x3]]
    %v152 = vstv %s151
    %v153 = vmul.f32 %v82, %v152
    %s154 = sld [smem:[#allocation2 + $0x7]]
    %v155 = vstv %s154
    %v156 = vmul.f32 %v84, %v155
    %v157 = vadd.f32 %v153, %v156
    %s158 = sld [smem:[#allocation2 + $0xb]]
    %v159 = vstv %s158
    %v160 = vmul.f32 %v86, %v159
    %v161 = vadd.f32 %v157, %v160
    %s162 = sld [smem:[#allocation2 + $0xf]]
    %v163 = vstv %s162
    %v164 = vmul.f32 %v88, %v163
    %v165 = vadd.f32 %v161, %v164
    %s166 = sld [smem:[#allocation2 + $0x13]]
    %v167 = vstv %s166
    %v168 = vadd.f32 %v165, %v167
    %v169 = vadd.f32 %v114, %v49
    %v170 = vadd.f32 %v132, %v50
    %v171 = vadd.f32 %v150, %v51
    %v172 = vadd.f32 %v168, %v52
    %s173 = sld [smem:[#allocation2 + $0x14]]
    %v174 = vstv %s173
    %v175 = vmul.f32 %v90, %v174
    %s176 = sld [smem:[#allocation2 + $0x18]]
    %v177 = vstv %s176
    %v178 = vmul.f32 %v92, %v177
    %v179 = vadd.f32 %v175, %v178
    %s180 = sld [smem:[#allocation2 + $0x1c]]
    %v181 = vstv %s180
    %v182 = vmul.f32 %v94, %v181
    %v183 = vadd.f32 %v179, %v182
    %s184 = sld [smem:[#allocation2 + $0x20]]
    %v185 = vstv %s184
    %v186 = vmul.f32 %v96, %v185
    %v187 = vadd.f32 %v183, %v186
    %s188 = sld [smem:[#allocation2 + $0x24]]
    %v189 = vstv %s188
    %v190 = vadd.f32 %v187, %v189
    %s191 = sld [smem:[#allocation2 + $0x15]]
    %v192 = vstv %s191
    %v193 = vmul.f32 %v90, %v192
    %s194 = sld [smem:[#allocation2 + $0x19]]
    %v195 = vstv %s194
    %v196 = vmul.f32 %v92, %v195
    %v197 = vadd.f32 %v193, %v196
    %s198 = sld [smem:[#allocation2 + $0x1d]]
    %v199 = vstv %s198
    %v200 = vmul.f32 %v94, %v199
    %v201 = vadd.f32 %v197, %v200
    %s202 = sld [smem:[#allocation2 + $0x21]]
    %v203 = vstv %s202
    %v204 = vmul.f32 %v96, %v203
    %v205 = vadd.f32 %v201, %v204
    %s206 = sld [smem:[#allocation2 + $0x25]]
    %v207 = vstv %s206
    %v208 = vadd.f32 %v205, %v207
    %s209 = sld [smem:[#allocation2 + $0x16]]
    %v210 = vstv %s209
    %v211 = vmul.f32 %v90, %v210
    %s212 = sld [smem:[#allocation2 + $0x1a]]
    %v213 = vstv %s212
    %v214 = vmul.f32 %v92, %v213
    %v215 = vadd.f32 %v211, %v214
    %s216 = sld [smem:[#allocation2 + $0x1e]]
    %v217 = vstv %s216
    %v218 = vmul.f32 %v94, %v217
    %v219 = vadd.f32 %v215, %v218
    %s220 = sld [smem:[#allocation2 + $0x22]]
    %v221 = vstv %s220
    %v222 = vmul.f32 %v96, %v221
    %v223 = vadd.f32 %v219, %v222
    %s224 = sld [smem:[#allocation2 + $0x26]]
    %v225 = vstv %s224
    %v226 = vadd.f32 %v223, %v225
    %s227 = sld [smem:[#allocation2 + $0x17]]
    %v228 = vstv %s227
    %v229 = vmul.f32 %v90, %v228
    %s230 = sld [smem:[#allocation2 + $0x1b]]
    %v231 = vstv %s230
    %v232 = vmul.f32 %v92, %v231
    %v233 = vadd.f32 %v229, %v232
    %s234 = sld [smem:[#allocation2 + $0x1f]]
    %v235 = vstv %s234
    %v236 = vmul.f32 %v94, %v235
    %v237 = vadd.f32 %v233, %v236
    %s238 = sld [smem:[#allocation2 + $0x23]]
    %v239 = vstv %s238
    %v240 = vmul.f32 %v96, %v239
    %v241 = vadd.f32 %v237, %v240
    %s242 = sld [smem:[#allocation2 + $0x27]]
    %v243 = vstv %s242
    %v244 = vadd.f32 %v241, %v243
    %v245 = vadd.f32 %v190, %v53
    %v246 = vadd.f32 %v208, %v54
    %v247 = vadd.f32 %v226, %v55
    %v248 = vadd.f32 %v244, %v56
    %v249 = vld [vmem:[%s4] sm:$0xff]
    %v250 = vld [vmem:[%s4 + $0x8] sm:$0xff]
    %v251 = vld [vmem:[%s4 + $0x10] sm:$0xff]
    %v252 = vld [vmem:[%s4 + $0x18] sm:$0xff]
    %s253 = sld [smem:[#allocation2 + $0x28]]
    %v254 = vstv %s253
    %v255 = vmul.f32 %v169, %v254
    %s256 = sld [smem:[#allocation2 + $0x2c]]
    %v257 = vstv %s256
    %v258 = vmul.f32 %v170, %v257
    %v259 = vadd.f32 %v255, %v258
    %s260 = sld [smem:[#allocation2 + $0x30]]
    %v261 = vstv %s260
    %v262 = vmul.f32 %v171, %v261
    %v263 = vadd.f32 %v259, %v262
    %s264 = sld [smem:[#allocation2 + $0x34]]
    %v265 = vstv %s264
    %v266 = vmul.f32 %v172, %v265
    %v267 = vadd.f32 %v263, %v266
    %s268 = sld [smem:[#allocation2 + $0x38]]
    %v269 = vstv %s268
    %v270 = vmul.f32 %v245, %v269
    %v271 = vadd.f32 %v267, %v270
    %s272 = sld [smem:[#allocation2 + $0x3c]]
    %v273 = vstv %s272
    %v274 = vmul.f32 %v246, %v273
    %v275 = vadd.f32 %v271, %v274
    %s276 = sld [smem:[#allocation2 + $0x40]]
    %v277 = vstv %s276
    %v278 = vmul.f32 %v247, %v277
    %v279 = vadd.f32 %v275, %v278
    %s280 = sld [smem:[#allocation2 + $0x44]]
    %v281 = vstv %s280
    %v282 = vmul.f32 %v248, %v281
    %v283 = vadd.f32 %v279, %v282
    %s284 = sld [smem:[#allocation2 + $0x48]]
    %v285 = vstv %s284
    %v286 = vadd.f32 %v283, %v285
    %v287 = vadd.f32 %v286, %v249
    %288 = vst [vmem:[%s5] sm:$0xff] %v287
    %s289 = sld [smem:[#allocation2 + $0x29]]
    %v290 = vstv %s289
    %v291 = vmul.f32 %v169, %v290
    %s292 = sld [smem:[#allocation2 + $0x2d]]
    %v293 = vstv %s292
    %v294 = vmul.f32 %v170, %v293
    %v295 = vadd.f32 %v291, %v294
    %s296 = sld [smem:[#allocation2 + $0x31]]
    %v297 = vstv %s296
    %v298 = vmul.f32 %v171, %v297
    %v299 = vadd.f32 %v295, %v298
    %s300 = sld [smem:[#allocation2 + $0x35]]
    %v301 = vstv %s300
    %v302 = vmul.f32 %v172, %v301
    %v303 = vadd.f32 %v299, %v302
    %s304 = sld [smem:[#allocation2 + $0x39]]
    %v305 = vstv %s304
    %v306 = vmul.f32 %v245, %v305
    %v307 = vadd.f32 %v303, %v306
    %s308 = sld [smem:[#allocation2 + $0x3d]]
    %v309 = vstv %s308
    %v310 = vmul.f32 %v246, %v309
    %v311 = vadd.f32 %v307, %v310
    %s312 = sld [smem:[#allocation2 + $0x41]]
    %v313 = vstv %s312
    %v314 = vmul.f32 %v247, %v313
    %v315 = vadd.f32 %v311, %v314
    %s316 = sld [smem:[#allocation2 + $0x45]]
    %v317 = vstv %s316
    %v318 = vmul.f32 %v248, %v317
    %v319 = vadd.f32 %v315, %v318
    %s320 = sld [smem:[#allocation2 + $0x49]]
    %v321 = vstv %s320
    %v322 = vadd.f32 %v319, %v321
    %v323 = vadd.f32 %v322, %v250
    %s324 = scalar_lea.vmem %s5, 8
    %325 = vst [vmem:[%s324] sm:$0xff] %v323
    %s326 = sld [smem:[#allocation2 + $0x2a]]
    %v327 = vstv %s326
    %v328 = vmul.f32 %v169, %v327
    %s329 = sld [smem:[#allocation2 + $0x2e]]
    %v330 = vstv %s329
    %v331 = vmul.f32 %v170, %v330
    %v332 = vadd.f32 %v328, %v331
    %s333 = sld [smem:[#allocation2 + $0x32]]
    %v334 = vstv %s333
    %v335 = vmul.f32 %v171, %v334
    %v336 = vadd.f32 %v332, %v335
    %s337 = sld [smem:[#allocation2 + $0x36]]
    %v338 = vstv %s337
    %v339 = vmul.f32 %v172, %v338
    %v340 = vadd.f32 %v336, %v339
    %s341 = sld [smem:[#allocation2 + $0x3a]]
    %v342 = vstv %s341
    %v343 = vmul.f32 %v245, %v342
    %v344 = vadd.f32 %v340, %v343
    %s345 = sld [smem:[#allocation2 + $0x3e]]
    %v346 = vstv %s345
    %v347 = vmul.f32 %v246, %v346
    %v348 = vadd.f32 %v344, %v347
    %s349 = sld [smem:[#allocation2 + $0x42]]
    %v350 = vstv %s349
    %v351 = vmul.f32 %v247, %v350
    %v352 = vadd.f32 %v348, %v351
    %s353 = sld [smem:[#allocation2 + $0x46]]
    %v354 = vstv %s353
    %v355 = vmul.f32 %v248, %v354
    %v356 = vadd.f32 %v352, %v355
    %s357 = sld [smem:[#allocation2 + $0x4a]]
    %v358 = vstv %s357
    %v359 = vadd.f32 %v356, %v358
    %v360 = vadd.f32 %v359, %v251
    %s361 = scalar_lea.vmem %s5, 16
    %362 = vst [vmem:[%s361] sm:$0xff] %v360
    %s363 = sld [smem:[#allocation2 + $0x2b]]
    %v364 = vstv %s363
    %v365 = vmul.f32 %v169, %v364
    %s366 = sld [smem:[#allocation2 + $0x2f]]
    %v367 = vstv %s366
    %v368 = vmul.f32 %v170, %v367
    %v369 = vadd.f32 %v365, %v368
    %s370 = sld [smem:[#allocation2 + $0x33]]
    %v371 = vstv %s370
    %v372 = vmul.f32 %v171, %v371
    %v373 = vadd.f32 %v369, %v372
    %s374 = sld [smem:[#allocation2 + $0x37]]
    %v375 = vstv %s374
    %v376 = vmul.f32 %v172, %v375
    %v377 = vadd.f32 %v373, %v376
    %s378 = sld [smem:[#allocation2 + $0x3b]]
    %v379 = vstv %s378
    %v380 = vmul.f32 %v245, %v379
    %v381 = vadd.f32 %v377, %v380
    %s382 = sld [smem:[#allocation2 + $0x3f]]
    %v383 = vstv %s382
    %v384 = vmul.f32 %v246, %v383
    %v385 = vadd.f32 %v381, %v384
    %s386 = sld [smem:[#allocation2 + $0x43]]
    %v387 = vstv %s386
    %v388 = vmul.f32 %v247, %v387
    %v389 = vadd.f32 %v385, %v388
    %s390 = sld [smem:[#allocation2 + $0x47]]
    %v391 = vstv %s390
    %v392 = vmul.f32 %v248, %v391
    %v393 = vadd.f32 %v389, %v392
    %s394 = sld [smem:[#allocation2 + $0x4b]]
    %v395 = vstv %s394
    %v396 = vadd.f32 %v393, %v395
    %v397 = vadd.f32 %v396, %v252
    %s398 = scalar_lea.vmem %s5, 24
    %399 = vst [vmem:[%s398] sm:$0xff] %v397
    // Predicated region
    $region26: #{multi_axis_gmlp_forward.7} parent=1 // pred_check
      _
    $region27: #{multi_axis_gmlp_forward.7} parent=1 // pred_check_branch
      %401 = sbr.rel (0) target = $region29
    $region28: #{multi_axis_gmlp_forward.7} parent=1 // pred_region
      _
    $region29: #{multi_axis_gmlp_forward.7} parent=1 // pred_fallthru
      _
    // Predicated region
    $region30: #{multi_axis_gmlp_forward.7} parent=1 // pred_check
      _
    $region31: #{multi_axis_gmlp_forward.7} parent=1 // pred_check_branch
      %403 = sbr.rel (0) target = $region33
    $region32: #{multi_axis_gmlp_forward.7} parent=1 // pred_region
      _
    $region33: #{multi_axis_gmlp_forward.7} parent=1 // pred_fallthru
      _
    %404 = vsyncpa [#allocation3], 1

</llo_original>
